<compile_context>
chip_gen: v6e
topology: v6e:2x2x1
jax: 0.10.0
libtpu: 0.0.40
codegen_flags: <defaults>
</compile_context>

<pallas_src>
import jax
import jax.numpy as jnp
from jax.experimental import pallas as pl
from jax.experimental.pallas import tpu as pltpu


# ----------------------------------------------------------------------------
# Per-branch fused kernel: conv1 + ReLU + conv2 + ReLU + maxpool + fc1-partial.
# Grid = (2,) over branches, marked "parallel" (2 TCs on v7x).
# ----------------------------------------------------------------------------
def _branch_kernel(x_ref, w1_ref, b1_ref, w2_ref, b2_ref, wf1_ref, part_ref):
    # x_ref:    (N, H, W, 1)   this branch's images (NHWC, C=1)
    # w1_ref:   (9, 32)        conv1 weights, row k = dy*3 + dx
    # b1_ref:   (1, 32)
    # w2_ref:   (288, 64)      conv2 weights, row = (dy*3+dx)*32 + cin
    # b2_ref:   (1, 64)
    # wf1_ref:  (fpb, 128)     this branch's fc1 rows, (i, j, c) order, bf16
    # part_ref: (N, 128)       fc1 partial for this branch (no bias)
    N, H, W, _ = x_ref.shape
    H1, W1 = H - 2, W - 2            # after conv1 (3x3, valid, stride 1)
    H2, W2 = H1 - 2, W1 - 2          # after conv2
    Hp, Wp = H2 // 2, W2 // 2        # after 2x2/2 max-pool
    C1 = w1_ref.shape[1]             # 32
    C2 = w2_ref.shape[1]             # 64
    R2 = N * H2 * W2

    x = x_ref[...]                   # (N, H, W, 1)
    w1 = w1_ref[...]                 # (9, C1)

    # ---- conv1 (1 -> 32) + ReLU: 9-tap shift/broadcast on the VPU ----------
    # (kept: <1% of the fused work; a lane-dense/matmul reformulation of this
    #  tiny conv was reviewed but is not worth the lowering risk here)
    acc1 = x[:, 0:H1, 0:W1, :] * w1[0] + b1_ref[...]      # bias folded in tap 0
    for k in range(1, 9):
        dy, dx = divmod(k, 3)
        acc1 = acc1 + x[:, dy:dy + H1, dx:dx + W1, :] * w1[k]
    h1 = jnp.maximum(acc1, 0.0)                           # (N, H1, W1, C1)

    # ---- conv2 (32 -> 64) + ReLU: ONE K=288 im2col matmul on the MXU -------
    # Patches are assembled as a value (single lane-concatenate) and consumed
    # directly by the dot: no VMEM scratch, no 32-lane masked stores, no
    # write+read round trip through the largest intermediate.
    patches = jnp.concatenate(
        [h1[:, dy:dy + H2, dx:dx + W2, :].reshape(R2, C1)
         for dy in range(3) for dx in range(3)], axis=-1)  # (R2, 9*C1)
    h2 = jnp.dot(patches, w2_ref[...], preferred_element_type=jnp.float32)
    h2 = jnp.maximum(h2 + b2_ref[...], 0.0).reshape(N, H2, W2, C2)

    # ---- 2x2/2 max-pool + (i, j, c) flatten, 128-lane-wide pieces ----------
    pieces = []
    for i in range(Hp):
        row = jnp.maximum(h2[:, 2 * i], h2[:, 2 * i + 1])   # (N, W2, C2)
        j = 0
        while j + 1 < Wp:                                   # pair adjacent j's
            m0 = jnp.maximum(row[:, 2 * j], row[:, 2 * j + 1])        # (N, C2)
            m1 = jnp.maximum(row[:, 2 * j + 2], row[:, 2 * j + 3])    # (N, C2)
            pieces.append(jnp.concatenate([m0, m1], axis=-1))  # (N, 2*C2)=128
            j += 2
        if j < Wp:                                          # odd-Wp tail
            pieces.append(jnp.maximum(row[:, 2 * j], row[:, 2 * j + 1]))
    feat = jnp.concatenate(pieces, axis=-1)                 # (N, Hp*Wp*C2)

    # ---- fc1 partial: bf16 x bf16 on the MXU, f32 accumulation -------------
    part_ref[...] = jnp.dot(feat.astype(jnp.bfloat16), wf1_ref[...],
                            preferred_element_type=jnp.float32)


# ----------------------------------------------------------------------------
# One-time parameter preparation (layout permutation + bf16 weight cast).
# Done OUTSIDE the per-call path so the bf16 fc1 slab lives in HBM as-is.
# ----------------------------------------------------------------------------
def prepare_params(params, input_shape):
    H, W = input_shape
    Hp, Wp = (H - 4) // 2, (W - 4) // 2
    fpb = Hp * Wp * 64
    br1, br2, fc = params["branch1"], params["branch2"], params["fc"]
    Dh = fc["w1"].shape[1]

    # fc1 weight rows: torch flatten order (branch, c, i, j) -> (branch, i, j, c)
    wf1 = fc["w1"].reshape(2, 64, Hp, Wp, Dh)
    wf1 = jnp.transpose(wf1, (0, 2, 3, 1, 4)).reshape(2, fpb, Dh)
    wf1 = wf1.astype(jnp.bfloat16)          # halves the dominant HBM transfer

    return dict(
        w1=jnp.stack([br1["w1"], br2["w1"]]),     # (2, 9, 32)
        b1=jnp.stack([br1["b1"], br2["b1"]]),     # (2, 1, 32)
        w2=jnp.stack([br1["w2"], br2["w2"]]),     # (2, 288, 64)
        b2=jnp.stack([br1["b2"], br2["b2"]]),     # (2, 1, 64)
        wf1=wf1,                                  # (2, fpb, 128) bf16
        fb1=fc["b1"], fw2=fc["w2"], fb2=fc["b2"],
    )


# ----------------------------------------------------------------------------
# Forward: one pallas_call over the 2 branches (parallel), tiny XLA epilogue.
# ----------------------------------------------------------------------------
def small_net_forward(kp, x):
    """SmallNet forward. kp = prepare_params(...), x: (N, 2, H, W) float32."""
    N, _, H, W = x.shape
    fpb = kp["wf1"].shape[1]
    Dh = kp["wf1"].shape[2]

    xb = jnp.transpose(x, (1, 0, 2, 3))[..., None]          # (2, N, H, W, 1)

    parts = pl.pallas_call(
        _branch_kernel,
        out_shape=jax.ShapeDtypeStruct((2, N, Dh), jnp.float32),
        grid=(2,),
        in_specs=[
            pl.BlockSpec((None, N, H, W, 1), lambda b: (b, 0, 0, 0, 0)),
            pl.BlockSpec((None, 9, 32), lambda b: (b, 0, 0)),
            pl.BlockSpec((None, 1, 32), lambda b: (b, 0, 0)),
            pl.BlockSpec((None, 288, 64), lambda b: (b, 0, 0)),
            pl.BlockSpec((None, 1, 64), lambda b: (b, 0, 0)),
            pl.BlockSpec((None, fpb, Dh), lambda b: (b, 0, 0)),
        ],
        out_specs=pl.BlockSpec((None, N, Dh), lambda b: (b, 0, 0)),
        compiler_params=pltpu.CompilerParams(
            dimension_semantics=("parallel",)),   # 2 TCs on v7x; neutral else
    )(xb, kp["w1"], kp["b1"], kp["w2"], kp["b2"], kp["wf1"])

    # Epilogue (~2 KB of traffic): sum branch partials, bias, ReLU, fc2.
    hidden = jnp.maximum(parts[0] + parts[1] + kp["fb1"], 0.0)
    return (jnp.dot(hidden, kp["fw2"], precision=jax.lax.Precision.HIGHEST)
            + kp["fb2"])


# ----------------------------------------------------------------------------
# Pure-XLA reference mirroring the PyTorch module exactly (NCHW semantics).
# ----------------------------------------------------------------------------
def _reference_forward(params, x):
    N = x.shape[0]
    hi = jax.lax.Precision.HIGHEST

    def branch(xb, p):
        xb = xb[:, None, :, :]                                             # NCHW
        w1 = jnp.transpose(p["w1"].reshape(3, 3, 32), (2, 0, 1))[:, None]  # OIHW
        y = jax.lax.conv_general_dilated(
            xb, w1, (1, 1), "VALID",
            dimension_numbers=("NCHW", "OIHW", "NCHW"), precision=hi)
        y = jnp.maximum(y + p["b1"].reshape(1, 32, 1, 1), 0.0)
        w2 = jnp.transpose(p["w2"].reshape(3, 3, 32, 64), (3, 2, 0, 1))    # OIHW
        y = jax.lax.conv_general_dilated(
            y, w2, (1, 1), "VALID",
            dimension_numbers=("NCHW", "OIHW", "NCHW"), precision=hi)
        y = jnp.maximum(y + p["b2"].reshape(1, 64, 1, 1), 0.0)
        y = jax.lax.reduce_window(y, -jnp.inf, jax.lax.max,
                                  (1, 1, 2, 2), (1, 1, 2, 2), "VALID")
        return y.reshape(N, -1)                    # torch flatten: (c, i, j)

    f1 = branch(x[:, 0], params["branch1"])
    f2 = branch(x[:, 1], params["branch2"])
    feat = jnp.concatenate([f1, f2], axis=-1)
    fc = params["fc"]
    h = jnp.maximum(jnp.dot(feat, fc["w1"], precision=hi) + fc["b1"], 0.0)
    return jnp.dot(h, fc["w2"], precision=hi) + fc["b2"]


# ----------------------------------------------------------------------------
# Deterministic parameter initialization (synthetic; torch-equivalent layout).
# ----------------------------------------------------------------------------
def init_params(key, input_shape=(12, 12), num_classes=10):
    hp = (input_shape[0] - 4) // 2
    wp = (input_shape[1] - 4) // 2
    fc_in = 2 * hp * wp * 64          # torch: 2*((H-4)//2)*((W-4)//2)*64

    ks = jax.random.split(key, 10)

    def nrm(k, shape, scale):
        return (scale * jax.random.normal(k, shape)).astype(jnp.float32)

    def branch(k1, k2, k3, k4):
        return dict(
            w1=nrm(k1, (9, 32), 1.0 / 3.0),                    # row k = dy*3+dx
            b1=nrm(k2, (1, 32), 0.1),
            w2=nrm(k3, (288, 64), 1.0 / (3.0 * 32.0 ** 0.5)),  # row = k*32+cin
            b2=nrm(k4, (1, 64), 0.1),
        )

    return dict(
        branch1=branch(ks[0], ks[1], ks[2], ks[3]),
        branch2=branch(ks[4], ks[5], ks[6], ks[7]),
        fc=dict(
            w1=nrm(ks[8], (fc_in, 128), 1.0 / (fc_in ** 0.5)),  # torch row order
            b1=jnp.zeros((1, 128), jnp.float32),
            w2=nrm(ks[9], (128, num_classes), 1.0 / (128.0 ** 0.5)),
            b2=jnp.zeros((1, num_classes), jnp.float32),
        ),
    )


# ----------------------------------------------------------------------------
if __name__ == "__main__":
    N, H, W, NUM_CLASSES = 2, 12, 12, 10      # small input_shape=[12, 12]

    key = jax.random.PRNGKey(0)
    k_par, k_x = jax.random.split(key)
    params = init_params(k_par, (H, W), NUM_CLASSES)
    x = jax.random.normal(k_x, (N, 2, H, W), dtype=jnp.float32)

    kparams = prepare_params(params, (H, W))        # one-time: bf16 fc1 slab
    fwd = jax.jit(small_net_forward)

    out = jax.block_until_ready(fwd(kparams, x))
    ref = jax.block_until_ready(jax.jit(_reference_forward)(params, x))

    assert out.shape == (N, NUM_CLASSES), out.shape
    assert bool(jnp.all(jnp.isfinite(out)))
    max_err = float(jnp.max(jnp.abs(out - ref)))
    # Tolerance accommodates the (review-requested) bf16 fc1 weights; the MXU
    # still accumulates in f32, so the error stays at the ~1e-2 level.
    assert jnp.allclose(out, ref, atol=2e-2, rtol=2e-2), max_err
    print("KERNEL_OK")
</pallas_src>

<mosaic_0001>
module attributes {stable_mosaic.version = 11 : i64} {
  func.func @_branch_kernel(%arg0: i32, %arg1: memref<1x2x12x12x1xf32, #tpu.memory_space<vmem>>, %arg2: memref<1x9x32xf32, #tpu.memory_space<vmem>>, %arg3: memref<1x1x32xf32, #tpu.memory_space<vmem>>, %arg4: memref<1x288x64xf32, #tpu.memory_space<vmem>>, %arg5: memref<1x1x64xf32, #tpu.memory_space<vmem>>, %arg6: memref<1x1024x128xbf16, #tpu.memory_space<vmem>>, %arg7: memref<1x2x128xf32, #tpu.memory_space<vmem>>) attributes {dimension_semantics = [#tpu.dimension_semantics<parallel>], iteration_bounds = array<i64: 2>, scalar_prefetch = 0 : i64, scratch_operands = 0 : i64, tpu.core_type = #tpu.core_type<tc>, window_params = [{transform_indices = @transform_0, window_bounds = array<i64: 1, 2, 12, 12, 1>}, {transform_indices = @transform_1, window_bounds = array<i64: 1, 9, 32>}, {transform_indices = @transform_2, window_bounds = array<i64: 1, 1, 32>}, {transform_indices = @transform_3, window_bounds = array<i64: 1, 288, 64>}, {transform_indices = @transform_4, window_bounds = array<i64: 1, 1, 64>}, {transform_indices = @transform_5, window_bounds = array<i64: 1, 1024, 128>}, {transform_indices = @transform_6, window_bounds = array<i64: 1, 2, 128>}]} {
    %c0 = arith.constant 0 : index
    %c0_0 = arith.constant 0 : index
    %c0_1 = arith.constant 0 : index
    %c0_2 = arith.constant 0 : index
    %c0_3 = arith.constant 0 : index
    %0 = vector.load %arg1[%c0, %c0_0, %c0_1, %c0_2, %c0_3] : memref<1x2x12x12x1xf32, #tpu.memory_space<vmem>>, vector<1x2x12x12x1xf32>
    %1 = vector.shape_cast %0 : vector<1x2x12x12x1xf32> to vector<2x12x12x1xf32>
    %c0_4 = arith.constant 0 : index
    %c0_5 = arith.constant 0 : index
    %c0_6 = arith.constant 0 : index
    %2 = vector.load %arg2[%c0_4, %c0_5, %c0_6] : memref<1x9x32xf32, #tpu.memory_space<vmem>>, vector<1x9x32xf32>
    %3 = vector.shape_cast %2 : vector<1x9x32xf32> to vector<9x32xf32>
    %4 = vector.extract_strided_slice %1 {offsets = [0, 0, 0, 0], sizes = [2, 10, 10, 1], strides = [1, 1, 1, 1]} : vector<2x12x12x1xf32> to vector<2x10x10x1xf32>
    %5 = vector.extract_strided_slice %3 {offsets = [0, 0], sizes = [1, 32], strides = [1, 1]} : vector<9x32xf32> to vector<1x32xf32>
    %6 = vector.shape_cast %5 : vector<1x32xf32> to vector<32xf32>
    %7 = vector.shape_cast %6 : vector<32xf32> to vector<1x1x1x32xf32>
    %8 = vector.broadcast %4 : vector<2x10x10x1xf32> to vector<2x10x10x32xf32>
    %9 = vector.broadcast %7 : vector<1x1x1x32xf32> to vector<2x10x10x32xf32>
    %10 = arith.mulf %8, %9 : vector<2x10x10x32xf32>
    %c0_7 = arith.constant 0 : index
    %c0_8 = arith.constant 0 : index
    %c0_9 = arith.constant 0 : index
    %11 = vector.load %arg3[%c0_7, %c0_8, %c0_9] : memref<1x1x32xf32, #tpu.memory_space<vmem>>, vector<1x1x32xf32>
    %12 = vector.shape_cast %11 : vector<1x1x32xf32> to vector<1x32xf32>
    %13 = vector.shape_cast %12 : vector<1x32xf32> to vector<1x1x1x32xf32>
    %14 = vector.broadcast %13 : vector<1x1x1x32xf32> to vector<2x10x10x32xf32>
    %15 = arith.addf %10, %14 : vector<2x10x10x32xf32>
    %16 = vector.extract_strided_slice %1 {offsets = [0, 0, 1, 0], sizes = [2, 10, 10, 1], strides = [1, 1, 1, 1]} : vector<2x12x12x1xf32> to vector<2x10x10x1xf32>
    %17 = vector.extract_strided_slice %3 {offsets = [1, 0], sizes = [1, 32], strides = [1, 1]} : vector<9x32xf32> to vector<1x32xf32>
    %18 = vector.shape_cast %17 : vector<1x32xf32> to vector<32xf32>
    %19 = vector.shape_cast %18 : vector<32xf32> to vector<1x1x1x32xf32>
    %20 = vector.broadcast %16 : vector<2x10x10x1xf32> to vector<2x10x10x32xf32>
    %21 = vector.broadcast %19 : vector<1x1x1x32xf32> to vector<2x10x10x32xf32>
    %22 = arith.mulf %20, %21 : vector<2x10x10x32xf32>
    %23 = arith.addf %15, %22 : vector<2x10x10x32xf32>
    %24 = vector.extract_strided_slice %1 {offsets = [0, 0, 2, 0], sizes = [2, 10, 10, 1], strides = [1, 1, 1, 1]} : vector<2x12x12x1xf32> to vector<2x10x10x1xf32>
    %25 = vector.extract_strided_slice %3 {offsets = [2, 0], sizes = [1, 32], strides = [1, 1]} : vector<9x32xf32> to vector<1x32xf32>
    %26 = vector.shape_cast %25 : vector<1x32xf32> to vector<32xf32>
    %27 = vector.shape_cast %26 : vector<32xf32> to vector<1x1x1x32xf32>
    %28 = vector.broadcast %24 : vector<2x10x10x1xf32> to vector<2x10x10x32xf32>
    %29 = vector.broadcast %27 : vector<1x1x1x32xf32> to vector<2x10x10x32xf32>
    %30 = arith.mulf %28, %29 : vector<2x10x10x32xf32>
    %31 = arith.addf %23, %30 : vector<2x10x10x32xf32>
    %32 = vector.extract_strided_slice %1 {offsets = [0, 1, 0, 0], sizes = [2, 10, 10, 1], strides = [1, 1, 1, 1]} : vector<2x12x12x1xf32> to vector<2x10x10x1xf32>
    %33 = vector.extract_strided_slice %3 {offsets = [3, 0], sizes = [1, 32], strides = [1, 1]} : vector<9x32xf32> to vector<1x32xf32>
    %34 = vector.shape_cast %33 : vector<1x32xf32> to vector<32xf32>
    %35 = vector.shape_cast %34 : vector<32xf32> to vector<1x1x1x32xf32>
    %36 = vector.broadcast %32 : vector<2x10x10x1xf32> to vector<2x10x10x32xf32>
    %37 = vector.broadcast %35 : vector<1x1x1x32xf32> to vector<2x10x10x32xf32>
    %38 = arith.mulf %36, %37 : vector<2x10x10x32xf32>
    %39 = arith.addf %31, %38 : vector<2x10x10x32xf32>
    %40 = vector.extract_strided_slice %1 {offsets = [0, 1, 1, 0], sizes = [2, 10, 10, 1], strides = [1, 1, 1, 1]} : vector<2x12x12x1xf32> to vector<2x10x10x1xf32>
    %41 = vector.extract_strided_slice %3 {offsets = [4, 0], sizes = [1, 32], strides = [1, 1]} : vector<9x32xf32> to vector<1x32xf32>
    %42 = vector.shape_cast %41 : vector<1x32xf32> to vector<32xf32>
    %43 = vector.shape_cast %42 : vector<32xf32> to vector<1x1x1x32xf32>
    %44 = vector.broadcast %40 : vector<2x10x10x1xf32> to vector<2x10x10x32xf32>
    %45 = vector.broadcast %43 : vector<1x1x1x32xf32> to vector<2x10x10x32xf32>
    %46 = arith.mulf %44, %45 : vector<2x10x10x32xf32>
    %47 = arith.addf %39, %46 : vector<2x10x10x32xf32>
    %48 = vector.extract_strided_slice %1 {offsets = [0, 1, 2, 0], sizes = [2, 10, 10, 1], strides = [1, 1, 1, 1]} : vector<2x12x12x1xf32> to vector<2x10x10x1xf32>
    %49 = vector.extract_strided_slice %3 {offsets = [5, 0], sizes = [1, 32], strides = [1, 1]} : vector<9x32xf32> to vector<1x32xf32>
    %50 = vector.shape_cast %49 : vector<1x32xf32> to vector<32xf32>
    %51 = vector.shape_cast %50 : vector<32xf32> to vector<1x1x1x32xf32>
    %52 = vector.broadcast %48 : vector<2x10x10x1xf32> to vector<2x10x10x32xf32>
    %53 = vector.broadcast %51 : vector<1x1x1x32xf32> to vector<2x10x10x32xf32>
    %54 = arith.mulf %52, %53 : vector<2x10x10x32xf32>
    %55 = arith.addf %47, %54 : vector<2x10x10x32xf32>
    %56 = vector.extract_strided_slice %1 {offsets = [0, 2, 0, 0], sizes = [2, 10, 10, 1], strides = [1, 1, 1, 1]} : vector<2x12x12x1xf32> to vector<2x10x10x1xf32>
    %57 = vector.extract_strided_slice %3 {offsets = [6, 0], sizes = [1, 32], strides = [1, 1]} : vector<9x32xf32> to vector<1x32xf32>
    %58 = vector.shape_cast %57 : vector<1x32xf32> to vector<32xf32>
    %59 = vector.shape_cast %58 : vector<32xf32> to vector<1x1x1x32xf32>
    %60 = vector.broadcast %56 : vector<2x10x10x1xf32> to vector<2x10x10x32xf32>
    %61 = vector.broadcast %59 : vector<1x1x1x32xf32> to vector<2x10x10x32xf32>
    %62 = arith.mulf %60, %61 : vector<2x10x10x32xf32>
    %63 = arith.addf %55, %62 : vector<2x10x10x32xf32>
    %64 = vector.extract_strided_slice %1 {offsets = [0, 2, 1, 0], sizes = [2, 10, 10, 1], strides = [1, 1, 1, 1]} : vector<2x12x12x1xf32> to vector<2x10x10x1xf32>
    %65 = vector.extract_strided_slice %3 {offsets = [7, 0], sizes = [1, 32], strides = [1, 1]} : vector<9x32xf32> to vector<1x32xf32>
    %66 = vector.shape_cast %65 : vector<1x32xf32> to vector<32xf32>
    %67 = vector.shape_cast %66 : vector<32xf32> to vector<1x1x1x32xf32>
    %68 = vector.broadcast %64 : vector<2x10x10x1xf32> to vector<2x10x10x32xf32>
    %69 = vector.broadcast %67 : vector<1x1x1x32xf32> to vector<2x10x10x32xf32>
    %70 = arith.mulf %68, %69 : vector<2x10x10x32xf32>
    %71 = arith.addf %63, %70 : vector<2x10x10x32xf32>
    %72 = vector.extract_strided_slice %1 {offsets = [0, 2, 2, 0], sizes = [2, 10, 10, 1], strides = [1, 1, 1, 1]} : vector<2x12x12x1xf32> to vector<2x10x10x1xf32>
    %73 = vector.extract_strided_slice %3 {offsets = [8, 0], sizes = [1, 32], strides = [1, 1]} : vector<9x32xf32> to vector<1x32xf32>
    %74 = vector.shape_cast %73 : vector<1x32xf32> to vector<32xf32>
    %75 = vector.shape_cast %74 : vector<32xf32> to vector<1x1x1x32xf32>
    %76 = vector.broadcast %72 : vector<2x10x10x1xf32> to vector<2x10x10x32xf32>
    %77 = vector.broadcast %75 : vector<1x1x1x32xf32> to vector<2x10x10x32xf32>
    %78 = arith.mulf %76, %77 : vector<2x10x10x32xf32>
    %79 = arith.addf %71, %78 : vector<2x10x10x32xf32>
    %cst = arith.constant 0.000000e+00 : f32
    %80 = vector.broadcast %cst : f32 to vector<2x10x10x32xf32>
    %81 = arith.maximumf %79, %80 : vector<2x10x10x32xf32>
    %82 = vector.extract_strided_slice %81 {offsets = [0, 0, 0, 0], sizes = [2, 8, 8, 32], strides = [1, 1, 1, 1]} : vector<2x10x10x32xf32> to vector<2x8x8x32xf32>
    %83 = vector.shape_cast %82 : vector<2x8x8x32xf32> to vector<128x32xf32>
    %84 = vector.extract_strided_slice %81 {offsets = [0, 0, 1, 0], sizes = [2, 8, 8, 32], strides = [1, 1, 1, 1]} : vector<2x10x10x32xf32> to vector<2x8x8x32xf32>
    %85 = vector.shape_cast %84 : vector<2x8x8x32xf32> to vector<128x32xf32>
    %86 = vector.extract_strided_slice %81 {offsets = [0, 0, 2, 0], sizes = [2, 8, 8, 32], strides = [1, 1, 1, 1]} : vector<2x10x10x32xf32> to vector<2x8x8x32xf32>
    %87 = vector.shape_cast %86 : vector<2x8x8x32xf32> to vector<128x32xf32>
    %88 = vector.extract_strided_slice %81 {offsets = [0, 1, 0, 0], sizes = [2, 8, 8, 32], strides = [1, 1, 1, 1]} : vector<2x10x10x32xf32> to vector<2x8x8x32xf32>
    %89 = vector.shape_cast %88 : vector<2x8x8x32xf32> to vector<128x32xf32>
    %90 = vector.extract_strided_slice %81 {offsets = [0, 1, 1, 0], sizes = [2, 8, 8, 32], strides = [1, 1, 1, 1]} : vector<2x10x10x32xf32> to vector<2x8x8x32xf32>
    %91 = vector.shape_cast %90 : vector<2x8x8x32xf32> to vector<128x32xf32>
    %92 = vector.extract_strided_slice %81 {offsets = [0, 1, 2, 0], sizes = [2, 8, 8, 32], strides = [1, 1, 1, 1]} : vector<2x10x10x32xf32> to vector<2x8x8x32xf32>
    %93 = vector.shape_cast %92 : vector<2x8x8x32xf32> to vector<128x32xf32>
    %94 = vector.extract_strided_slice %81 {offsets = [0, 2, 0, 0], sizes = [2, 8, 8, 32], strides = [1, 1, 1, 1]} : vector<2x10x10x32xf32> to vector<2x8x8x32xf32>
    %95 = vector.shape_cast %94 : vector<2x8x8x32xf32> to vector<128x32xf32>
    %96 = vector.extract_strided_slice %81 {offsets = [0, 2, 1, 0], sizes = [2, 8, 8, 32], strides = [1, 1, 1, 1]} : vector<2x10x10x32xf32> to vector<2x8x8x32xf32>
    %97 = vector.shape_cast %96 : vector<2x8x8x32xf32> to vector<128x32xf32>
    %98 = vector.extract_strided_slice %81 {offsets = [0, 2, 2, 0], sizes = [2, 8, 8, 32], strides = [1, 1, 1, 1]} : vector<2x10x10x32xf32> to vector<2x8x8x32xf32>
    %99 = vector.shape_cast %98 : vector<2x8x8x32xf32> to vector<128x32xf32>
    %100 = tpu.concatenate %83, %85, %87, %89, %91, %93, %95, %97, %99 in 1 : vector<128x32xf32>, vector<128x32xf32>, vector<128x32xf32>, vector<128x32xf32>, vector<128x32xf32>, vector<128x32xf32>, vector<128x32xf32>, vector<128x32xf32>, vector<128x32xf32> -> vector<128x288xf32>
    %c0_10 = arith.constant 0 : index
    %c0_11 = arith.constant 0 : index
    %c0_12 = arith.constant 0 : index
    %101 = vector.load %arg4[%c0_10, %c0_11, %c0_12] : memref<1x288x64xf32, #tpu.memory_space<vmem>>, vector<1x288x64xf32>
    %102 = vector.shape_cast %101 : vector<1x288x64xf32> to vector<288x64xf32>
    %cst_13 = arith.constant dense<0.000000e+00> : vector<128x64xf32>
    %103 = tpu.matmul %100, %102, %cst_13 {dimension_numbers = #tpu.dot_dimension_numbers<[1], [0], [0], [1], [0, 0, 1, 1], [], []>} : vector<128x288xf32>, vector<288x64xf32>, vector<128x64xf32> -> vector<128x64xf32>
    %c0_14 = arith.constant 0 : index
    %c0_15 = arith.constant 0 : index
    %c0_16 = arith.constant 0 : index
    %104 = vector.load %arg5[%c0_14, %c0_15, %c0_16] : memref<1x1x64xf32, #tpu.memory_space<vmem>>, vector<1x1x64xf32>
    %105 = vector.shape_cast %104 : vector<1x1x64xf32> to vector<1x64xf32>
    %106 = vector.broadcast %105 : vector<1x64xf32> to vector<128x64xf32>
    %107 = arith.addf %103, %106 : vector<128x64xf32>
    %cst_17 = arith.constant 0.000000e+00 : f32
    %108 = vector.broadcast %cst_17 : f32 to vector<128x64xf32>
    %109 = arith.maximumf %107, %108 : vector<128x64xf32>
    %110 = vector.shape_cast %109 : vector<128x64xf32> to vector<2x8x8x64xf32>
    %111 = vector.extract_strided_slice %110 {offsets = [0, 0, 0, 0], sizes = [2, 1, 8, 64], strides = [1, 1, 1, 1]} : vector<2x8x8x64xf32> to vector<2x1x8x64xf32>
    %112 = vector.shape_cast %111 : vector<2x1x8x64xf32> to vector<2x8x64xf32>
    %113 = vector.extract_strided_slice %110 {offsets = [0, 1, 0, 0], sizes = [2, 1, 8, 64], strides = [1, 1, 1, 1]} : vector<2x8x8x64xf32> to vector<2x1x8x64xf32>
    %114 = vector.shape_cast %113 : vector<2x1x8x64xf32> to vector<2x8x64xf32>
    %115 = arith.maximumf %112, %114 : vector<2x8x64xf32>
    %116 = vector.extract_strided_slice %115 {offsets = [0, 0, 0], sizes = [2, 1, 64], strides = [1, 1, 1]} : vector<2x8x64xf32> to vector<2x1x64xf32>
    %117 = vector.shape_cast %116 : vector<2x1x64xf32> to vector<2x64xf32>
    %118 = vector.extract_strided_slice %115 {offsets = [0, 1, 0], sizes = [2, 1, 64], strides = [1, 1, 1]} : vector<2x8x64xf32> to vector<2x1x64xf32>
    %119 = vector.shape_cast %118 : vector<2x1x64xf32> to vector<2x64xf32>
    %120 = arith.maximumf %117, %119 : vector<2x64xf32>
    %121 = vector.extract_strided_slice %115 {offsets = [0, 2, 0], sizes = [2, 1, 64], strides = [1, 1, 1]} : vector<2x8x64xf32> to vector<2x1x64xf32>
    %122 = vector.shape_cast %121 : vector<2x1x64xf32> to vector<2x64xf32>
    %123 = vector.extract_strided_slice %115 {offsets = [0, 3, 0], sizes = [2, 1, 64], strides = [1, 1, 1]} : vector<2x8x64xf32> to vector<2x1x64xf32>
    %124 = vector.shape_cast %123 : vector<2x1x64xf32> to vector<2x64xf32>
    %125 = arith.maximumf %122, %124 : vector<2x64xf32>
    %126 = tpu.concatenate %120, %125 in 1 : vector<2x64xf32>, vector<2x64xf32> -> vector<2x128xf32>
    %127 = vector.extract_strided_slice %115 {offsets = [0, 4, 0], sizes = [2, 1, 64], strides = [1, 1, 1]} : vector<2x8x64xf32> to vector<2x1x64xf32>
    %128 = vector.shape_cast %127 : vector<2x1x64xf32> to vector<2x64xf32>
    %129 = vector.extract_strided_slice %115 {offsets = [0, 5, 0], sizes = [2, 1, 64], strides = [1, 1, 1]} : vector<2x8x64xf32> to vector<2x1x64xf32>
    %130 = vector.shape_cast %129 : vector<2x1x64xf32> to vector<2x64xf32>
    %131 = arith.maximumf %128, %130 : vector<2x64xf32>
    %132 = vector.extract_strided_slice %115 {offsets = [0, 6, 0], sizes = [2, 1, 64], strides = [1, 1, 1]} : vector<2x8x64xf32> to vector<2x1x64xf32>
    %133 = vector.shape_cast %132 : vector<2x1x64xf32> to vector<2x64xf32>
    %134 = vector.extract_strided_slice %115 {offsets = [0, 7, 0], sizes = [2, 1, 64], strides = [1, 1, 1]} : vector<2x8x64xf32> to vector<2x1x64xf32>
    %135 = vector.shape_cast %134 : vector<2x1x64xf32> to vector<2x64xf32>
    %136 = arith.maximumf %133, %135 : vector<2x64xf32>
    %137 = tpu.concatenate %131, %136 in 1 : vector<2x64xf32>, vector<2x64xf32> -> vector<2x128xf32>
    %138 = vector.extract_strided_slice %110 {offsets = [0, 2, 0, 0], sizes = [2, 1, 8, 64], strides = [1, 1, 1, 1]} : vector<2x8x8x64xf32> to vector<2x1x8x64xf32>
    %139 = vector.shape_cast %138 : vector<2x1x8x64xf32> to vector<2x8x64xf32>
    %140 = vector.extract_strided_slice %110 {offsets = [0, 3, 0, 0], sizes = [2, 1, 8, 64], strides = [1, 1, 1, 1]} : vector<2x8x8x64xf32> to vector<2x1x8x64xf32>
    %141 = vector.shape_cast %140 : vector<2x1x8x64xf32> to vector<2x8x64xf32>
    %142 = arith.maximumf %139, %141 : vector<2x8x64xf32>
    %143 = vector.extract_strided_slice %142 {offsets = [0, 0, 0], sizes = [2, 1, 64], strides = [1, 1, 1]} : vector<2x8x64xf32> to vector<2x1x64xf32>
    %144 = vector.shape_cast %143 : vector<2x1x64xf32> to vector<2x64xf32>
    %145 = vector.extract_strided_slice %142 {offsets = [0, 1, 0], sizes = [2, 1, 64], strides = [1, 1, 1]} : vector<2x8x64xf32> to vector<2x1x64xf32>
    %146 = vector.shape_cast %145 : vector<2x1x64xf32> to vector<2x64xf32>
    %147 = arith.maximumf %144, %146 : vector<2x64xf32>
    %148 = vector.extract_strided_slice %142 {offsets = [0, 2, 0], sizes = [2, 1, 64], strides = [1, 1, 1]} : vector<2x8x64xf32> to vector<2x1x64xf32>
    %149 = vector.shape_cast %148 : vector<2x1x64xf32> to vector<2x64xf32>
    %150 = vector.extract_strided_slice %142 {offsets = [0, 3, 0], sizes = [2, 1, 64], strides = [1, 1, 1]} : vector<2x8x64xf32> to vector<2x1x64xf32>
    %151 = vector.shape_cast %150 : vector<2x1x64xf32> to vector<2x64xf32>
    %152 = arith.maximumf %149, %151 : vector<2x64xf32>
    %153 = tpu.concatenate %147, %152 in 1 : vector<2x64xf32>, vector<2x64xf32> -> vector<2x128xf32>
    %154 = vector.extract_strided_slice %142 {offsets = [0, 4, 0], sizes = [2, 1, 64], strides = [1, 1, 1]} : vector<2x8x64xf32> to vector<2x1x64xf32>
    %155 = vector.shape_cast %154 : vector<2x1x64xf32> to vector<2x64xf32>
    %156 = vector.extract_strided_slice %142 {offsets = [0, 5, 0], sizes = [2, 1, 64], strides = [1, 1, 1]} : vector<2x8x64xf32> to vector<2x1x64xf32>
    %157 = vector.shape_cast %156 : vector<2x1x64xf32> to vector<2x64xf32>
    %158 = arith.maximumf %155, %157 : vector<2x64xf32>
    %159 = vector.extract_strided_slice %142 {offsets = [0, 6, 0], sizes = [2, 1, 64], strides = [1, 1, 1]} : vector<2x8x64xf32> to vector<2x1x64xf32>
    %160 = vector.shape_cast %159 : vector<2x1x64xf32> to vector<2x64xf32>
    %161 = vector.extract_strided_slice %142 {offsets = [0, 7, 0], sizes = [2, 1, 64], strides = [1, 1, 1]} : vector<2x8x64xf32> to vector<2x1x64xf32>
    %162 = vector.shape_cast %161 : vector<2x1x64xf32> to vector<2x64xf32>
    %163 = arith.maximumf %160, %162 : vector<2x64xf32>
    %164 = tpu.concatenate %158, %163 in 1 : vector<2x64xf32>, vector<2x64xf32> -> vector<2x128xf32>
    %165 = vector.extract_strided_slice %110 {offsets = [0, 4, 0, 0], sizes = [2, 1, 8, 64], strides = [1, 1, 1, 1]} : vector<2x8x8x64xf32> to vector<2x1x8x64xf32>
    %166 = vector.shape_cast %165 : vector<2x1x8x64xf32> to vector<2x8x64xf32>
    %167 = vector.extract_strided_slice %110 {offsets = [0, 5, 0, 0], sizes = [2, 1, 8, 64], strides = [1, 1, 1, 1]} : vector<2x8x8x64xf32> to vector<2x1x8x64xf32>
    %168 = vector.shape_cast %167 : vector<2x1x8x64xf32> to vector<2x8x64xf32>
    %169 = arith.maximumf %166, %168 : vector<2x8x64xf32>
    %170 = vector.extract_strided_slice %169 {offsets = [0, 0, 0], sizes = [2, 1, 64], strides = [1, 1, 1]} : vector<2x8x64xf32> to vector<2x1x64xf32>
    %171 = vector.shape_cast %170 : vector<2x1x64xf32> to vector<2x64xf32>
    %172 = vector.extract_strided_slice %169 {offsets = [0, 1, 0], sizes = [2, 1, 64], strides = [1, 1, 1]} : vector<2x8x64xf32> to vector<2x1x64xf32>
    %173 = vector.shape_cast %172 : vector<2x1x64xf32> to vector<2x64xf32>
    %174 = arith.maximumf %171, %173 : vector<2x64xf32>
    %175 = vector.extract_strided_slice %169 {offsets = [0, 2, 0], sizes = [2, 1, 64], strides = [1, 1, 1]} : vector<2x8x64xf32> to vector<2x1x64xf32>
    %176 = vector.shape_cast %175 : vector<2x1x64xf32> to vector<2x64xf32>
    %177 = vector.extract_strided_slice %169 {offsets = [0, 3, 0], sizes = [2, 1, 64], strides = [1, 1, 1]} : vector<2x8x64xf32> to vector<2x1x64xf32>
    %178 = vector.shape_cast %177 : vector<2x1x64xf32> to vector<2x64xf32>
    %179 = arith.maximumf %176, %178 : vector<2x64xf32>
    %180 = tpu.concatenate %174, %179 in 1 : vector<2x64xf32>, vector<2x64xf32> -> vector<2x128xf32>
    %181 = vector.extract_strided_slice %169 {offsets = [0, 4, 0], sizes = [2, 1, 64], strides = [1, 1, 1]} : vector<2x8x64xf32> to vector<2x1x64xf32>
    %182 = vector.shape_cast %181 : vector<2x1x64xf32> to vector<2x64xf32>
    %183 = vector.extract_strided_slice %169 {offsets = [0, 5, 0], sizes = [2, 1, 64], strides = [1, 1, 1]} : vector<2x8x64xf32> to vector<2x1x64xf32>
    %184 = vector.shape_cast %183 : vector<2x1x64xf32> to vector<2x64xf32>
    %185 = arith.maximumf %182, %184 : vector<2x64xf32>
    %186 = vector.extract_strided_slice %169 {offsets = [0, 6, 0], sizes = [2, 1, 64], strides = [1, 1, 1]} : vector<2x8x64xf32> to vector<2x1x64xf32>
    %187 = vector.shape_cast %186 : vector<2x1x64xf32> to vector<2x64xf32>
    %188 = vector.extract_strided_slice %169 {offsets = [0, 7, 0], sizes = [2, 1, 64], strides = [1, 1, 1]} : vector<2x8x64xf32> to vector<2x1x64xf32>
    %189 = vector.shape_cast %188 : vector<2x1x64xf32> to vector<2x64xf32>
    %190 = arith.maximumf %187, %189 : vector<2x64xf32>
    %191 = tpu.concatenate %185, %190 in 1 : vector<2x64xf32>, vector<2x64xf32> -> vector<2x128xf32>
    %192 = vector.extract_strided_slice %110 {offsets = [0, 6, 0, 0], sizes = [2, 1, 8, 64], strides = [1, 1, 1, 1]} : vector<2x8x8x64xf32> to vector<2x1x8x64xf32>
    %193 = vector.shape_cast %192 : vector<2x1x8x64xf32> to vector<2x8x64xf32>
    %194 = vector.extract_strided_slice %110 {offsets = [0, 7, 0, 0], sizes = [2, 1, 8, 64], strides = [1, 1, 1, 1]} : vector<2x8x8x64xf32> to vector<2x1x8x64xf32>
    %195 = vector.shape_cast %194 : vector<2x1x8x64xf32> to vector<2x8x64xf32>
    %196 = arith.maximumf %193, %195 : vector<2x8x64xf32>
    %197 = vector.extract_strided_slice %196 {offsets = [0, 0, 0], sizes = [2, 1, 64], strides = [1, 1, 1]} : vector<2x8x64xf32> to vector<2x1x64xf32>
    %198 = vector.shape_cast %197 : vector<2x1x64xf32> to vector<2x64xf32>
    %199 = vector.extract_strided_slice %196 {offsets = [0, 1, 0], sizes = [2, 1, 64], strides = [1, 1, 1]} : vector<2x8x64xf32> to vector<2x1x64xf32>
    %200 = vector.shape_cast %199 : vector<2x1x64xf32> to vector<2x64xf32>
    %201 = arith.maximumf %198, %200 : vector<2x64xf32>
    %202 = vector.extract_strided_slice %196 {offsets = [0, 2, 0], sizes = [2, 1, 64], strides = [1, 1, 1]} : vector<2x8x64xf32> to vector<2x1x64xf32>
    %203 = vector.shape_cast %202 : vector<2x1x64xf32> to vector<2x64xf32>
    %204 = vector.extract_strided_slice %196 {offsets = [0, 3, 0], sizes = [2, 1, 64], strides = [1, 1, 1]} : vector<2x8x64xf32> to vector<2x1x64xf32>
    %205 = vector.shape_cast %204 : vector<2x1x64xf32> to vector<2x64xf32>
    %206 = arith.maximumf %203, %205 : vector<2x64xf32>
    %207 = tpu.concatenate %201, %206 in 1 : vector<2x64xf32>, vector<2x64xf32> -> vector<2x128xf32>
    %208 = vector.extract_strided_slice %196 {offsets = [0, 4, 0], sizes = [2, 1, 64], strides = [1, 1, 1]} : vector<2x8x64xf32> to vector<2x1x64xf32>
    %209 = vector.shape_cast %208 : vector<2x1x64xf32> to vector<2x64xf32>
    %210 = vector.extract_strided_slice %196 {offsets = [0, 5, 0], sizes = [2, 1, 64], strides = [1, 1, 1]} : vector<2x8x64xf32> to vector<2x1x64xf32>
    %211 = vector.shape_cast %210 : vector<2x1x64xf32> to vector<2x64xf32>
    %212 = arith.maximumf %209, %211 : vector<2x64xf32>
    %213 = vector.extract_strided_slice %196 {offsets = [0, 6, 0], sizes = [2, 1, 64], strides = [1, 1, 1]} : vector<2x8x64xf32> to vector<2x1x64xf32>
    %214 = vector.shape_cast %213 : vector<2x1x64xf32> to vector<2x64xf32>
    %215 = vector.extract_strided_slice %196 {offsets = [0, 7, 0], sizes = [2, 1, 64], strides = [1, 1, 1]} : vector<2x8x64xf32> to vector<2x1x64xf32>
    %216 = vector.shape_cast %215 : vector<2x1x64xf32> to vector<2x64xf32>
    %217 = arith.maximumf %214, %216 : vector<2x64xf32>
    %218 = tpu.concatenate %212, %217 in 1 : vector<2x64xf32>, vector<2x64xf32> -> vector<2x128xf32>
    %219 = tpu.concatenate %126, %137, %153, %164, %180, %191, %207, %218 in 1 : vector<2x128xf32>, vector<2x128xf32>, vector<2x128xf32>, vector<2x128xf32>, vector<2x128xf32>, vector<2x128xf32>, vector<2x128xf32>, vector<2x128xf32> -> vector<2x1024xf32>
    %220 = arith.truncf %219 : vector<2x1024xf32> to vector<2x1024xbf16>
    %c0_18 = arith.constant 0 : index
    %c0_19 = arith.constant 0 : index
    %c0_20 = arith.constant 0 : index
    %221 = vector.load %arg6[%c0_18, %c0_19, %c0_20] : memref<1x1024x128xbf16, #tpu.memory_space<vmem>>, vector<1x1024x128xbf16>
    %222 = vector.shape_cast %221 : vector<1x1024x128xbf16> to vector<1024x128xbf16>
    %cst_21 = arith.constant dense<0.000000e+00> : vector<2x128xf32>
    %223 = tpu.matmul %220, %222, %cst_21 {dimension_numbers = #tpu.dot_dimension_numbers<[1], [0], [0], [1], [0, 0, 1, 1], [], []>} : vector<2x1024xbf16>, vector<1024x128xbf16>, vector<2x128xf32> -> vector<2x128xf32>
    %c0_22 = arith.constant 0 : index
    %c0_23 = arith.constant 0 : index
    %c0_24 = arith.constant 0 : index
    %224 = vector.load %arg7[%c0_22, %c0_23, %c0_24] : memref<1x2x128xf32, #tpu.memory_space<vmem>>, vector<1x2x128xf32>
    %225 = vector.shape_cast %224 : vector<1x2x128xf32> to vector<2x128xf32>
    %226 = vector.shape_cast %223 : vector<2x128xf32> to vector<1x2x128xf32>
    tpu.vector_store %arg7[%c0_22, %c0_23, %c0_24], %226 {strides = array<i32>} : memref<1x2x128xf32, #tpu.memory_space<vmem>>, vector<1x2x128xf32>,
    return
  }
  func.func @transform_0(%arg0: i32) -> (i32, i32, i32, i32, i32) {
    %c0_i32 = arith.constant 0 : i32
    %c0_i32_0 = arith.constant 0 : i32
    %c0_i32_1 = arith.constant 0 : i32
    %c0_i32_2 = arith.constant 0 : i32
    %c0_i32_3 = arith.constant 0 : i32
    return %arg0, %c0_i32, %c0_i32_0, %c0_i32_1, %c0_i32_2 : i32, i32, i32, i32, i32
  }
  func.func @transform_1(%arg0: i32) -> (i32, i32, i32) {
    %c0_i32 = arith.constant 0 : i32
    %c0_i32_0 = arith.constant 0 : i32
    %c0_i32_1 = arith.constant 0 : i32
    return %arg0, %c0_i32, %c0_i32_0 : i32, i32, i32
  }
  func.func @transform_2(%arg0: i32) -> (i32, i32, i32) {
    %c0_i32 = arith.constant 0 : i32
    %c0_i32_0 = arith.constant 0 : i32
    %c0_i32_1 = arith.constant 0 : i32
    return %arg0, %c0_i32, %c0_i32_0 : i32, i32, i32
  }
  func.func @transform_3(%arg0: i32) -> (i32, i32, i32) {
    %c0_i32 = arith.constant 0 : i32
    %c0_i32_0 = arith.constant 0 : i32
    %c0_i32_1 = arith.constant 0 : i32
    return %arg0, %c0_i32, %c0_i32_0 : i32, i32, i32
  }
  func.func @transform_4(%arg0: i32) -> (i32, i32, i32) {
    %c0_i32 = arith.constant 0 : i32
    %c0_i32_0 = arith.constant 0 : i32
    %c0_i32_1 = arith.constant 0 : i32
    return %arg0, %c0_i32, %c0_i32_0 : i32, i32, i32
  }
  func.func @transform_5(%arg0: i32) -> (i32, i32, i32) {
    %c0_i32 = arith.constant 0 : i32
    %c0_i32_0 = arith.constant 0 : i32
    %c0_i32_1 = arith.constant 0 : i32
    return %arg0, %c0_i32, %c0_i32_0 : i32, i32, i32
  }
  func.func @transform_6(%arg0: i32) -> (i32, i32, i32) {
    %c0_i32 = arith.constant 0 : i32
    %c0_i32_0 = arith.constant 0 : i32
    %c0_i32_1 = arith.constant 0 : i32
    return %arg0, %c0_i32, %c0_i32_0 : i32, i32, i32
  }
}

</mosaic_0001>

<llo_original>
// kernel: small_net_forward.1
$region0: #{small_net_forward.1}
  #allocation0 [shape = 'u32[]', space=smem, size = 0x4, offset = 0x4, fixed_abs, tag = 'smem constant byte address 0x4 - core index']
  #allocation1 [shape = 'u32[144,128]{1,0:T(1,128)}', space=vmem, size = 0x12000, scoped, tag = 'internal scratch']
  %s0 = inlined_call_operand.vmem [shape: f32[2,2,12,12,1], index: 0, kind: input, shape index: {}]
  %s1 = inlined_call_operand.vmem [shape: f32[2,9,32], index: 1, kind: input, shape index: {}]
  %s2 = inlined_call_operand.vmem [shape: f32[2,1,32], index: 2, kind: input, shape index: {}]
  %s3 = inlined_call_operand.vmem [shape: f32[2,288,64], index: 3, kind: input, shape index: {}]
  %s4 = inlined_call_operand.vmem [shape: f32[2,1,64], index: 4, kind: input, shape index: {}]
  %s5 = inlined_call_operand.vmem [shape: bf16[2,1024,128], index: 5, kind: input, shape index: {}]
  %s6 = inlined_call_operand.vmem [shape: f32[2,2,128], index: 6, kind: output, shape index: {}]
  %s7 = sld [smem:[#allocation0]]
  $region57: #{small_net_forward.1} parent=0
    _
  %s9 = ssub.s32 1, %s7
  %s10 = scalar_select 0, %s9, %s7
  loop: start=0, step=1, limit=4
  $region2: #{small_net_forward.1} parent=0 // loop_pre_header
    _
  $region3: #{small_net_forward.1} parent=0 // loop_header
    %s12 = sphi 0, %s16
    %p13 = scmp.ge.s32.totalorder %s12, 4
    %s22 = sphi 0, %s24
    %s25 = sphi 0, %s22
    %s26 = sphi 0, %s25
    %s42 = sphi 0, %s26
    %s48 = sphi 0, %s50
    %s51 = sphi 0, %s48
    %s52 = sphi 0, %s51
    %s68 = sphi 0, %s52
    %s74 = sphi 0, %s76
    %s77 = sphi 0, %s74
    %s78 = sphi 0, %s77
    %s94 = sphi 0, %s78
    %s100 = sphi 0, %s102
    %s103 = sphi 0, %s100
    %s104 = sphi 0, %s103
    %s120 = sphi 0, %s104
    %s126 = sphi 0, %s128
    %s129 = sphi 0, %s126
    %s130 = sphi 0, %s129
    %s146 = sphi 0, %s130
    %s152 = sphi 0, %s154
    %s155 = sphi 0, %s152
    %s156 = sphi 0, %s155
    %s172 = sphi 0, %s156
    %s178 = sphi 0, %s180
    %s181 = sphi 0, %s178
    %s182 = sphi 0, %s181
    %s198 = sphi 0, %s182
  $region4: #{small_net_forward.1} parent=0 // loop_header_branch
    %15 = sbr.rel (%p13) target = $region8
  $region5: #{small_net_forward.1} parent=0 // loop_body
    %s17 = ssub.s32 %s12, 1
    %s18 = ssub.s32 %s12, 2
    %s19 = sadd.s32 %s12, 1
    %s20 = ssub.s32 %s12, %s19
    %p21 = scmp.eq.s32.totalorder %s20, 0
    %s23 = sadd.s32 %s22, 1
    %s24 = scalar_select %p21, %s22, %s23
    %p27 = pneg %p21
    %p28 = scmp.eq.s32.totalorder %s12, 1
    %p29 = por %p27, %p28
    %p30 = scmp.ne.s32.totalorder %s22, %s25
    %p31 = scmp.eq.s32.totalorder %s12, 0
    %p32 = por %p30, %p31
    %p33 = scmp.ne.s32.totalorder %s22, %s25
    %p34 = scmp.eq.s32.totalorder %s17, 1
    %p35 = por %p33, %p34
    %p36 = scmp.ne.s32.totalorder %s25, %s26
    %p37 = scmp.eq.s32.totalorder %s17, 0
    %p38 = por %p36, %p37
    %p39 = scmp.ne.s32.totalorder %s25, %s26
    %p40 = scmp.eq.s32.totalorder %s18, 1
    %p41 = por %p39, %p40
    %p43 = scmp.ne.s32.totalorder %s26, %s42
    %p44 = scmp.eq.s32.totalorder %s18, 0
    %p45 = por %p43, %p44
    %s46 = ssub.s32 %s12, %s19
    %p47 = scmp.eq.s32.totalorder %s46, 0
    %s49 = sadd.s32 %s48, 1
    %s50 = scalar_select %p47, %s48, %s49
    %p53 = pneg %p47
    %p54 = scmp.eq.s32.totalorder %s12, 1
    %p55 = por %p53, %p54
    %p56 = scmp.ne.s32.totalorder %s48, %s51
    %p57 = scmp.eq.s32.totalorder %s12, 0
    %p58 = por %p56, %p57
    %p59 = scmp.ne.s32.totalorder %s48, %s51
    %p60 = scmp.eq.s32.totalorder %s17, 1
    %p61 = por %p59, %p60
    %p62 = scmp.ne.s32.totalorder %s51, %s52
    %p63 = scmp.eq.s32.totalorder %s17, 0
    %p64 = por %p62, %p63
    %p65 = scmp.ne.s32.totalorder %s51, %s52
    %p66 = scmp.eq.s32.totalorder %s18, 1
    %p67 = por %p65, %p66
    %p69 = scmp.ne.s32.totalorder %s52, %s68
    %p70 = scmp.eq.s32.totalorder %s18, 0
    %p71 = por %p69, %p70
    %s72 = ssub.s32 %s12, %s19
    %p73 = scmp.eq.s32.totalorder %s72, 0
    %s75 = sadd.s32 %s74, 1
    %s76 = scalar_select %p73, %s74, %s75
    %p79 = pneg %p73
    %p80 = scmp.eq.s32.totalorder %s12, 1
    %p81 = por %p79, %p80
    %p82 = scmp.ne.s32.totalorder %s74, %s77
    %p83 = scmp.eq.s32.totalorder %s12, 0
    %p84 = por %p82, %p83
    %p85 = scmp.ne.s32.totalorder %s74, %s77
    %p86 = scmp.eq.s32.totalorder %s17, 1
    %p87 = por %p85, %p86
    %p88 = scmp.ne.s32.totalorder %s77, %s78
    %p89 = scmp.eq.s32.totalorder %s17, 0
    %p90 = por %p88, %p89
    %p91 = scmp.ne.s32.totalorder %s77, %s78
    %p92 = scmp.eq.s32.totalorder %s18, 1
    %p93 = por %p91, %p92
    %p95 = scmp.ne.s32.totalorder %s78, %s94
    %p96 = scmp.eq.s32.totalorder %s18, 0
    %p97 = por %p95, %p96
    %s98 = ssub.s32 %s12, %s19
    %p99 = scmp.eq.s32.totalorder %s98, 0
    %s101 = sadd.s32 %s100, 1
    %s102 = scalar_select %p99, %s100, %s101
    %p105 = pneg %p99
    %p106 = scmp.eq.s32.totalorder %s12, 1
    %p107 = por %p105, %p106
    %p108 = scmp.ne.s32.totalorder %s100, %s103
    %p109 = scmp.eq.s32.totalorder %s12, 0
    %p110 = por %p108, %p109
    %p111 = scmp.ne.s32.totalorder %s100, %s103
    %p112 = scmp.eq.s32.totalorder %s17, 1
    %p113 = por %p111, %p112
    %p114 = scmp.ne.s32.totalorder %s103, %s104
    %p115 = scmp.eq.s32.totalorder %s17, 0
    %p116 = por %p114, %p115
    %p117 = scmp.ne.s32.totalorder %s103, %s104
    %p118 = scmp.eq.s32.totalorder %s18, 1
    %p119 = por %p117, %p118
    %p121 = scmp.ne.s32.totalorder %s104, %s120
    %p122 = scmp.eq.s32.totalorder %s18, 0
    %p123 = por %p121, %p122
    %s124 = ssub.s32 %s12, %s19
    %p125 = scmp.eq.s32.totalorder %s124, 0
    %s127 = sadd.s32 %s126, 1
    %s128 = scalar_select %p125, %s126, %s127
    %p131 = pneg %p125
    %p132 = scmp.eq.s32.totalorder %s12, 1
    %p133 = por %p131, %p132
    %p134 = scmp.ne.s32.totalorder %s126, %s129
    %p135 = scmp.eq.s32.totalorder %s12, 0
    %p136 = por %p134, %p135
    %p137 = scmp.ne.s32.totalorder %s126, %s129
    %p138 = scmp.eq.s32.totalorder %s17, 1
    %p139 = por %p137, %p138
    %p140 = scmp.ne.s32.totalorder %s129, %s130
    %p141 = scmp.eq.s32.totalorder %s17, 0
    %p142 = por %p140, %p141
    %p143 = scmp.ne.s32.totalorder %s129, %s130
    %p144 = scmp.eq.s32.totalorder %s18, 1
    %p145 = por %p143, %p144
    %p147 = scmp.ne.s32.totalorder %s130, %s146
    %p148 = scmp.eq.s32.totalorder %s18, 0
    %p149 = por %p147, %p148
    %s150 = ssub.s32 %s12, %s19
    %p151 = scmp.eq.s32.totalorder %s150, 0
    %s153 = sadd.s32 %s152, 1
    %s154 = scalar_select %p151, %s152, %s153
    %p157 = pneg %p151
    %p158 = scmp.eq.s32.totalorder %s12, 1
    %p159 = por %p157, %p158
    %p160 = scmp.ne.s32.totalorder %s152, %s155
    %p161 = scmp.eq.s32.totalorder %s12, 0
    %p162 = por %p160, %p161
    %p163 = scmp.ne.s32.totalorder %s152, %s155
    %p164 = scmp.eq.s32.totalorder %s17, 1
    %p165 = por %p163, %p164
    %p166 = scmp.ne.s32.totalorder %s155, %s156
    %p167 = scmp.eq.s32.totalorder %s17, 0
    %p168 = por %p166, %p167
    %p169 = scmp.ne.s32.totalorder %s155, %s156
    %p170 = scmp.eq.s32.totalorder %s18, 1
    %p171 = por %p169, %p170
    %p173 = scmp.ne.s32.totalorder %s156, %s172
    %p174 = scmp.eq.s32.totalorder %s18, 0
    %p175 = por %p173, %p174
    %s176 = ssub.s32 %s12, %s19
    %p177 = scmp.eq.s32.totalorder %s176, 0
    %s179 = sadd.s32 %s178, 1
    %s180 = scalar_select %p177, %s178, %s179
    %p183 = pneg %p177
    %p184 = scmp.eq.s32.totalorder %s12, 1
    %p185 = por %p183, %p184
    %p186 = scmp.ne.s32.totalorder %s178, %s181
    %p187 = scmp.eq.s32.totalorder %s12, 0
    %p188 = por %p186, %p187
    %p189 = scmp.ne.s32.totalorder %s178, %s181
    %p190 = scmp.eq.s32.totalorder %s17, 1
    %p191 = por %p189, %p190
    %p192 = scmp.ne.s32.totalorder %s181, %s182
    %p193 = scmp.eq.s32.totalorder %s17, 0
    %p194 = por %p192, %p193
    %p195 = scmp.ne.s32.totalorder %s181, %s182
    %p196 = scmp.eq.s32.totalorder %s18, 1
    %p197 = por %p195, %p196
    %p199 = scmp.ne.s32.totalorder %s182, %s198
    %p200 = scmp.eq.s32.totalorder %s18, 0
    %p201 = por %p199, %p200
    %p202 = scmp.le.s32.totalorder 1, %s12
    %p203 = scmp.lt.s32.totalorder %s12, 3
    %p204 = pnand %p202, %p203
    %p205 = pneg %p204
    // Predicated region
    $region9: #{small_net_forward.1} parent=5 // pred_check
      _
    $region10: #{small_net_forward.1} parent=5 // pred_check_branch
      %207 = sbr.rel (%p204) target = $region12
    $region11: #{small_net_forward.1} parent=5 // pred_region
      %s208 = ssub.s32 %s12, 1
    $region12: #{small_net_forward.1} parent=5 // pred_fallthru
      _
    %p209 = scmp.lt.s32.totalorder %s12, 2
    // Predicated region
    $region13: #{small_net_forward.1} parent=5 // pred_check
      %p210 = pneg %p209
    $region14: #{small_net_forward.1} parent=5 // pred_check_branch
      %212 = sbr.rel (%p210) target = $region16
    $region15: #{small_net_forward.1} parent=5 // pred_region
      // Predicated region
      $region17: #{small_net_forward.1} parent=15 // pred_check
        %p213 = pneg %p32
      $region18: #{small_net_forward.1} parent=15 // pred_check_branch
        %215 = sbr.rel (%p213) target = $region20
      $region19: #{small_net_forward.1} parent=15 // pred_region
        %p216 = scmp.lt.s32.totalorder %s12, 1
        %s217 = scalar_select %p216, %s12, 1
        %s218 = smul.addr %s217, 48
        %s219 = smul.addr %s218, 8
        %s220 = scalar_lea.vmem %s0, %s219
      $region20: #{small_net_forward.1} parent=15 // pred_fallthru
        _
      // Predicated region
      $region21: #{small_net_forward.1} parent=15 // pred_check
        %p221 = pneg %p58
      $region22: #{small_net_forward.1} parent=15 // pred_check_branch
        %223 = sbr.rel (%p221) target = $region24
      $region23: #{small_net_forward.1} parent=15 // pred_region
        %p224 = scmp.lt.s32.totalorder %s12, 1
        %s225 = scalar_select %p224, %s12, 1
        %s226 = smul.addr %s225, 2
        %s227 = smul.addr %s226, 8
        %s228 = scalar_lea.vmem %s1, %s227
      $region24: #{small_net_forward.1} parent=15 // pred_fallthru
        _
      // Predicated region
      $region25: #{small_net_forward.1} parent=15 // pred_check
        %p229 = pneg %p84
      $region26: #{small_net_forward.1} parent=15 // pred_check_branch
        %231 = sbr.rel (%p229) target = $region28
      $region27: #{small_net_forward.1} parent=15 // pred_region
        %p232 = scmp.lt.s32.totalorder %s12, 1
        %s233 = scalar_select %p232, %s12, 1
        %s234 = scalar_lea.vmem %s2, %s233
      $region28: #{small_net_forward.1} parent=15 // pred_fallthru
        _
      // Predicated region
      $region29: #{small_net_forward.1} parent=15 // pred_check
        %p235 = pneg %p110
      $region30: #{small_net_forward.1} parent=15 // pred_check_branch
        %237 = sbr.rel (%p235) target = $region32
      $region31: #{small_net_forward.1} parent=15 // pred_region
        %p238 = scmp.lt.s32.totalorder %s12, 1
        %s239 = scalar_select %p238, %s12, 1
        %s240 = smul.addr %s239, 36
        %s241 = smul.addr %s240, 8
        %s242 = scalar_lea.vmem %s3, %s241
      $region32: #{small_net_forward.1} parent=15 // pred_fallthru
        _
      // Predicated region
      $region33: #{small_net_forward.1} parent=15 // pred_check
        %p243 = pneg %p136
      $region34: #{small_net_forward.1} parent=15 // pred_check_branch
        %245 = sbr.rel (%p243) target = $region36
      $region35: #{small_net_forward.1} parent=15 // pred_region
        %p246 = scmp.lt.s32.totalorder %s12, 1
        %s247 = scalar_select %p246, %s12, 1
        %s248 = scalar_lea.vmem %s4, %s247
      $region36: #{small_net_forward.1} parent=15 // pred_fallthru
        _
      // Predicated region
      $region37: #{small_net_forward.1} parent=15 // pred_check
        %p249 = pneg %p162
      $region38: #{small_net_forward.1} parent=15 // pred_check_branch
        %251 = sbr.rel (%p249) target = $region40
      $region39: #{small_net_forward.1} parent=15 // pred_region
        %p252 = scmp.lt.s32.totalorder %s12, 1
        %s253 = scalar_select %p252, %s12, 1
        %s254 = smul.addr %s253, 128
        %s255 = smul.addr %s254, 4
        %s256 = scalar_lea.vmem %s5, %s255
      $region40: #{small_net_forward.1} parent=15 // pred_fallthru
        _
    $region16: #{small_net_forward.1} parent=5 // pred_fallthru
      _
    %p257 = scmp.le.s32.totalorder 1, %s12
    %p258 = scmp.lt.s32.totalorder %s12, 3
    %p259 = pnand %p257, %p258
    %p260 = pneg %p259
    // Predicated region
    $region41: #{small_net_forward.1} parent=5 // pred_check
      _
    $region42: #{small_net_forward.1} parent=5 // pred_check_branch
      %262 = sbr.rel (%p259) target = $region44
    $region43: #{small_net_forward.1} parent=5 // pred_region
      %s263 = ssub.s32 %s12, 1
      %p264 = scmp.lt.s32.totalorder %s17, 1
      %s265 = scalar_select %p264, %s17, 1
      %s266 = smul.addr %s265, 48
      %s267 = smul.addr %s266, 8
      %s268 = scalar_lea.vmem %s0, %s267
      %p269 = pneg %p38
      %p270 = pneg %p35
      %p271 = scmp.lt.s32.totalorder %s17, 1
      %s272 = scalar_select %p271, %s17, 1
      %s273 = smul.addr %s272, 2
      %s274 = smul.addr %s273, 8
      %s275 = scalar_lea.vmem %s1, %s274
      %p276 = pneg %p64
      %p277 = pneg %p61
      %p278 = scmp.lt.s32.totalorder %s17, 1
      %s279 = scalar_select %p278, %s17, 1
      %s280 = scalar_lea.vmem %s2, %s279
      %p281 = pneg %p90
      %p282 = pneg %p87
      %p283 = scmp.lt.s32.totalorder %s17, 1
      %s284 = scalar_select %p283, %s17, 1
      %s285 = smul.addr %s284, 36
      %s286 = smul.addr %s285, 8
      %s287 = scalar_lea.vmem %s3, %s286
      %p288 = pneg %p116
      %p289 = pneg %p113
      %p290 = scmp.lt.s32.totalorder %s17, 1
      %s291 = scalar_select %p290, %s17, 1
      %s292 = scalar_lea.vmem %s4, %s291
      %p293 = pneg %p142
      %p294 = pneg %p139
      %p295 = scmp.lt.s32.totalorder %s17, 1
      %s296 = scalar_select %p295, %s17, 1
      %s297 = smul.addr %s296, 128
      %s298 = smul.addr %s297, 4
      %s299 = scalar_lea.vmem %s5, %s298
      %p300 = pneg %p168
      %p301 = pneg %p165
      %p302 = pneg %p194
      %p303 = pneg %p191
      %p304 = scmp.lt.s32.totalorder %s17, 1
      %s305 = scalar_select %p304, %s17, 1
      %s306 = smul.addr %s305, 2
      %s307 = scalar_lea.vmem %s6, %s306
      %p308 = scmp.lt.s32.totalorder %s17, 1
      %s309 = scalar_select %p308, %s17, 1
      %s310 = smul.addr %s309, 48
      %s311 = smul.addr %s310, 8
      %s312 = scalar_lea.vmem %s0, %s311
      %p313 = scmp.lt.s32.totalorder %s17, 1
      %s314 = scalar_select %p313, %s17, 1
      %s315 = smul.addr %s314, 2
      %s316 = smul.addr %s315, 8
      %s317 = scalar_lea.vmem %s1, %s316
      %p318 = scmp.lt.s32.totalorder %s17, 1
      %s319 = scalar_select %p318, %s17, 1
      %s320 = scalar_lea.vmem %s2, %s319
      %p321 = scmp.lt.s32.totalorder %s17, 1
      %s322 = scalar_select %p321, %s17, 1
      %s323 = smul.addr %s322, 36
      %s324 = smul.addr %s323, 8
      %s325 = scalar_lea.vmem %s3, %s324
      %p326 = scmp.lt.s32.totalorder %s17, 1
      %s327 = scalar_select %p326, %s17, 1
      %s328 = scalar_lea.vmem %s4, %s327
      %p329 = scmp.lt.s32.totalorder %s17, 1
      %s330 = scalar_select %p329, %s17, 1
      %s331 = smul.addr %s330, 128
      %s332 = smul.addr %s331, 4
      %s333 = scalar_lea.vmem %s5, %s332
      %p334 = scmp.lt.s32.totalorder %s17, 1
      %s335 = scalar_select %p334, %s17, 1
      %s336 = smul.addr %s335, 2
      %s337 = scalar_lea.vmem %s6, %s336
      %v339 = vld [vmem:[%s312] sm:$0xff]
      %v340 = vld [vmem:[%s312 + $0x8] sm:$0xf]
      %v341 = vld [vmem:[%s312 + $0x10] sm:$0xff]
      %v342 = vld [vmem:[%s312 + $0x18] sm:$0xf]
      %v343 = vld [vmem:[%s312 + $0x20] sm:$0xff]
      %v344 = vld [vmem:[%s312 + $0x28] sm:$0xf]
      %v345 = vld [vmem:[%s312 + $0x30] sm:$0xff]
      %v346 = vld [vmem:[%s312 + $0x38] sm:$0xf]
      %v347 = vld [vmem:[%s312 + $0x40] sm:$0xff]
      %v348 = vld [vmem:[%s312 + $0x48] sm:$0xf]
      %v349 = vld [vmem:[%s312 + $0x50] sm:$0xff]
      %v350 = vld [vmem:[%s312 + $0x58] sm:$0xf]
      %v351 = vld [vmem:[%s312 + $0x60] sm:$0xff]
      %v352 = vld [vmem:[%s312 + $0x68] sm:$0xf]
      %v353 = vld [vmem:[%s312 + $0x70] sm:$0xff]
      %v354 = vld [vmem:[%s312 + $0x78] sm:$0xf]
      %v355 = vld [vmem:[%s312 + $0x80] sm:$0xff]
      %v356 = vld [vmem:[%s312 + $0x88] sm:$0xf]
      %v357 = vld [vmem:[%s312 + $0x90] sm:$0xff]
      %v358 = vld [vmem:[%s312 + $0x98] sm:$0xf]
      %v359 = vld [vmem:[%s312 + $0xa0] sm:$0xff]
      %v360 = vld [vmem:[%s312 + $0xa8] sm:$0xf]
      %v361 = vld [vmem:[%s312 + $0xb0] sm:$0xff]
      %v362 = vld [vmem:[%s312 + $0xb8] sm:$0xf]
      %v363 = vld [vmem:[%s312 + $0xc0] sm:$0xff]
      %v364 = vld [vmem:[%s312 + $0xc8] sm:$0xf]
      %v365 = vld [vmem:[%s312 + $0xd0] sm:$0xff]
      %v366 = vld [vmem:[%s312 + $0xd8] sm:$0xf]
      %v367 = vld [vmem:[%s312 + $0xe0] sm:$0xff]
      %v368 = vld [vmem:[%s312 + $0xe8] sm:$0xf]
      %v369 = vld [vmem:[%s312 + $0xf0] sm:$0xff]
      %v370 = vld [vmem:[%s312 + $0xf8] sm:$0xf]
      %v371 = vld [vmem:[%s312 + $0x100] sm:$0xff]
      %v372 = vld [vmem:[%s312 + $0x108] sm:$0xf]
      %v373 = vld [vmem:[%s312 + $0x110] sm:$0xff]
      %v374 = vld [vmem:[%s312 + $0x118] sm:$0xf]
      %v375 = vld [vmem:[%s312 + $0x120] sm:$0xff]
      %v376 = vld [vmem:[%s312 + $0x128] sm:$0xf]
      %v377 = vld [vmem:[%s312 + $0x130] sm:$0xff]
      %v378 = vld [vmem:[%s312 + $0x138] sm:$0xf]
      %v379 = vld [vmem:[%s312 + $0x140] sm:$0xff]
      %v380 = vld [vmem:[%s312 + $0x148] sm:$0xf]
      %v381 = vld [vmem:[%s312 + $0x150] sm:$0xff]
      %v382 = vld [vmem:[%s312 + $0x158] sm:$0xf]
      %v383 = vld [vmem:[%s312 + $0x160] sm:$0xff]
      %v384 = vld [vmem:[%s312 + $0x168] sm:$0xf]
      %v385 = vld [vmem:[%s312 + $0x170] sm:$0xff]
      %v386 = vld [vmem:[%s312 + $0x178] sm:$0xf]
      %v387 = vld [vmem:[%s317] sm:$0xff]
      %v388 = vld [vmem:[%s317 + $0x8] sm:$0x1]
      %390 = vset.pattern.permute.xlu0 0
      %391 = vperm.xlu0 %390, %v339
      %v392 = vpop.permute.xlu0 %391
      %395 = vset.pattern.permute.xlu0 0
      %396 = vperm.xlu0 %395, %v340
      %v397 = vpop.permute.xlu0 %396
      %400 = vset.pattern.permute.xlu0 0
      %401 = vperm.xlu0 %400, %v341
      %v402 = vpop.permute.xlu0 %401
      %405 = vset.pattern.permute.xlu0 0
      %406 = vperm.xlu0 %405, %v342
      %v407 = vpop.permute.xlu0 %406
      %410 = vset.pattern.permute.xlu0 0
      %411 = vperm.xlu0 %410, %v343
      %v412 = vpop.permute.xlu0 %411
      %415 = vset.pattern.permute.xlu0 0
      %416 = vperm.xlu0 %415, %v344
      %v417 = vpop.permute.xlu0 %416
      %420 = vset.pattern.permute.xlu0 0
      %421 = vperm.xlu0 %420, %v345
      %v422 = vpop.permute.xlu0 %421
      %425 = vset.pattern.permute.xlu0 0
      %426 = vperm.xlu0 %425, %v346
      %v427 = vpop.permute.xlu0 %426
      %430 = vset.pattern.permute.xlu0 0
      %431 = vperm.xlu0 %430, %v347
      %v432 = vpop.permute.xlu0 %431
      %435 = vset.pattern.permute.xlu0 0
      %436 = vperm.xlu0 %435, %v348
      %v437 = vpop.permute.xlu0 %436
      %440 = vset.pattern.permute.xlu0 0
      %441 = vperm.xlu0 %440, %v349
      %v442 = vpop.permute.xlu0 %441
      %445 = vset.pattern.permute.xlu0 0
      %446 = vperm.xlu0 %445, %v350
      %v447 = vpop.permute.xlu0 %446
      %450 = vset.pattern.permute.xlu0 0
      %451 = vperm.xlu0 %450, %v351
      %v452 = vpop.permute.xlu0 %451
      %455 = vset.pattern.permute.xlu0 0
      %456 = vperm.xlu0 %455, %v352
      %v457 = vpop.permute.xlu0 %456
      %460 = vset.pattern.permute.xlu0 0
      %461 = vperm.xlu0 %460, %v353
      %v462 = vpop.permute.xlu0 %461
      %465 = vset.pattern.permute.xlu0 0
      %466 = vperm.xlu0 %465, %v354
      %v467 = vpop.permute.xlu0 %466
      %470 = vset.pattern.permute.xlu0 0
      %471 = vperm.xlu0 %470, %v355
      %v472 = vpop.permute.xlu0 %471
      %475 = vset.pattern.permute.xlu0 0
      %476 = vperm.xlu0 %475, %v356
      %v477 = vpop.permute.xlu0 %476
      %480 = vset.pattern.permute.xlu0 0
      %481 = vperm.xlu0 %480, %v357
      %v482 = vpop.permute.xlu0 %481
      %485 = vset.pattern.permute.xlu0 0
      %486 = vperm.xlu0 %485, %v358
      %v487 = vpop.permute.xlu0 %486
      %490 = vset.pattern.permute.xlu0 0
      %491 = vperm.xlu0 %490, %v363
      %v492 = vpop.permute.xlu0 %491
      %495 = vset.pattern.permute.xlu0 0
      %496 = vperm.xlu0 %495, %v364
      %v497 = vpop.permute.xlu0 %496
      %500 = vset.pattern.permute.xlu0 0
      %501 = vperm.xlu0 %500, %v365
      %v502 = vpop.permute.xlu0 %501
      %505 = vset.pattern.permute.xlu0 0
      %506 = vperm.xlu0 %505, %v366
      %v507 = vpop.permute.xlu0 %506
      %510 = vset.pattern.permute.xlu0 0
      %511 = vperm.xlu0 %510, %v367
      %v512 = vpop.permute.xlu0 %511
      %515 = vset.pattern.permute.xlu0 0
      %516 = vperm.xlu0 %515, %v368
      %v517 = vpop.permute.xlu0 %516
      %520 = vset.pattern.permute.xlu0 0
      %521 = vperm.xlu0 %520, %v369
      %v522 = vpop.permute.xlu0 %521
      %525 = vset.pattern.permute.xlu0 0
      %526 = vperm.xlu0 %525, %v370
      %v527 = vpop.permute.xlu0 %526
      %530 = vset.pattern.permute.xlu0 0
      %531 = vperm.xlu0 %530, %v371
      %v532 = vpop.permute.xlu0 %531
      %535 = vset.pattern.permute.xlu0 0
      %536 = vperm.xlu0 %535, %v372
      %v537 = vpop.permute.xlu0 %536
      %540 = vset.pattern.permute.xlu0 0
      %541 = vperm.xlu0 %540, %v373
      %v542 = vpop.permute.xlu0 %541
      %545 = vset.pattern.permute.xlu0 0
      %546 = vperm.xlu0 %545, %v374
      %v547 = vpop.permute.xlu0 %546
      %550 = vset.pattern.permute.xlu0 0
      %551 = vperm.xlu0 %550, %v375
      %v552 = vpop.permute.xlu0 %551
      %555 = vset.pattern.permute.xlu0 0
      %556 = vperm.xlu0 %555, %v376
      %v557 = vpop.permute.xlu0 %556
      %560 = vset.pattern.permute.xlu0 0
      %561 = vperm.xlu0 %560, %v377
      %v562 = vpop.permute.xlu0 %561
      %565 = vset.pattern.permute.xlu0 0
      %566 = vperm.xlu0 %565, %v378
      %v567 = vpop.permute.xlu0 %566
      %570 = vset.pattern.permute.xlu0 0
      %571 = vperm.xlu0 %570, %v379
      %v572 = vpop.permute.xlu0 %571
      %575 = vset.pattern.permute.xlu0 0
      %576 = vperm.xlu0 %575, %v380
      %v577 = vpop.permute.xlu0 %576
      %580 = vset.pattern.permute.xlu0 0
      %581 = vperm.xlu0 %580, %v381
      %v582 = vpop.permute.xlu0 %581
      %585 = vset.pattern.permute.xlu0 0
      %586 = vperm.xlu0 %585, %v382
      %v587 = vpop.permute.xlu0 %586
      %v589 = vlaneseq
      %v590 = vshrl.u32 %v589, 7
      %v591 = vsub.s32 0, %v590
      %v592 = vrot.slane %v387, %v591
      %v593 = vmul.f32 %v392, %v592
      %v594 = vmul.f32 %v397, %v592
      %v595 = vmul.f32 %v402, %v592
      %v596 = vmul.f32 %v407, %v592
      %v597 = vmul.f32 %v412, %v592
      %v598 = vmul.f32 %v417, %v592
      %v599 = vmul.f32 %v422, %v592
      %v600 = vmul.f32 %v427, %v592
      %v601 = vmul.f32 %v432, %v592
      %v602 = vmul.f32 %v437, %v592
      %v603 = vmul.f32 %v442, %v592
      %v604 = vmul.f32 %v447, %v592
      %v605 = vmul.f32 %v452, %v592
      %v606 = vmul.f32 %v457, %v592
      %v607 = vmul.f32 %v462, %v592
      %v608 = vmul.f32 %v467, %v592
      %v609 = vmul.f32 %v472, %v592
      %v610 = vmul.f32 %v477, %v592
      %v611 = vmul.f32 %v482, %v592
      %v612 = vmul.f32 %v487, %v592
      %v613 = vmul.f32 %v492, %v592
      %v614 = vmul.f32 %v497, %v592
      %v615 = vmul.f32 %v502, %v592
      %v616 = vmul.f32 %v507, %v592
      %v617 = vmul.f32 %v512, %v592
      %v618 = vmul.f32 %v517, %v592
      %v619 = vmul.f32 %v522, %v592
      %v620 = vmul.f32 %v527, %v592
      %v621 = vmul.f32 %v532, %v592
      %v622 = vmul.f32 %v537, %v592
      %v623 = vmul.f32 %v542, %v592
      %v624 = vmul.f32 %v547, %v592
      %v625 = vmul.f32 %v552, %v592
      %v626 = vmul.f32 %v557, %v592
      %v627 = vmul.f32 %v562, %v592
      %v628 = vmul.f32 %v567, %v592
      %v629 = vmul.f32 %v572, %v592
      %v630 = vmul.f32 %v577, %v592
      %v631 = vmul.f32 %v582, %v592
      %v632 = vmul.f32 %v587, %v592
      %v633 = vld [vmem:[%s320] sm:$0x1]
      %v635 = vlaneseq
      %v636 = vshrl.u32 %v635, 7
      %v637 = vsub.s32 0, %v636
      %v638 = vrot.slane %v633, %v637
      %v640 = vadd.f32 %v593, %v638
      %v641 = vadd.f32 %v594, %v638
      %v642 = vadd.f32 %v595, %v638
      %v643 = vadd.f32 %v596, %v638
      %v644 = vadd.f32 %v597, %v638
      %v645 = vadd.f32 %v598, %v638
      %v646 = vadd.f32 %v599, %v638
      %v647 = vadd.f32 %v600, %v638
      %v648 = vadd.f32 %v601, %v638
      %v649 = vadd.f32 %v602, %v638
      %v650 = vadd.f32 %v603, %v638
      %v651 = vadd.f32 %v604, %v638
      %v652 = vadd.f32 %v605, %v638
      %v653 = vadd.f32 %v606, %v638
      %v654 = vadd.f32 %v607, %v638
      %v655 = vadd.f32 %v608, %v638
      %v656 = vadd.f32 %v609, %v638
      %v657 = vadd.f32 %v610, %v638
      %v658 = vadd.f32 %v611, %v638
      %v659 = vadd.f32 %v612, %v638
      %v660 = vadd.f32 %v613, %v638
      %v661 = vadd.f32 %v614, %v638
      %v662 = vadd.f32 %v615, %v638
      %v663 = vadd.f32 %v616, %v638
      %v664 = vadd.f32 %v617, %v638
      %v665 = vadd.f32 %v618, %v638
      %v666 = vadd.f32 %v619, %v638
      %v667 = vadd.f32 %v620, %v638
      %v668 = vadd.f32 %v621, %v638
      %v669 = vadd.f32 %v622, %v638
      %v670 = vadd.f32 %v623, %v638
      %v671 = vadd.f32 %v624, %v638
      %v672 = vadd.f32 %v625, %v638
      %v673 = vadd.f32 %v626, %v638
      %v674 = vadd.f32 %v627, %v638
      %v675 = vadd.f32 %v628, %v638
      %v676 = vadd.f32 %v629, %v638
      %v677 = vadd.f32 %v630, %v638
      %v678 = vadd.f32 %v631, %v638
      %v679 = vadd.f32 %v632, %v638
      %v680 = vlaneseq
      %v681 = vshrl.u32 %v680, 7
      %v682 = vsub.s32 1, %v681
      %v683 = vrot.slane %v387, %v682
      %v684 = vmul.f32 %v392, %v683
      %v685 = vmul.f32 %v397, %v683
      %v686 = vmul.f32 %v402, %v683
      %v687 = vmul.f32 %v407, %v683
      %v688 = vmul.f32 %v412, %v683
      %v689 = vmul.f32 %v417, %v683
      %v690 = vmul.f32 %v422, %v683
      %v691 = vmul.f32 %v427, %v683
      %v692 = vmul.f32 %v432, %v683
      %v693 = vmul.f32 %v437, %v683
      %v694 = vmul.f32 %v442, %v683
      %v695 = vmul.f32 %v447, %v683
      %v696 = vmul.f32 %v452, %v683
      %v697 = vmul.f32 %v457, %v683
      %v698 = vmul.f32 %v462, %v683
      %v699 = vmul.f32 %v467, %v683
      %v700 = vmul.f32 %v472, %v683
      %v701 = vmul.f32 %v477, %v683
      %v702 = vmul.f32 %v482, %v683
      %v703 = vmul.f32 %v487, %v683
      %v704 = vmul.f32 %v492, %v683
      %v705 = vmul.f32 %v497, %v683
      %v706 = vmul.f32 %v502, %v683
      %v707 = vmul.f32 %v507, %v683
      %v708 = vmul.f32 %v512, %v683
      %v709 = vmul.f32 %v517, %v683
      %v710 = vmul.f32 %v522, %v683
      %v711 = vmul.f32 %v527, %v683
      %v712 = vmul.f32 %v532, %v683
      %v713 = vmul.f32 %v537, %v683
      %v714 = vmul.f32 %v542, %v683
      %v715 = vmul.f32 %v547, %v683
      %v716 = vmul.f32 %v552, %v683
      %v717 = vmul.f32 %v557, %v683
      %v718 = vmul.f32 %v562, %v683
      %v719 = vmul.f32 %v567, %v683
      %v720 = vmul.f32 %v572, %v683
      %v721 = vmul.f32 %v577, %v683
      %v722 = vmul.f32 %v582, %v683
      %v723 = vmul.f32 %v587, %v683
      %vm764 = vcmask 1046528
      %v765 = vrot.slane %v684, 1
      %v766 = vrot.slane %v685, 1
      %v767 = vsel %vm764, %v765, %v766
      %v768 = vrot.slane %v686, 1
      %v769 = vrot.slane %v687, 1
      %v770 = vsel %vm764, %v768, %v769
      %v771 = vrot.slane %v688, 1
      %v772 = vrot.slane %v689, 1
      %v773 = vsel %vm764, %v771, %v772
      %v774 = vrot.slane %v690, 1
      %v775 = vrot.slane %v691, 1
      %v776 = vsel %vm764, %v774, %v775
      %v777 = vrot.slane %v692, 1
      %v778 = vrot.slane %v693, 1
      %v779 = vsel %vm764, %v777, %v778
      %v780 = vrot.slane %v694, 1
      %v781 = vrot.slane %v695, 1
      %v782 = vsel %vm764, %v780, %v781
      %v783 = vrot.slane %v696, 1
      %v784 = vrot.slane %v697, 1
      %v785 = vsel %vm764, %v783, %v784
      %v786 = vrot.slane %v698, 1
      %v787 = vrot.slane %v699, 1
      %v788 = vsel %vm764, %v786, %v787
      %v789 = vrot.slane %v700, 1
      %v790 = vrot.slane %v701, 1
      %v791 = vsel %vm764, %v789, %v790
      %v792 = vrot.slane %v702, 1
      %v793 = vrot.slane %v703, 1
      %v794 = vsel %vm764, %v792, %v793
      %v795 = vrot.slane %v704, 1
      %v796 = vrot.slane %v705, 1
      %v797 = vsel %vm764, %v795, %v796
      %v798 = vrot.slane %v706, 1
      %v799 = vrot.slane %v707, 1
      %v800 = vsel %vm764, %v798, %v799
      %v801 = vrot.slane %v708, 1
      %v802 = vrot.slane %v709, 1
      %v803 = vsel %vm764, %v801, %v802
      %v804 = vrot.slane %v710, 1
      %v805 = vrot.slane %v711, 1
      %v806 = vsel %vm764, %v804, %v805
      %v807 = vrot.slane %v712, 1
      %v808 = vrot.slane %v713, 1
      %v809 = vsel %vm764, %v807, %v808
      %v810 = vrot.slane %v714, 1
      %v811 = vrot.slane %v715, 1
      %v812 = vsel %vm764, %v810, %v811
      %v813 = vrot.slane %v716, 1
      %v814 = vrot.slane %v717, 1
      %v815 = vsel %vm764, %v813, %v814
      %v816 = vrot.slane %v718, 1
      %v817 = vrot.slane %v719, 1
      %v818 = vsel %vm764, %v816, %v817
      %v819 = vrot.slane %v720, 1
      %v820 = vrot.slane %v721, 1
      %v821 = vsel %vm764, %v819, %v820
      %v822 = vrot.slane %v722, 1
      %v823 = vrot.slane %v723, 1
      %v824 = vsel %vm764, %v822, %v823
      %v865 = vadd.f32 %v640, %v767
      %v866 = vadd.f32 %v641, %v766
      %v867 = vadd.f32 %v642, %v770
      %v868 = vadd.f32 %v643, %v769
      %v869 = vadd.f32 %v644, %v773
      %v870 = vadd.f32 %v645, %v772
      %v871 = vadd.f32 %v646, %v776
      %v872 = vadd.f32 %v647, %v775
      %v873 = vadd.f32 %v648, %v779
      %v874 = vadd.f32 %v649, %v778
      %v875 = vadd.f32 %v650, %v782
      %v876 = vadd.f32 %v651, %v781
      %v877 = vadd.f32 %v652, %v785
      %v878 = vadd.f32 %v653, %v784
      %v879 = vadd.f32 %v654, %v788
      %v880 = vadd.f32 %v655, %v787
      %v881 = vadd.f32 %v656, %v791
      %v882 = vadd.f32 %v657, %v790
      %v883 = vadd.f32 %v658, %v794
      %v884 = vadd.f32 %v659, %v793
      %v885 = vadd.f32 %v660, %v797
      %v886 = vadd.f32 %v661, %v796
      %v887 = vadd.f32 %v662, %v800
      %v888 = vadd.f32 %v663, %v799
      %v889 = vadd.f32 %v664, %v803
      %v890 = vadd.f32 %v665, %v802
      %v891 = vadd.f32 %v666, %v806
      %v892 = vadd.f32 %v667, %v805
      %v893 = vadd.f32 %v668, %v809
      %v894 = vadd.f32 %v669, %v808
      %v895 = vadd.f32 %v670, %v812
      %v896 = vadd.f32 %v671, %v811
      %v897 = vadd.f32 %v672, %v815
      %v898 = vadd.f32 %v673, %v814
      %v899 = vadd.f32 %v674, %v818
      %v900 = vadd.f32 %v675, %v817
      %v901 = vadd.f32 %v676, %v821
      %v902 = vadd.f32 %v677, %v820
      %v903 = vadd.f32 %v678, %v824
      %v904 = vadd.f32 %v679, %v823
      %v905 = vlaneseq
      %v906 = vshrl.u32 %v905, 7
      %v907 = vsub.s32 2, %v906
      %v908 = vrot.slane %v387, %v907
      %v909 = vmul.f32 %v392, %v908
      %v910 = vmul.f32 %v397, %v908
      %v911 = vmul.f32 %v402, %v908
      %v912 = vmul.f32 %v407, %v908
      %v913 = vmul.f32 %v412, %v908
      %v914 = vmul.f32 %v417, %v908
      %v915 = vmul.f32 %v422, %v908
      %v916 = vmul.f32 %v427, %v908
      %v917 = vmul.f32 %v432, %v908
      %v918 = vmul.f32 %v437, %v908
      %v919 = vmul.f32 %v442, %v908
      %v920 = vmul.f32 %v447, %v908
      %v921 = vmul.f32 %v452, %v908
      %v922 = vmul.f32 %v457, %v908
      %v923 = vmul.f32 %v462, %v908
      %v924 = vmul.f32 %v467, %v908
      %v925 = vmul.f32 %v472, %v908
      %v926 = vmul.f32 %v477, %v908
      %v927 = vmul.f32 %v482, %v908
      %v928 = vmul.f32 %v487, %v908
      %v929 = vmul.f32 %v492, %v908
      %v930 = vmul.f32 %v497, %v908
      %v931 = vmul.f32 %v502, %v908
      %v932 = vmul.f32 %v507, %v908
      %v933 = vmul.f32 %v512, %v908
      %v934 = vmul.f32 %v517, %v908
      %v935 = vmul.f32 %v522, %v908
      %v936 = vmul.f32 %v527, %v908
      %v937 = vmul.f32 %v532, %v908
      %v938 = vmul.f32 %v537, %v908
      %v939 = vmul.f32 %v542, %v908
      %v940 = vmul.f32 %v547, %v908
      %v941 = vmul.f32 %v552, %v908
      %v942 = vmul.f32 %v557, %v908
      %v943 = vmul.f32 %v562, %v908
      %v944 = vmul.f32 %v567, %v908
      %v945 = vmul.f32 %v572, %v908
      %v946 = vmul.f32 %v577, %v908
      %v947 = vmul.f32 %v582, %v908
      %v948 = vmul.f32 %v587, %v908
      %vm989 = vcmask 1045504
      %v990 = vrot.slane %v909, 2
      %v991 = vrot.slane %v910, 2
      %v992 = vsel %vm989, %v990, %v991
      %v993 = vrot.slane %v911, 2
      %v994 = vrot.slane %v912, 2
      %v995 = vsel %vm989, %v993, %v994
      %v996 = vrot.slane %v913, 2
      %v997 = vrot.slane %v914, 2
      %v998 = vsel %vm989, %v996, %v997
      %v999 = vrot.slane %v915, 2
      %v1000 = vrot.slane %v916, 2
      %v1001 = vsel %vm989, %v999, %v1000
      %v1002 = vrot.slane %v917, 2
      %v1003 = vrot.slane %v918, 2
      %v1004 = vsel %vm989, %v1002, %v1003
      %v1005 = vrot.slane %v919, 2
      %v1006 = vrot.slane %v920, 2
      %v1007 = vsel %vm989, %v1005, %v1006
      %v1008 = vrot.slane %v921, 2
      %v1009 = vrot.slane %v922, 2
      %v1010 = vsel %vm989, %v1008, %v1009
      %v1011 = vrot.slane %v923, 2
      %v1012 = vrot.slane %v924, 2
      %v1013 = vsel %vm989, %v1011, %v1012
      %v1014 = vrot.slane %v925, 2
      %v1015 = vrot.slane %v926, 2
      %v1016 = vsel %vm989, %v1014, %v1015
      %v1017 = vrot.slane %v927, 2
      %v1018 = vrot.slane %v928, 2
      %v1019 = vsel %vm989, %v1017, %v1018
      %v1020 = vrot.slane %v929, 2
      %v1021 = vrot.slane %v930, 2
      %v1022 = vsel %vm989, %v1020, %v1021
      %v1023 = vrot.slane %v931, 2
      %v1024 = vrot.slane %v932, 2
      %v1025 = vsel %vm989, %v1023, %v1024
      %v1026 = vrot.slane %v933, 2
      %v1027 = vrot.slane %v934, 2
      %v1028 = vsel %vm989, %v1026, %v1027
      %v1029 = vrot.slane %v935, 2
      %v1030 = vrot.slane %v936, 2
      %v1031 = vsel %vm989, %v1029, %v1030
      %v1032 = vrot.slane %v937, 2
      %v1033 = vrot.slane %v938, 2
      %v1034 = vsel %vm989, %v1032, %v1033
      %v1035 = vrot.slane %v939, 2
      %v1036 = vrot.slane %v940, 2
      %v1037 = vsel %vm989, %v1035, %v1036
      %v1038 = vrot.slane %v941, 2
      %v1039 = vrot.slane %v942, 2
      %v1040 = vsel %vm989, %v1038, %v1039
      %v1041 = vrot.slane %v943, 2
      %v1042 = vrot.slane %v944, 2
      %v1043 = vsel %vm989, %v1041, %v1042
      %v1044 = vrot.slane %v945, 2
      %v1045 = vrot.slane %v946, 2
      %v1046 = vsel %vm989, %v1044, %v1045
      %v1047 = vrot.slane %v947, 2
      %v1048 = vrot.slane %v948, 2
      %v1049 = vsel %vm989, %v1047, %v1048
      %v1090 = vadd.f32 %v865, %v992
      %v1091 = vadd.f32 %v866, %v991
      %v1092 = vadd.f32 %v867, %v995
      %v1093 = vadd.f32 %v868, %v994
      %v1094 = vadd.f32 %v869, %v998
      %v1095 = vadd.f32 %v870, %v997
      %v1096 = vadd.f32 %v871, %v1001
      %v1097 = vadd.f32 %v872, %v1000
      %v1098 = vadd.f32 %v873, %v1004
      %v1099 = vadd.f32 %v874, %v1003
      %v1100 = vadd.f32 %v875, %v1007
      %v1101 = vadd.f32 %v876, %v1006
      %v1102 = vadd.f32 %v877, %v1010
      %v1103 = vadd.f32 %v878, %v1009
      %v1104 = vadd.f32 %v879, %v1013
      %v1105 = vadd.f32 %v880, %v1012
      %v1106 = vadd.f32 %v881, %v1016
      %v1107 = vadd.f32 %v882, %v1015
      %v1108 = vadd.f32 %v883, %v1019
      %v1109 = vadd.f32 %v884, %v1018
      %v1110 = vadd.f32 %v885, %v1022
      %v1111 = vadd.f32 %v886, %v1021
      %v1112 = vadd.f32 %v887, %v1025
      %v1113 = vadd.f32 %v888, %v1024
      %v1114 = vadd.f32 %v889, %v1028
      %v1115 = vadd.f32 %v890, %v1027
      %v1116 = vadd.f32 %v891, %v1031
      %v1117 = vadd.f32 %v892, %v1030
      %v1118 = vadd.f32 %v893, %v1034
      %v1119 = vadd.f32 %v894, %v1033
      %v1120 = vadd.f32 %v895, %v1037
      %v1121 = vadd.f32 %v896, %v1036
      %v1122 = vadd.f32 %v897, %v1040
      %v1123 = vadd.f32 %v898, %v1039
      %v1124 = vadd.f32 %v899, %v1043
      %v1125 = vadd.f32 %v900, %v1042
      %v1126 = vadd.f32 %v901, %v1046
      %v1127 = vadd.f32 %v902, %v1045
      %v1128 = vadd.f32 %v903, %v1049
      %v1129 = vadd.f32 %v904, %v1048
      %1131 = vset.pattern.permute.xlu0 0
      %1132 = vperm.xlu0 %1131, %v359
      %v1133 = vpop.permute.xlu0 %1132
      %1136 = vset.pattern.permute.xlu0 0
      %1137 = vperm.xlu0 %1136, %v360
      %v1138 = vpop.permute.xlu0 %1137
      %1141 = vset.pattern.permute.xlu0 0
      %1142 = vperm.xlu0 %1141, %v383
      %v1143 = vpop.permute.xlu0 %1142
      %1146 = vset.pattern.permute.xlu0 0
      %1147 = vperm.xlu0 %1146, %v384
      %v1148 = vpop.permute.xlu0 %1147
      %v1150 = vlaneseq
      %v1151 = vshrl.u32 %v1150, 7
      %v1152 = vsub.s32 3, %v1151
      %v1153 = vrot.slane %v387, %v1152
      %v1154 = vmul.f32 %v402, %v1153
      %v1155 = vmul.f32 %v407, %v1153
      %v1156 = vmul.f32 %v412, %v1153
      %v1157 = vmul.f32 %v417, %v1153
      %v1158 = vmul.f32 %v422, %v1153
      %v1159 = vmul.f32 %v427, %v1153
      %v1160 = vmul.f32 %v432, %v1153
      %v1161 = vmul.f32 %v437, %v1153
      %v1162 = vmul.f32 %v442, %v1153
      %v1163 = vmul.f32 %v447, %v1153
      %v1164 = vmul.f32 %v452, %v1153
      %v1165 = vmul.f32 %v457, %v1153
      %v1166 = vmul.f32 %v462, %v1153
      %v1167 = vmul.f32 %v467, %v1153
      %v1168 = vmul.f32 %v472, %v1153
      %v1169 = vmul.f32 %v477, %v1153
      %v1170 = vmul.f32 %v482, %v1153
      %v1171 = vmul.f32 %v487, %v1153
      %v1172 = vmul.f32 %v1133, %v1153
      %v1173 = vmul.f32 %v1138, %v1153
      %v1174 = vmul.f32 %v502, %v1153
      %v1175 = vmul.f32 %v507, %v1153
      %v1176 = vmul.f32 %v512, %v1153
      %v1177 = vmul.f32 %v517, %v1153
      %v1178 = vmul.f32 %v522, %v1153
      %v1179 = vmul.f32 %v527, %v1153
      %v1180 = vmul.f32 %v532, %v1153
      %v1181 = vmul.f32 %v537, %v1153
      %v1182 = vmul.f32 %v542, %v1153
      %v1183 = vmul.f32 %v547, %v1153
      %v1184 = vmul.f32 %v552, %v1153
      %v1185 = vmul.f32 %v557, %v1153
      %v1186 = vmul.f32 %v562, %v1153
      %v1187 = vmul.f32 %v567, %v1153
      %v1188 = vmul.f32 %v572, %v1153
      %v1189 = vmul.f32 %v577, %v1153
      %v1190 = vmul.f32 %v582, %v1153
      %v1191 = vmul.f32 %v587, %v1153
      %v1192 = vmul.f32 %v1143, %v1153
      %v1193 = vmul.f32 %v1148, %v1153
      %v1194 = vadd.f32 %v1090, %v1154
      %v1195 = vadd.f32 %v1091, %v1155
      %v1196 = vadd.f32 %v1092, %v1156
      %v1197 = vadd.f32 %v1093, %v1157
      %v1198 = vadd.f32 %v1094, %v1158
      %v1199 = vadd.f32 %v1095, %v1159
      %v1200 = vadd.f32 %v1096, %v1160
      %v1201 = vadd.f32 %v1097, %v1161
      %v1202 = vadd.f32 %v1098, %v1162
      %v1203 = vadd.f32 %v1099, %v1163
      %v1204 = vadd.f32 %v1100, %v1164
      %v1205 = vadd.f32 %v1101, %v1165
      %v1206 = vadd.f32 %v1102, %v1166
      %v1207 = vadd.f32 %v1103, %v1167
      %v1208 = vadd.f32 %v1104, %v1168
      %v1209 = vadd.f32 %v1105, %v1169
      %v1210 = vadd.f32 %v1106, %v1170
      %v1211 = vadd.f32 %v1107, %v1171
      %v1212 = vadd.f32 %v1108, %v1172
      %v1213 = vadd.f32 %v1109, %v1173
      %v1214 = vadd.f32 %v1110, %v1174
      %v1215 = vadd.f32 %v1111, %v1175
      %v1216 = vadd.f32 %v1112, %v1176
      %v1217 = vadd.f32 %v1113, %v1177
      %v1218 = vadd.f32 %v1114, %v1178
      %v1219 = vadd.f32 %v1115, %v1179
      %v1220 = vadd.f32 %v1116, %v1180
      %v1221 = vadd.f32 %v1117, %v1181
      %v1222 = vadd.f32 %v1118, %v1182
      %v1223 = vadd.f32 %v1119, %v1183
      %v1224 = vadd.f32 %v1120, %v1184
      %v1225 = vadd.f32 %v1121, %v1185
      %v1226 = vadd.f32 %v1122, %v1186
      %v1227 = vadd.f32 %v1123, %v1187
      %v1228 = vadd.f32 %v1124, %v1188
      %v1229 = vadd.f32 %v1125, %v1189
      %v1230 = vadd.f32 %v1126, %v1190
      %v1231 = vadd.f32 %v1127, %v1191
      %v1232 = vadd.f32 %v1128, %v1192
      %v1233 = vadd.f32 %v1129, %v1193
      %v1234 = vlaneseq
      %v1235 = vshrl.u32 %v1234, 7
      %v1236 = vsub.s32 4, %v1235
      %v1237 = vrot.slane %v387, %v1236
      %v1238 = vmul.f32 %v402, %v1237
      %v1239 = vmul.f32 %v407, %v1237
      %v1240 = vmul.f32 %v412, %v1237
      %v1241 = vmul.f32 %v417, %v1237
      %v1242 = vmul.f32 %v422, %v1237
      %v1243 = vmul.f32 %v427, %v1237
      %v1244 = vmul.f32 %v432, %v1237
      %v1245 = vmul.f32 %v437, %v1237
      %v1246 = vmul.f32 %v442, %v1237
      %v1247 = vmul.f32 %v447, %v1237
      %v1248 = vmul.f32 %v452, %v1237
      %v1249 = vmul.f32 %v457, %v1237
      %v1250 = vmul.f32 %v462, %v1237
      %v1251 = vmul.f32 %v467, %v1237
      %v1252 = vmul.f32 %v472, %v1237
      %v1253 = vmul.f32 %v477, %v1237
      %v1254 = vmul.f32 %v482, %v1237
      %v1255 = vmul.f32 %v487, %v1237
      %v1256 = vmul.f32 %v1133, %v1237
      %v1257 = vmul.f32 %v1138, %v1237
      %v1258 = vmul.f32 %v502, %v1237
      %v1259 = vmul.f32 %v507, %v1237
      %v1260 = vmul.f32 %v512, %v1237
      %v1261 = vmul.f32 %v517, %v1237
      %v1262 = vmul.f32 %v522, %v1237
      %v1263 = vmul.f32 %v527, %v1237
      %v1264 = vmul.f32 %v532, %v1237
      %v1265 = vmul.f32 %v537, %v1237
      %v1266 = vmul.f32 %v542, %v1237
      %v1267 = vmul.f32 %v547, %v1237
      %v1268 = vmul.f32 %v552, %v1237
      %v1269 = vmul.f32 %v557, %v1237
      %v1270 = vmul.f32 %v562, %v1237
      %v1271 = vmul.f32 %v567, %v1237
      %v1272 = vmul.f32 %v572, %v1237
      %v1273 = vmul.f32 %v577, %v1237
      %v1274 = vmul.f32 %v582, %v1237
      %v1275 = vmul.f32 %v587, %v1237
      %v1276 = vmul.f32 %v1143, %v1237
      %v1277 = vmul.f32 %v1148, %v1237
      %v1318 = vrot.slane %v1238, 1
      %v1319 = vrot.slane %v1239, 1
      %v1320 = vsel %vm764, %v1318, %v1319
      %v1321 = vrot.slane %v1240, 1
      %v1322 = vrot.slane %v1241, 1
      %v1323 = vsel %vm764, %v1321, %v1322
      %v1324 = vrot.slane %v1242, 1
      %v1325 = vrot.slane %v1243, 1
      %v1326 = vsel %vm764, %v1324, %v1325
      %v1327 = vrot.slane %v1244, 1
      %v1328 = vrot.slane %v1245, 1
      %v1329 = vsel %vm764, %v1327, %v1328
      %v1330 = vrot.slane %v1246, 1
      %v1331 = vrot.slane %v1247, 1
      %v1332 = vsel %vm764, %v1330, %v1331
      %v1333 = vrot.slane %v1248, 1
      %v1334 = vrot.slane %v1249, 1
      %v1335 = vsel %vm764, %v1333, %v1334
      %v1336 = vrot.slane %v1250, 1
      %v1337 = vrot.slane %v1251, 1
      %v1338 = vsel %vm764, %v1336, %v1337
      %v1339 = vrot.slane %v1252, 1
      %v1340 = vrot.slane %v1253, 1
      %v1341 = vsel %vm764, %v1339, %v1340
      %v1342 = vrot.slane %v1254, 1
      %v1343 = vrot.slane %v1255, 1
      %v1344 = vsel %vm764, %v1342, %v1343
      %v1345 = vrot.slane %v1256, 1
      %v1346 = vrot.slane %v1257, 1
      %v1347 = vsel %vm764, %v1345, %v1346
      %v1348 = vrot.slane %v1258, 1
      %v1349 = vrot.slane %v1259, 1
      %v1350 = vsel %vm764, %v1348, %v1349
      %v1351 = vrot.slane %v1260, 1
      %v1352 = vrot.slane %v1261, 1
      %v1353 = vsel %vm764, %v1351, %v1352
      %v1354 = vrot.slane %v1262, 1
      %v1355 = vrot.slane %v1263, 1
      %v1356 = vsel %vm764, %v1354, %v1355
      %v1357 = vrot.slane %v1264, 1
      %v1358 = vrot.slane %v1265, 1
      %v1359 = vsel %vm764, %v1357, %v1358
      %v1360 = vrot.slane %v1266, 1
      %v1361 = vrot.slane %v1267, 1
      %v1362 = vsel %vm764, %v1360, %v1361
      %v1363 = vrot.slane %v1268, 1
      %v1364 = vrot.slane %v1269, 1
      %v1365 = vsel %vm764, %v1363, %v1364
      %v1366 = vrot.slane %v1270, 1
      %v1367 = vrot.slane %v1271, 1
      %v1368 = vsel %vm764, %v1366, %v1367
      %v1369 = vrot.slane %v1272, 1
      %v1370 = vrot.slane %v1273, 1
      %v1371 = vsel %vm764, %v1369, %v1370
      %v1372 = vrot.slane %v1274, 1
      %v1373 = vrot.slane %v1275, 1
      %v1374 = vsel %vm764, %v1372, %v1373
      %v1375 = vrot.slane %v1276, 1
      %v1376 = vrot.slane %v1277, 1
      %v1377 = vsel %vm764, %v1375, %v1376
      %v1418 = vadd.f32 %v1194, %v1320
      %v1419 = vadd.f32 %v1195, %v1319
      %v1420 = vadd.f32 %v1196, %v1323
      %v1421 = vadd.f32 %v1197, %v1322
      %v1422 = vadd.f32 %v1198, %v1326
      %v1423 = vadd.f32 %v1199, %v1325
      %v1424 = vadd.f32 %v1200, %v1329
      %v1425 = vadd.f32 %v1201, %v1328
      %v1426 = vadd.f32 %v1202, %v1332
      %v1427 = vadd.f32 %v1203, %v1331
      %v1428 = vadd.f32 %v1204, %v1335
      %v1429 = vadd.f32 %v1205, %v1334
      %v1430 = vadd.f32 %v1206, %v1338
      %v1431 = vadd.f32 %v1207, %v1337
      %v1432 = vadd.f32 %v1208, %v1341
      %v1433 = vadd.f32 %v1209, %v1340
      %v1434 = vadd.f32 %v1210, %v1344
      %v1435 = vadd.f32 %v1211, %v1343
      %v1436 = vadd.f32 %v1212, %v1347
      %v1437 = vadd.f32 %v1213, %v1346
      %v1438 = vadd.f32 %v1214, %v1350
      %v1439 = vadd.f32 %v1215, %v1349
      %v1440 = vadd.f32 %v1216, %v1353
      %v1441 = vadd.f32 %v1217, %v1352
      %v1442 = vadd.f32 %v1218, %v1356
      %v1443 = vadd.f32 %v1219, %v1355
      %v1444 = vadd.f32 %v1220, %v1359
      %v1445 = vadd.f32 %v1221, %v1358
      %v1446 = vadd.f32 %v1222, %v1362
      %v1447 = vadd.f32 %v1223, %v1361
      %v1448 = vadd.f32 %v1224, %v1365
      %v1449 = vadd.f32 %v1225, %v1364
      %v1450 = vadd.f32 %v1226, %v1368
      %v1451 = vadd.f32 %v1227, %v1367
      %v1452 = vadd.f32 %v1228, %v1371
      %v1453 = vadd.f32 %v1229, %v1370
      %v1454 = vadd.f32 %v1230, %v1374
      %v1455 = vadd.f32 %v1231, %v1373
      %v1456 = vadd.f32 %v1232, %v1377
      %v1457 = vadd.f32 %v1233, %v1376
      %v1458 = vlaneseq
      %v1459 = vshrl.u32 %v1458, 7
      %v1460 = vsub.s32 5, %v1459
      %v1461 = vrot.slane %v387, %v1460
      %v1462 = vmul.f32 %v402, %v1461
      %v1463 = vmul.f32 %v407, %v1461
      %v1464 = vmul.f32 %v412, %v1461
      %v1465 = vmul.f32 %v417, %v1461
      %v1466 = vmul.f32 %v422, %v1461
      %v1467 = vmul.f32 %v427, %v1461
      %v1468 = vmul.f32 %v432, %v1461
      %v1469 = vmul.f32 %v437, %v1461
      %v1470 = vmul.f32 %v442, %v1461
      %v1471 = vmul.f32 %v447, %v1461
      %v1472 = vmul.f32 %v452, %v1461
      %v1473 = vmul.f32 %v457, %v1461
      %v1474 = vmul.f32 %v462, %v1461
      %v1475 = vmul.f32 %v467, %v1461
      %v1476 = vmul.f32 %v472, %v1461
      %v1477 = vmul.f32 %v477, %v1461
      %v1478 = vmul.f32 %v482, %v1461
      %v1479 = vmul.f32 %v487, %v1461
      %v1480 = vmul.f32 %v1133, %v1461
      %v1481 = vmul.f32 %v1138, %v1461
      %v1482 = vmul.f32 %v502, %v1461
      %v1483 = vmul.f32 %v507, %v1461
      %v1484 = vmul.f32 %v512, %v1461
      %v1485 = vmul.f32 %v517, %v1461
      %v1486 = vmul.f32 %v522, %v1461
      %v1487 = vmul.f32 %v527, %v1461
      %v1488 = vmul.f32 %v532, %v1461
      %v1489 = vmul.f32 %v537, %v1461
      %v1490 = vmul.f32 %v542, %v1461
      %v1491 = vmul.f32 %v547, %v1461
      %v1492 = vmul.f32 %v552, %v1461
      %v1493 = vmul.f32 %v557, %v1461
      %v1494 = vmul.f32 %v562, %v1461
      %v1495 = vmul.f32 %v567, %v1461
      %v1496 = vmul.f32 %v572, %v1461
      %v1497 = vmul.f32 %v577, %v1461
      %v1498 = vmul.f32 %v582, %v1461
      %v1499 = vmul.f32 %v587, %v1461
      %v1500 = vmul.f32 %v1143, %v1461
      %v1501 = vmul.f32 %v1148, %v1461
      %v1542 = vrot.slane %v1462, 2
      %v1543 = vrot.slane %v1463, 2
      %v1544 = vsel %vm989, %v1542, %v1543
      %v1545 = vrot.slane %v1464, 2
      %v1546 = vrot.slane %v1465, 2
      %v1547 = vsel %vm989, %v1545, %v1546
      %v1548 = vrot.slane %v1466, 2
      %v1549 = vrot.slane %v1467, 2
      %v1550 = vsel %vm989, %v1548, %v1549
      %v1551 = vrot.slane %v1468, 2
      %v1552 = vrot.slane %v1469, 2
      %v1553 = vsel %vm989, %v1551, %v1552
      %v1554 = vrot.slane %v1470, 2
      %v1555 = vrot.slane %v1471, 2
      %v1556 = vsel %vm989, %v1554, %v1555
      %v1557 = vrot.slane %v1472, 2
      %v1558 = vrot.slane %v1473, 2
      %v1559 = vsel %vm989, %v1557, %v1558
      %v1560 = vrot.slane %v1474, 2
      %v1561 = vrot.slane %v1475, 2
      %v1562 = vsel %vm989, %v1560, %v1561
      %v1563 = vrot.slane %v1476, 2
      %v1564 = vrot.slane %v1477, 2
      %v1565 = vsel %vm989, %v1563, %v1564
      %v1566 = vrot.slane %v1478, 2
      %v1567 = vrot.slane %v1479, 2
      %v1568 = vsel %vm989, %v1566, %v1567
      %v1569 = vrot.slane %v1480, 2
      %v1570 = vrot.slane %v1481, 2
      %v1571 = vsel %vm989, %v1569, %v1570
      %v1572 = vrot.slane %v1482, 2
      %v1573 = vrot.slane %v1483, 2
      %v1574 = vsel %vm989, %v1572, %v1573
      %v1575 = vrot.slane %v1484, 2
      %v1576 = vrot.slane %v1485, 2
      %v1577 = vsel %vm989, %v1575, %v1576
      %v1578 = vrot.slane %v1486, 2
      %v1579 = vrot.slane %v1487, 2
      %v1580 = vsel %vm989, %v1578, %v1579
      %v1581 = vrot.slane %v1488, 2
      %v1582 = vrot.slane %v1489, 2
      %v1583 = vsel %vm989, %v1581, %v1582
      %v1584 = vrot.slane %v1490, 2
      %v1585 = vrot.slane %v1491, 2
      %v1586 = vsel %vm989, %v1584, %v1585
      %v1587 = vrot.slane %v1492, 2
      %v1588 = vrot.slane %v1493, 2
      %v1589 = vsel %vm989, %v1587, %v1588
      %v1590 = vrot.slane %v1494, 2
      %v1591 = vrot.slane %v1495, 2
      %v1592 = vsel %vm989, %v1590, %v1591
      %v1593 = vrot.slane %v1496, 2
      %v1594 = vrot.slane %v1497, 2
      %v1595 = vsel %vm989, %v1593, %v1594
      %v1596 = vrot.slane %v1498, 2
      %v1597 = vrot.slane %v1499, 2
      %v1598 = vsel %vm989, %v1596, %v1597
      %v1599 = vrot.slane %v1500, 2
      %v1600 = vrot.slane %v1501, 2
      %v1601 = vsel %vm989, %v1599, %v1600
      %v1642 = vadd.f32 %v1418, %v1544
      %v1643 = vadd.f32 %v1419, %v1543
      %v1644 = vadd.f32 %v1420, %v1547
      %v1645 = vadd.f32 %v1421, %v1546
      %v1646 = vadd.f32 %v1422, %v1550
      %v1647 = vadd.f32 %v1423, %v1549
      %v1648 = vadd.f32 %v1424, %v1553
      %v1649 = vadd.f32 %v1425, %v1552
      %v1650 = vadd.f32 %v1426, %v1556
      %v1651 = vadd.f32 %v1427, %v1555
      %v1652 = vadd.f32 %v1428, %v1559
      %v1653 = vadd.f32 %v1429, %v1558
      %v1654 = vadd.f32 %v1430, %v1562
      %v1655 = vadd.f32 %v1431, %v1561
      %v1656 = vadd.f32 %v1432, %v1565
      %v1657 = vadd.f32 %v1433, %v1564
      %v1658 = vadd.f32 %v1434, %v1568
      %v1659 = vadd.f32 %v1435, %v1567
      %v1660 = vadd.f32 %v1436, %v1571
      %v1661 = vadd.f32 %v1437, %v1570
      %v1662 = vadd.f32 %v1438, %v1574
      %v1663 = vadd.f32 %v1439, %v1573
      %v1664 = vadd.f32 %v1440, %v1577
      %v1665 = vadd.f32 %v1441, %v1576
      %v1666 = vadd.f32 %v1442, %v1580
      %v1667 = vadd.f32 %v1443, %v1579
      %v1668 = vadd.f32 %v1444, %v1583
      %v1669 = vadd.f32 %v1445, %v1582
      %v1670 = vadd.f32 %v1446, %v1586
      %v1671 = vadd.f32 %v1447, %v1585
      %v1672 = vadd.f32 %v1448, %v1589
      %v1673 = vadd.f32 %v1449, %v1588
      %v1674 = vadd.f32 %v1450, %v1592
      %v1675 = vadd.f32 %v1451, %v1591
      %v1676 = vadd.f32 %v1452, %v1595
      %v1677 = vadd.f32 %v1453, %v1594
      %v1678 = vadd.f32 %v1454, %v1598
      %v1679 = vadd.f32 %v1455, %v1597
      %v1680 = vadd.f32 %v1456, %v1601
      %v1681 = vadd.f32 %v1457, %v1600
      %1683 = vset.pattern.permute.xlu0 0
      %1684 = vperm.xlu0 %1683, %v361
      %v1685 = vpop.permute.xlu0 %1684
      %1688 = vset.pattern.permute.xlu0 0
      %1689 = vperm.xlu0 %1688, %v362
      %v1690 = vpop.permute.xlu0 %1689
      %1693 = vset.pattern.permute.xlu0 0
      %1694 = vperm.xlu0 %1693, %v385
      %v1695 = vpop.permute.xlu0 %1694
      %1698 = vset.pattern.permute.xlu0 0
      %1699 = vperm.xlu0 %1698, %v386
      %v1700 = vpop.permute.xlu0 %1699
      %v1702 = vlaneseq
      %v1703 = vshrl.u32 %v1702, 7
      %v1704 = vsub.s32 6, %v1703
      %v1705 = vrot.slane %v387, %v1704
      %v1706 = vmul.f32 %v412, %v1705
      %v1707 = vmul.f32 %v417, %v1705
      %v1708 = vmul.f32 %v422, %v1705
      %v1709 = vmul.f32 %v427, %v1705
      %v1710 = vmul.f32 %v432, %v1705
      %v1711 = vmul.f32 %v437, %v1705
      %v1712 = vmul.f32 %v442, %v1705
      %v1713 = vmul.f32 %v447, %v1705
      %v1714 = vmul.f32 %v452, %v1705
      %v1715 = vmul.f32 %v457, %v1705
      %v1716 = vmul.f32 %v462, %v1705
      %v1717 = vmul.f32 %v467, %v1705
      %v1718 = vmul.f32 %v472, %v1705
      %v1719 = vmul.f32 %v477, %v1705
      %v1720 = vmul.f32 %v482, %v1705
      %v1721 = vmul.f32 %v487, %v1705
      %v1722 = vmul.f32 %v1133, %v1705
      %v1723 = vmul.f32 %v1138, %v1705
      %v1724 = vmul.f32 %v1685, %v1705
      %v1725 = vmul.f32 %v1690, %v1705
      %v1726 = vmul.f32 %v512, %v1705
      %v1727 = vmul.f32 %v517, %v1705
      %v1728 = vmul.f32 %v522, %v1705
      %v1729 = vmul.f32 %v527, %v1705
      %v1730 = vmul.f32 %v532, %v1705
      %v1731 = vmul.f32 %v537, %v1705
      %v1732 = vmul.f32 %v542, %v1705
      %v1733 = vmul.f32 %v547, %v1705
      %v1734 = vmul.f32 %v552, %v1705
      %v1735 = vmul.f32 %v557, %v1705
      %v1736 = vmul.f32 %v562, %v1705
      %v1737 = vmul.f32 %v567, %v1705
      %v1738 = vmul.f32 %v572, %v1705
      %v1739 = vmul.f32 %v577, %v1705
      %v1740 = vmul.f32 %v582, %v1705
      %v1741 = vmul.f32 %v587, %v1705
      %v1742 = vmul.f32 %v1143, %v1705
      %v1743 = vmul.f32 %v1148, %v1705
      %v1744 = vmul.f32 %v1695, %v1705
      %v1745 = vmul.f32 %v1700, %v1705
      %v1746 = vadd.f32 %v1642, %v1706
      %v1747 = vadd.f32 %v1643, %v1707
      %v1748 = vadd.f32 %v1644, %v1708
      %v1749 = vadd.f32 %v1645, %v1709
      %v1750 = vadd.f32 %v1646, %v1710
      %v1751 = vadd.f32 %v1647, %v1711
      %v1752 = vadd.f32 %v1648, %v1712
      %v1753 = vadd.f32 %v1649, %v1713
      %v1754 = vadd.f32 %v1650, %v1714
      %v1755 = vadd.f32 %v1651, %v1715
      %v1756 = vadd.f32 %v1652, %v1716
      %v1757 = vadd.f32 %v1653, %v1717
      %v1758 = vadd.f32 %v1654, %v1718
      %v1759 = vadd.f32 %v1655, %v1719
      %v1760 = vadd.f32 %v1656, %v1720
      %v1761 = vadd.f32 %v1657, %v1721
      %v1762 = vadd.f32 %v1658, %v1722
      %v1763 = vadd.f32 %v1659, %v1723
      %v1764 = vadd.f32 %v1660, %v1724
      %v1765 = vadd.f32 %v1661, %v1725
      %v1766 = vadd.f32 %v1662, %v1726
      %v1767 = vadd.f32 %v1663, %v1727
      %v1768 = vadd.f32 %v1664, %v1728
      %v1769 = vadd.f32 %v1665, %v1729
      %v1770 = vadd.f32 %v1666, %v1730
      %v1771 = vadd.f32 %v1667, %v1731
      %v1772 = vadd.f32 %v1668, %v1732
      %v1773 = vadd.f32 %v1669, %v1733
      %v1774 = vadd.f32 %v1670, %v1734
      %v1775 = vadd.f32 %v1671, %v1735
      %v1776 = vadd.f32 %v1672, %v1736
      %v1777 = vadd.f32 %v1673, %v1737
      %v1778 = vadd.f32 %v1674, %v1738
      %v1779 = vadd.f32 %v1675, %v1739
      %v1780 = vadd.f32 %v1676, %v1740
      %v1781 = vadd.f32 %v1677, %v1741
      %v1782 = vadd.f32 %v1678, %v1742
      %v1783 = vadd.f32 %v1679, %v1743
      %v1784 = vadd.f32 %v1680, %v1744
      %v1785 = vadd.f32 %v1681, %v1745
      %v1786 = vlaneseq
      %v1787 = vshrl.u32 %v1786, 7
      %v1788 = vsub.s32 7, %v1787
      %v1789 = vrot.slane %v387, %v1788
      %v1790 = vmul.f32 %v412, %v1789
      %v1791 = vmul.f32 %v417, %v1789
      %v1792 = vmul.f32 %v422, %v1789
      %v1793 = vmul.f32 %v427, %v1789
      %v1794 = vmul.f32 %v432, %v1789
      %v1795 = vmul.f32 %v437, %v1789
      %v1796 = vmul.f32 %v442, %v1789
      %v1797 = vmul.f32 %v447, %v1789
      %v1798 = vmul.f32 %v452, %v1789
      %v1799 = vmul.f32 %v457, %v1789
      %v1800 = vmul.f32 %v462, %v1789
      %v1801 = vmul.f32 %v467, %v1789
      %v1802 = vmul.f32 %v472, %v1789
      %v1803 = vmul.f32 %v477, %v1789
      %v1804 = vmul.f32 %v482, %v1789
      %v1805 = vmul.f32 %v487, %v1789
      %v1806 = vmul.f32 %v1133, %v1789
      %v1807 = vmul.f32 %v1138, %v1789
      %v1808 = vmul.f32 %v1685, %v1789
      %v1809 = vmul.f32 %v1690, %v1789
      %v1810 = vmul.f32 %v512, %v1789
      %v1811 = vmul.f32 %v517, %v1789
      %v1812 = vmul.f32 %v522, %v1789
      %v1813 = vmul.f32 %v527, %v1789
      %v1814 = vmul.f32 %v532, %v1789
      %v1815 = vmul.f32 %v537, %v1789
      %v1816 = vmul.f32 %v542, %v1789
      %v1817 = vmul.f32 %v547, %v1789
      %v1818 = vmul.f32 %v552, %v1789
      %v1819 = vmul.f32 %v557, %v1789
      %v1820 = vmul.f32 %v562, %v1789
      %v1821 = vmul.f32 %v567, %v1789
      %v1822 = vmul.f32 %v572, %v1789
      %v1823 = vmul.f32 %v577, %v1789
      %v1824 = vmul.f32 %v582, %v1789
      %v1825 = vmul.f32 %v587, %v1789
      %v1826 = vmul.f32 %v1143, %v1789
      %v1827 = vmul.f32 %v1148, %v1789
      %v1828 = vmul.f32 %v1695, %v1789
      %v1829 = vmul.f32 %v1700, %v1789
      %v1870 = vrot.slane %v1790, 1
      %v1871 = vrot.slane %v1791, 1
      %v1872 = vsel %vm764, %v1870, %v1871
      %v1873 = vrot.slane %v1792, 1
      %v1874 = vrot.slane %v1793, 1
      %v1875 = vsel %vm764, %v1873, %v1874
      %v1876 = vrot.slane %v1794, 1
      %v1877 = vrot.slane %v1795, 1
      %v1878 = vsel %vm764, %v1876, %v1877
      %v1879 = vrot.slane %v1796, 1
      %v1880 = vrot.slane %v1797, 1
      %v1881 = vsel %vm764, %v1879, %v1880
      %v1882 = vrot.slane %v1798, 1
      %v1883 = vrot.slane %v1799, 1
      %v1884 = vsel %vm764, %v1882, %v1883
      %v1885 = vrot.slane %v1800, 1
      %v1886 = vrot.slane %v1801, 1
      %v1887 = vsel %vm764, %v1885, %v1886
      %v1888 = vrot.slane %v1802, 1
      %v1889 = vrot.slane %v1803, 1
      %v1890 = vsel %vm764, %v1888, %v1889
      %v1891 = vrot.slane %v1804, 1
      %v1892 = vrot.slane %v1805, 1
      %v1893 = vsel %vm764, %v1891, %v1892
      %v1894 = vrot.slane %v1806, 1
      %v1895 = vrot.slane %v1807, 1
      %v1896 = vsel %vm764, %v1894, %v1895
      %v1897 = vrot.slane %v1808, 1
      %v1898 = vrot.slane %v1809, 1
      %v1899 = vsel %vm764, %v1897, %v1898
      %v1900 = vrot.slane %v1810, 1
      %v1901 = vrot.slane %v1811, 1
      %v1902 = vsel %vm764, %v1900, %v1901
      %v1903 = vrot.slane %v1812, 1
      %v1904 = vrot.slane %v1813, 1
      %v1905 = vsel %vm764, %v1903, %v1904
      %v1906 = vrot.slane %v1814, 1
      %v1907 = vrot.slane %v1815, 1
      %v1908 = vsel %vm764, %v1906, %v1907
      %v1909 = vrot.slane %v1816, 1
      %v1910 = vrot.slane %v1817, 1
      %v1911 = vsel %vm764, %v1909, %v1910
      %v1912 = vrot.slane %v1818, 1
      %v1913 = vrot.slane %v1819, 1
      %v1914 = vsel %vm764, %v1912, %v1913
      %v1915 = vrot.slane %v1820, 1
      %v1916 = vrot.slane %v1821, 1
      %v1917 = vsel %vm764, %v1915, %v1916
      %v1918 = vrot.slane %v1822, 1
      %v1919 = vrot.slane %v1823, 1
      %v1920 = vsel %vm764, %v1918, %v1919
      %v1921 = vrot.slane %v1824, 1
      %v1922 = vrot.slane %v1825, 1
      %v1923 = vsel %vm764, %v1921, %v1922
      %v1924 = vrot.slane %v1826, 1
      %v1925 = vrot.slane %v1827, 1
      %v1926 = vsel %vm764, %v1924, %v1925
      %v1927 = vrot.slane %v1828, 1
      %v1928 = vrot.slane %v1829, 1
      %v1929 = vsel %vm764, %v1927, %v1928
      %v1970 = vadd.f32 %v1746, %v1872
      %v1971 = vadd.f32 %v1747, %v1871
      %v1972 = vadd.f32 %v1748, %v1875
      %v1973 = vadd.f32 %v1749, %v1874
      %v1974 = vadd.f32 %v1750, %v1878
      %v1975 = vadd.f32 %v1751, %v1877
      %v1976 = vadd.f32 %v1752, %v1881
      %v1977 = vadd.f32 %v1753, %v1880
      %v1978 = vadd.f32 %v1754, %v1884
      %v1979 = vadd.f32 %v1755, %v1883
      %v1980 = vadd.f32 %v1756, %v1887
      %v1981 = vadd.f32 %v1757, %v1886
      %v1982 = vadd.f32 %v1758, %v1890
      %v1983 = vadd.f32 %v1759, %v1889
      %v1984 = vadd.f32 %v1760, %v1893
      %v1985 = vadd.f32 %v1761, %v1892
      %v1986 = vadd.f32 %v1762, %v1896
      %v1987 = vadd.f32 %v1763, %v1895
      %v1988 = vadd.f32 %v1764, %v1899
      %v1989 = vadd.f32 %v1765, %v1898
      %v1990 = vadd.f32 %v1766, %v1902
      %v1991 = vadd.f32 %v1767, %v1901
      %v1992 = vadd.f32 %v1768, %v1905
      %v1993 = vadd.f32 %v1769, %v1904
      %v1994 = vadd.f32 %v1770, %v1908
      %v1995 = vadd.f32 %v1771, %v1907
      %v1996 = vadd.f32 %v1772, %v1911
      %v1997 = vadd.f32 %v1773, %v1910
      %v1998 = vadd.f32 %v1774, %v1914
      %v1999 = vadd.f32 %v1775, %v1913
      %v2000 = vadd.f32 %v1776, %v1917
      %v2001 = vadd.f32 %v1777, %v1916
      %v2002 = vadd.f32 %v1778, %v1920
      %v2003 = vadd.f32 %v1779, %v1919
      %v2004 = vadd.f32 %v1780, %v1923
      %v2005 = vadd.f32 %v1781, %v1922
      %v2006 = vadd.f32 %v1782, %v1926
      %v2007 = vadd.f32 %v1783, %v1925
      %v2008 = vadd.f32 %v1784, %v1929
      %v2009 = vadd.f32 %v1785, %v1928
      %v2010 = vlaneseq
      %v2011 = vshrl.u32 %v2010, 7
      %v2012 = vsub.s32 0, %v2011
      %v2013 = vrot.slane %v388, %v2012
      %v2014 = vmul.f32 %v412, %v2013
      %v2015 = vmul.f32 %v417, %v2013
      %v2016 = vmul.f32 %v422, %v2013
      %v2017 = vmul.f32 %v427, %v2013
      %v2018 = vmul.f32 %v432, %v2013
      %v2019 = vmul.f32 %v437, %v2013
      %v2020 = vmul.f32 %v442, %v2013
      %v2021 = vmul.f32 %v447, %v2013
      %v2022 = vmul.f32 %v452, %v2013
      %v2023 = vmul.f32 %v457, %v2013
      %v2024 = vmul.f32 %v462, %v2013
      %v2025 = vmul.f32 %v467, %v2013
      %v2026 = vmul.f32 %v472, %v2013
      %v2027 = vmul.f32 %v477, %v2013
      %v2028 = vmul.f32 %v482, %v2013
      %v2029 = vmul.f32 %v487, %v2013
      %v2030 = vmul.f32 %v1133, %v2013
      %v2031 = vmul.f32 %v1138, %v2013
      %v2032 = vmul.f32 %v1685, %v2013
      %v2033 = vmul.f32 %v1690, %v2013
      %v2034 = vmul.f32 %v512, %v2013
      %v2035 = vmul.f32 %v517, %v2013
      %v2036 = vmul.f32 %v522, %v2013
      %v2037 = vmul.f32 %v527, %v2013
      %v2038 = vmul.f32 %v532, %v2013
      %v2039 = vmul.f32 %v537, %v2013
      %v2040 = vmul.f32 %v542, %v2013
      %v2041 = vmul.f32 %v547, %v2013
      %v2042 = vmul.f32 %v552, %v2013
      %v2043 = vmul.f32 %v557, %v2013
      %v2044 = vmul.f32 %v562, %v2013
      %v2045 = vmul.f32 %v567, %v2013
      %v2046 = vmul.f32 %v572, %v2013
      %v2047 = vmul.f32 %v577, %v2013
      %v2048 = vmul.f32 %v582, %v2013
      %v2049 = vmul.f32 %v587, %v2013
      %v2050 = vmul.f32 %v1143, %v2013
      %v2051 = vmul.f32 %v1148, %v2013
      %v2052 = vmul.f32 %v1695, %v2013
      %v2053 = vmul.f32 %v1700, %v2013
      %v2094 = vrot.slane %v2014, 2
      %v2095 = vrot.slane %v2015, 2
      %v2096 = vsel %vm989, %v2094, %v2095
      %v2097 = vrot.slane %v2016, 2
      %v2098 = vrot.slane %v2017, 2
      %v2099 = vsel %vm989, %v2097, %v2098
      %v2100 = vrot.slane %v2018, 2
      %v2101 = vrot.slane %v2019, 2
      %v2102 = vsel %vm989, %v2100, %v2101
      %v2103 = vrot.slane %v2020, 2
      %v2104 = vrot.slane %v2021, 2
      %v2105 = vsel %vm989, %v2103, %v2104
      %v2106 = vrot.slane %v2022, 2
      %v2107 = vrot.slane %v2023, 2
      %v2108 = vsel %vm989, %v2106, %v2107
      %v2109 = vrot.slane %v2024, 2
      %v2110 = vrot.slane %v2025, 2
      %v2111 = vsel %vm989, %v2109, %v2110
      %v2112 = vrot.slane %v2026, 2
      %v2113 = vrot.slane %v2027, 2
      %v2114 = vsel %vm989, %v2112, %v2113
      %v2115 = vrot.slane %v2028, 2
      %v2116 = vrot.slane %v2029, 2
      %v2117 = vsel %vm989, %v2115, %v2116
      %v2118 = vrot.slane %v2030, 2
      %v2119 = vrot.slane %v2031, 2
      %v2120 = vsel %vm989, %v2118, %v2119
      %v2121 = vrot.slane %v2032, 2
      %v2122 = vrot.slane %v2033, 2
      %v2123 = vsel %vm989, %v2121, %v2122
      %v2124 = vrot.slane %v2034, 2
      %v2125 = vrot.slane %v2035, 2
      %v2126 = vsel %vm989, %v2124, %v2125
      %v2127 = vrot.slane %v2036, 2
      %v2128 = vrot.slane %v2037, 2
      %v2129 = vsel %vm989, %v2127, %v2128
      %v2130 = vrot.slane %v2038, 2
      %v2131 = vrot.slane %v2039, 2
      %v2132 = vsel %vm989, %v2130, %v2131
      %v2133 = vrot.slane %v2040, 2
      %v2134 = vrot.slane %v2041, 2
      %v2135 = vsel %vm989, %v2133, %v2134
      %v2136 = vrot.slane %v2042, 2
      %v2137 = vrot.slane %v2043, 2
      %v2138 = vsel %vm989, %v2136, %v2137
      %v2139 = vrot.slane %v2044, 2
      %v2140 = vrot.slane %v2045, 2
      %v2141 = vsel %vm989, %v2139, %v2140
      %v2142 = vrot.slane %v2046, 2
      %v2143 = vrot.slane %v2047, 2
      %v2144 = vsel %vm989, %v2142, %v2143
      %v2145 = vrot.slane %v2048, 2
      %v2146 = vrot.slane %v2049, 2
      %v2147 = vsel %vm989, %v2145, %v2146
      %v2148 = vrot.slane %v2050, 2
      %v2149 = vrot.slane %v2051, 2
      %v2150 = vsel %vm989, %v2148, %v2149
      %v2151 = vrot.slane %v2052, 2
      %v2152 = vrot.slane %v2053, 2
      %v2153 = vsel %vm989, %v2151, %v2152
      %v2194 = vadd.f32 %v1970, %v2096
      %v2195 = vadd.f32 %v1971, %v2095
      %v2196 = vadd.f32 %v1972, %v2099
      %v2197 = vadd.f32 %v1973, %v2098
      %v2198 = vadd.f32 %v1974, %v2102
      %v2199 = vadd.f32 %v1975, %v2101
      %v2200 = vadd.f32 %v1976, %v2105
      %v2201 = vadd.f32 %v1977, %v2104
      %v2202 = vadd.f32 %v1978, %v2108
      %v2203 = vadd.f32 %v1979, %v2107
      %v2204 = vadd.f32 %v1980, %v2111
      %v2205 = vadd.f32 %v1981, %v2110
      %v2206 = vadd.f32 %v1982, %v2114
      %v2207 = vadd.f32 %v1983, %v2113
      %v2208 = vadd.f32 %v1984, %v2117
      %v2209 = vadd.f32 %v1985, %v2116
      %v2210 = vadd.f32 %v1986, %v2120
      %v2211 = vadd.f32 %v1987, %v2119
      %v2212 = vadd.f32 %v1988, %v2123
      %v2213 = vadd.f32 %v1989, %v2122
      %v2214 = vadd.f32 %v1990, %v2126
      %v2215 = vadd.f32 %v1991, %v2125
      %v2216 = vadd.f32 %v1992, %v2129
      %v2217 = vadd.f32 %v1993, %v2128
      %v2218 = vadd.f32 %v1994, %v2132
      %v2219 = vadd.f32 %v1995, %v2131
      %v2220 = vadd.f32 %v1996, %v2135
      %v2221 = vadd.f32 %v1997, %v2134
      %v2222 = vadd.f32 %v1998, %v2138
      %v2223 = vadd.f32 %v1999, %v2137
      %v2224 = vadd.f32 %v2000, %v2141
      %v2225 = vadd.f32 %v2001, %v2140
      %v2226 = vadd.f32 %v2002, %v2144
      %v2227 = vadd.f32 %v2003, %v2143
      %v2228 = vadd.f32 %v2004, %v2147
      %v2229 = vadd.f32 %v2005, %v2146
      %v2230 = vadd.f32 %v2006, %v2150
      %v2231 = vadd.f32 %v2007, %v2149
      %v2232 = vadd.f32 %v2008, %v2153
      %v2233 = vadd.f32 %v2009, %v2152
      %v2234 = vmax.f32 %v2194, 0.0
      %v2235 = vmax.f32 %v2195, 0.0
      %v2236 = vmax.f32 %v2196, 0.0
      %v2237 = vmax.f32 %v2197, 0.0
      %v2238 = vmax.f32 %v2198, 0.0
      %v2239 = vmax.f32 %v2199, 0.0
      %v2240 = vmax.f32 %v2200, 0.0
      %v2241 = vmax.f32 %v2201, 0.0
      %v2242 = vmax.f32 %v2202, 0.0
      %v2243 = vmax.f32 %v2203, 0.0
      %v2244 = vmax.f32 %v2204, 0.0
      %v2245 = vmax.f32 %v2205, 0.0
      %v2246 = vmax.f32 %v2206, 0.0
      %v2247 = vmax.f32 %v2207, 0.0
      %v2248 = vmax.f32 %v2208, 0.0
      %v2249 = vmax.f32 %v2209, 0.0
      %v2250 = vmax.f32 %v2210, 0.0
      %v2251 = vmax.f32 %v2211, 0.0
      %v2252 = vmax.f32 %v2212, 0.0
      %v2253 = vmax.f32 %v2213, 0.0
      %v2254 = vmax.f32 %v2214, 0.0
      %v2255 = vmax.f32 %v2215, 0.0
      %v2256 = vmax.f32 %v2216, 0.0
      %v2257 = vmax.f32 %v2217, 0.0
      %v2258 = vmax.f32 %v2218, 0.0
      %v2259 = vmax.f32 %v2219, 0.0
      %v2260 = vmax.f32 %v2220, 0.0
      %v2261 = vmax.f32 %v2221, 0.0
      %v2262 = vmax.f32 %v2222, 0.0
      %v2263 = vmax.f32 %v2223, 0.0
      %v2264 = vmax.f32 %v2224, 0.0
      %v2265 = vmax.f32 %v2225, 0.0
      %v2266 = vmax.f32 %v2226, 0.0
      %v2267 = vmax.f32 %v2227, 0.0
      %v2268 = vmax.f32 %v2228, 0.0
      %v2269 = vmax.f32 %v2229, 0.0
      %v2270 = vmax.f32 %v2230, 0.0
      %v2271 = vmax.f32 %v2231, 0.0
      %v2272 = vmax.f32 %v2232, 0.0
      %v2273 = vmax.f32 %v2233, 0.0
      %v2306 = vrot.slane %v2234, 1
      %v2307 = vrot.slane %v2235, 1
      %v2308 = vsel %vm764, %v2306, %v2307
      %v2309 = vrot.slane %v2236, 1
      %v2310 = vrot.slane %v2237, 1
      %v2311 = vsel %vm764, %v2309, %v2310
      %v2312 = vrot.slane %v2238, 1
      %v2313 = vrot.slane %v2239, 1
      %v2314 = vsel %vm764, %v2312, %v2313
      %v2315 = vrot.slane %v2240, 1
      %v2316 = vrot.slane %v2241, 1
      %v2317 = vsel %vm764, %v2315, %v2316
      %v2318 = vrot.slane %v2242, 1
      %v2319 = vrot.slane %v2243, 1
      %v2320 = vsel %vm764, %v2318, %v2319
      %v2321 = vrot.slane %v2244, 1
      %v2322 = vrot.slane %v2245, 1
      %v2323 = vsel %vm764, %v2321, %v2322
      %v2324 = vrot.slane %v2246, 1
      %v2325 = vrot.slane %v2247, 1
      %v2326 = vsel %vm764, %v2324, %v2325
      %v2327 = vrot.slane %v2248, 1
      %v2328 = vrot.slane %v2249, 1
      %v2329 = vsel %vm764, %v2327, %v2328
      %v2330 = vrot.slane %v2254, 1
      %v2331 = vrot.slane %v2255, 1
      %v2332 = vsel %vm764, %v2330, %v2331
      %v2333 = vrot.slane %v2256, 1
      %v2334 = vrot.slane %v2257, 1
      %v2335 = vsel %vm764, %v2333, %v2334
      %v2336 = vrot.slane %v2258, 1
      %v2337 = vrot.slane %v2259, 1
      %v2338 = vsel %vm764, %v2336, %v2337
      %v2339 = vrot.slane %v2260, 1
      %v2340 = vrot.slane %v2261, 1
      %v2341 = vsel %vm764, %v2339, %v2340
      %v2342 = vrot.slane %v2262, 1
      %v2343 = vrot.slane %v2263, 1
      %v2344 = vsel %vm764, %v2342, %v2343
      %v2345 = vrot.slane %v2264, 1
      %v2346 = vrot.slane %v2265, 1
      %v2347 = vsel %vm764, %v2345, %v2346
      %v2348 = vrot.slane %v2266, 1
      %v2349 = vrot.slane %v2267, 1
      %v2350 = vsel %vm764, %v2348, %v2349
      %v2351 = vrot.slane %v2268, 1
      %v2352 = vrot.slane %v2269, 1
      %v2353 = vsel %vm764, %v2351, %v2352
      %v2354 = vrot.slane %v2234, 2
      %v2355 = vrot.slane %v2235, 2
      %v2356 = vsel %vm989, %v2354, %v2355
      %v2357 = vrot.slane %v2236, 2
      %v2358 = vrot.slane %v2237, 2
      %v2359 = vsel %vm989, %v2357, %v2358
      %v2360 = vrot.slane %v2238, 2
      %v2361 = vrot.slane %v2239, 2
      %v2362 = vsel %vm989, %v2360, %v2361
      %v2363 = vrot.slane %v2240, 2
      %v2364 = vrot.slane %v2241, 2
      %v2365 = vsel %vm989, %v2363, %v2364
      %v2366 = vrot.slane %v2242, 2
      %v2367 = vrot.slane %v2243, 2
      %v2368 = vsel %vm989, %v2366, %v2367
      %v2369 = vrot.slane %v2244, 2
      %v2370 = vrot.slane %v2245, 2
      %v2371 = vsel %vm989, %v2369, %v2370
      %v2372 = vrot.slane %v2246, 2
      %v2373 = vrot.slane %v2247, 2
      %v2374 = vsel %vm989, %v2372, %v2373
      %v2375 = vrot.slane %v2248, 2
      %v2376 = vrot.slane %v2249, 2
      %v2377 = vsel %vm989, %v2375, %v2376
      %v2378 = vrot.slane %v2254, 2
      %v2379 = vrot.slane %v2255, 2
      %v2380 = vsel %vm989, %v2378, %v2379
      %v2381 = vrot.slane %v2256, 2
      %v2382 = vrot.slane %v2257, 2
      %v2383 = vsel %vm989, %v2381, %v2382
      %v2384 = vrot.slane %v2258, 2
      %v2385 = vrot.slane %v2259, 2
      %v2386 = vsel %vm989, %v2384, %v2385
      %v2387 = vrot.slane %v2260, 2
      %v2388 = vrot.slane %v2261, 2
      %v2389 = vsel %vm989, %v2387, %v2388
      %v2390 = vrot.slane %v2262, 2
      %v2391 = vrot.slane %v2263, 2
      %v2392 = vsel %vm989, %v2390, %v2391
      %v2393 = vrot.slane %v2264, 2
      %v2394 = vrot.slane %v2265, 2
      %v2395 = vsel %vm989, %v2393, %v2394
      %v2396 = vrot.slane %v2266, 2
      %v2397 = vrot.slane %v2267, 2
      %v2398 = vsel %vm989, %v2396, %v2397
      %v2399 = vrot.slane %v2268, 2
      %v2400 = vrot.slane %v2269, 2
      %v2401 = vsel %vm989, %v2399, %v2400
      %v2406 = vrot.slane %v2250, 1
      %v2407 = vrot.slane %v2251, 1
      %v2408 = vsel %vm764, %v2406, %v2407
      %v2409 = vrot.slane %v2270, 1
      %v2410 = vrot.slane %v2271, 1
      %v2411 = vsel %vm764, %v2409, %v2410
      %v2428 = vrot.slane %v2250, 2
      %v2429 = vrot.slane %v2251, 2
      %v2430 = vsel %vm989, %v2428, %v2429
      %v2431 = vrot.slane %v2270, 2
      %v2432 = vrot.slane %v2271, 2
      %v2433 = vsel %vm989, %v2431, %v2432
      %v2438 = vrot.slane %v2252, 1
      %v2439 = vrot.slane %v2253, 1
      %v2440 = vsel %vm764, %v2438, %v2439
      %v2441 = vrot.slane %v2272, 1
      %v2442 = vrot.slane %v2273, 1
      %v2443 = vsel %vm764, %v2441, %v2442
      %v2444 = vrot.slane %v2252, 2
      %v2445 = vrot.slane %v2253, 2
      %v2446 = vsel %vm989, %v2444, %v2445
      %v2447 = vrot.slane %v2272, 2
      %v2448 = vrot.slane %v2273, 2
      %v2449 = vsel %vm989, %v2447, %v2448
      %2450 = vrot.lane.b32.xlu0 %v2308, 32
      %v2451 = vpop.permute.xlu0 %2450
      %2452 = vrot.lane.b32.xlu0 %v2311, 32
      %v2453 = vpop.permute.xlu0 %2452
      %2454 = vrot.lane.b32.xlu0 %v2314, 32
      %v2455 = vpop.permute.xlu0 %2454
      %2456 = vrot.lane.b32.xlu0 %v2317, 32
      %v2457 = vpop.permute.xlu0 %2456
      %2458 = vrot.lane.b32.xlu0 %v2320, 32
      %v2459 = vpop.permute.xlu0 %2458
      %2460 = vrot.lane.b32.xlu0 %v2323, 32
      %v2461 = vpop.permute.xlu0 %2460
      %2462 = vrot.lane.b32.xlu0 %v2326, 32
      %v2463 = vpop.permute.xlu0 %2462
      %2464 = vrot.lane.b32.xlu0 %v2329, 32
      %v2465 = vpop.permute.xlu0 %2464
      %2466 = vrot.lane.b32.xlu0 %v2332, 32
      %v2467 = vpop.permute.xlu0 %2466
      %2468 = vrot.lane.b32.xlu0 %v2335, 32
      %v2469 = vpop.permute.xlu0 %2468
      %2470 = vrot.lane.b32.xlu0 %v2338, 32
      %v2471 = vpop.permute.xlu0 %2470
      %2472 = vrot.lane.b32.xlu0 %v2341, 32
      %v2473 = vpop.permute.xlu0 %2472
      %2474 = vrot.lane.b32.xlu0 %v2344, 32
      %v2475 = vpop.permute.xlu0 %2474
      %2476 = vrot.lane.b32.xlu0 %v2347, 32
      %v2477 = vpop.permute.xlu0 %2476
      %2478 = vrot.lane.b32.xlu0 %v2350, 32
      %v2479 = vpop.permute.xlu0 %2478
      %2480 = vrot.lane.b32.xlu0 %v2353, 32
      %v2481 = vpop.permute.xlu0 %2480
      %2498 = vrot.lane.b32.xlu0 %v2356, 64
      %v2499 = vpop.permute.xlu0 %2498
      %2500 = vrot.lane.b32.xlu0 %v2359, 64
      %v2501 = vpop.permute.xlu0 %2500
      %2502 = vrot.lane.b32.xlu0 %v2362, 64
      %v2503 = vpop.permute.xlu0 %2502
      %2504 = vrot.lane.b32.xlu0 %v2365, 64
      %v2505 = vpop.permute.xlu0 %2504
      %2506 = vrot.lane.b32.xlu0 %v2368, 64
      %v2507 = vpop.permute.xlu0 %2506
      %2508 = vrot.lane.b32.xlu0 %v2371, 64
      %v2509 = vpop.permute.xlu0 %2508
      %2510 = vrot.lane.b32.xlu0 %v2374, 64
      %v2511 = vpop.permute.xlu0 %2510
      %2512 = vrot.lane.b32.xlu0 %v2377, 64
      %v2513 = vpop.permute.xlu0 %2512
      %2514 = vrot.lane.b32.xlu0 %v2380, 64
      %v2515 = vpop.permute.xlu0 %2514
      %2516 = vrot.lane.b32.xlu0 %v2383, 64
      %v2517 = vpop.permute.xlu0 %2516
      %2518 = vrot.lane.b32.xlu0 %v2386, 64
      %v2519 = vpop.permute.xlu0 %2518
      %2520 = vrot.lane.b32.xlu0 %v2389, 64
      %v2521 = vpop.permute.xlu0 %2520
      %2522 = vrot.lane.b32.xlu0 %v2392, 64
      %v2523 = vpop.permute.xlu0 %2522
      %2524 = vrot.lane.b32.xlu0 %v2395, 64
      %v2525 = vpop.permute.xlu0 %2524
      %2526 = vrot.lane.b32.xlu0 %v2398, 64
      %v2527 = vpop.permute.xlu0 %2526
      %2528 = vrot.lane.b32.xlu0 %v2401, 64
      %v2529 = vpop.permute.xlu0 %2528
      %2546 = vrot.lane.b32.xlu0 %v2236, 96
      %v2547 = vpop.permute.xlu0 %2546
      %2548 = vrot.lane.b32.xlu0 %v2238, 96
      %v2549 = vpop.permute.xlu0 %2548
      %2550 = vrot.lane.b32.xlu0 %v2240, 96
      %v2551 = vpop.permute.xlu0 %2550
      %2552 = vrot.lane.b32.xlu0 %v2242, 96
      %v2553 = vpop.permute.xlu0 %2552
      %2554 = vrot.lane.b32.xlu0 %v2244, 96
      %v2555 = vpop.permute.xlu0 %2554
      %2556 = vrot.lane.b32.xlu0 %v2246, 96
      %v2557 = vpop.permute.xlu0 %2556
      %2558 = vrot.lane.b32.xlu0 %v2248, 96
      %v2559 = vpop.permute.xlu0 %2558
      %2560 = vrot.lane.b32.xlu0 %v2250, 96
      %v2561 = vpop.permute.xlu0 %2560
      %2562 = vrot.lane.b32.xlu0 %v2256, 96
      %v2563 = vpop.permute.xlu0 %2562
      %2564 = vrot.lane.b32.xlu0 %v2258, 96
      %v2565 = vpop.permute.xlu0 %2564
      %2566 = vrot.lane.b32.xlu0 %v2260, 96
      %v2567 = vpop.permute.xlu0 %2566
      %2568 = vrot.lane.b32.xlu0 %v2262, 96
      %v2569 = vpop.permute.xlu0 %2568
      %2570 = vrot.lane.b32.xlu0 %v2264, 96
      %v2571 = vpop.permute.xlu0 %2570
      %2572 = vrot.lane.b32.xlu0 %v2266, 96
      %v2573 = vpop.permute.xlu0 %2572
      %2574 = vrot.lane.b32.xlu0 %v2268, 96
      %v2575 = vpop.permute.xlu0 %2574
      %2576 = vrot.lane.b32.xlu0 %v2270, 96
      %v2577 = vpop.permute.xlu0 %2576
      %2594 = vrot.lane.b32.xlu0 %v2359, 32
      %v2595 = vpop.permute.xlu0 %2594
      %2596 = vrot.lane.b32.xlu0 %v2362, 32
      %v2597 = vpop.permute.xlu0 %2596
      %2598 = vrot.lane.b32.xlu0 %v2365, 32
      %v2599 = vpop.permute.xlu0 %2598
      %2600 = vrot.lane.b32.xlu0 %v2368, 32
      %v2601 = vpop.permute.xlu0 %2600
      %2602 = vrot.lane.b32.xlu0 %v2371, 32
      %v2603 = vpop.permute.xlu0 %2602
      %2604 = vrot.lane.b32.xlu0 %v2374, 32
      %v2605 = vpop.permute.xlu0 %2604
      %2606 = vrot.lane.b32.xlu0 %v2377, 32
      %v2607 = vpop.permute.xlu0 %2606
      %2608 = vrot.lane.b32.xlu0 %v2430, 32
      %v2609 = vpop.permute.xlu0 %2608
      %2610 = vrot.lane.b32.xlu0 %v2383, 32
      %v2611 = vpop.permute.xlu0 %2610
      %2612 = vrot.lane.b32.xlu0 %v2386, 32
      %v2613 = vpop.permute.xlu0 %2612
      %2614 = vrot.lane.b32.xlu0 %v2389, 32
      %v2615 = vpop.permute.xlu0 %2614
      %2616 = vrot.lane.b32.xlu0 %v2392, 32
      %v2617 = vpop.permute.xlu0 %2616
      %2618 = vrot.lane.b32.xlu0 %v2395, 32
      %v2619 = vpop.permute.xlu0 %2618
      %2620 = vrot.lane.b32.xlu0 %v2398, 32
      %v2621 = vpop.permute.xlu0 %2620
      %2622 = vrot.lane.b32.xlu0 %v2401, 32
      %v2623 = vpop.permute.xlu0 %2622
      %2624 = vrot.lane.b32.xlu0 %v2433, 32
      %v2625 = vpop.permute.xlu0 %2624
      %2642 = vrot.lane.b32.xlu0 %v2238, 64
      %v2643 = vpop.permute.xlu0 %2642
      %2644 = vrot.lane.b32.xlu0 %v2240, 64
      %v2645 = vpop.permute.xlu0 %2644
      %2646 = vrot.lane.b32.xlu0 %v2242, 64
      %v2647 = vpop.permute.xlu0 %2646
      %2648 = vrot.lane.b32.xlu0 %v2244, 64
      %v2649 = vpop.permute.xlu0 %2648
      %2650 = vrot.lane.b32.xlu0 %v2246, 64
      %v2651 = vpop.permute.xlu0 %2650
      %2652 = vrot.lane.b32.xlu0 %v2248, 64
      %v2653 = vpop.permute.xlu0 %2652
      %2654 = vrot.lane.b32.xlu0 %v2250, 64
      %v2655 = vpop.permute.xlu0 %2654
      %2656 = vrot.lane.b32.xlu0 %v2252, 64
      %v2657 = vpop.permute.xlu0 %2656
      %2658 = vrot.lane.b32.xlu0 %v2258, 64
      %v2659 = vpop.permute.xlu0 %2658
      %2660 = vrot.lane.b32.xlu0 %v2260, 64
      %v2661 = vpop.permute.xlu0 %2660
      %2662 = vrot.lane.b32.xlu0 %v2262, 64
      %v2663 = vpop.permute.xlu0 %2662
      %2664 = vrot.lane.b32.xlu0 %v2264, 64
      %v2665 = vpop.permute.xlu0 %2664
      %2666 = vrot.lane.b32.xlu0 %v2266, 64
      %v2667 = vpop.permute.xlu0 %2666
      %2668 = vrot.lane.b32.xlu0 %v2268, 64
      %v2669 = vpop.permute.xlu0 %2668
      %2670 = vrot.lane.b32.xlu0 %v2270, 64
      %v2671 = vpop.permute.xlu0 %2670
      %2672 = vrot.lane.b32.xlu0 %v2272, 64
      %v2673 = vpop.permute.xlu0 %2672
      %2690 = vrot.lane.b32.xlu0 %v2314, 96
      %v2691 = vpop.permute.xlu0 %2690
      %2692 = vrot.lane.b32.xlu0 %v2317, 96
      %v2693 = vpop.permute.xlu0 %2692
      %2694 = vrot.lane.b32.xlu0 %v2320, 96
      %v2695 = vpop.permute.xlu0 %2694
      %2696 = vrot.lane.b32.xlu0 %v2323, 96
      %v2697 = vpop.permute.xlu0 %2696
      %2698 = vrot.lane.b32.xlu0 %v2326, 96
      %v2699 = vpop.permute.xlu0 %2698
      %2700 = vrot.lane.b32.xlu0 %v2329, 96
      %v2701 = vpop.permute.xlu0 %2700
      %2702 = vrot.lane.b32.xlu0 %v2408, 96
      %v2703 = vpop.permute.xlu0 %2702
      %2704 = vrot.lane.b32.xlu0 %v2440, 96
      %v2705 = vpop.permute.xlu0 %2704
      %2706 = vrot.lane.b32.xlu0 %v2338, 96
      %v2707 = vpop.permute.xlu0 %2706
      %2708 = vrot.lane.b32.xlu0 %v2341, 96
      %v2709 = vpop.permute.xlu0 %2708
      %2710 = vrot.lane.b32.xlu0 %v2344, 96
      %v2711 = vpop.permute.xlu0 %2710
      %2712 = vrot.lane.b32.xlu0 %v2347, 96
      %v2713 = vpop.permute.xlu0 %2712
      %2714 = vrot.lane.b32.xlu0 %v2350, 96
      %v2715 = vpop.permute.xlu0 %2714
      %2716 = vrot.lane.b32.xlu0 %v2353, 96
      %v2717 = vpop.permute.xlu0 %2716
      %2718 = vrot.lane.b32.xlu0 %v2411, 96
      %v2719 = vpop.permute.xlu0 %2718
      %2720 = vrot.lane.b32.xlu0 %v2443, 96
      %v2721 = vpop.permute.xlu0 %2720
      %vm2738 = vcmask 261120
      %v2739 = vsel %vm2738, %v2234, %v2451
      %v2740 = vsel %vm2738, %v2236, %v2453
      %v2741 = vsel %vm2738, %v2238, %v2455
      %v2742 = vsel %vm2738, %v2240, %v2457
      %v2743 = vsel %vm2738, %v2242, %v2459
      %v2744 = vsel %vm2738, %v2244, %v2461
      %v2745 = vsel %vm2738, %v2246, %v2463
      %v2746 = vsel %vm2738, %v2248, %v2465
      %v2747 = vsel %vm2738, %v2254, %v2467
      %v2748 = vsel %vm2738, %v2256, %v2469
      %v2749 = vsel %vm2738, %v2258, %v2471
      %v2750 = vsel %vm2738, %v2260, %v2473
      %v2751 = vsel %vm2738, %v2262, %v2475
      %v2752 = vsel %vm2738, %v2264, %v2477
      %v2753 = vsel %vm2738, %v2266, %v2479
      %v2754 = vsel %vm2738, %v2268, %v2481
      %vm2755 = vcmask 523264
      %v2756 = vsel %vm2755, %v2739, %v2499
      %v2757 = vsel %vm2755, %v2740, %v2501
      %v2758 = vsel %vm2755, %v2741, %v2503
      %v2759 = vsel %vm2755, %v2742, %v2505
      %v2760 = vsel %vm2755, %v2743, %v2507
      %v2761 = vsel %vm2755, %v2744, %v2509
      %v2762 = vsel %vm2755, %v2745, %v2511
      %v2763 = vsel %vm2755, %v2746, %v2513
      %v2764 = vsel %vm2755, %v2747, %v2515
      %v2765 = vsel %vm2755, %v2748, %v2517
      %v2766 = vsel %vm2755, %v2749, %v2519
      %v2767 = vsel %vm2755, %v2750, %v2521
      %v2768 = vsel %vm2755, %v2751, %v2523
      %v2769 = vsel %vm2755, %v2752, %v2525
      %v2770 = vsel %vm2755, %v2753, %v2527
      %v2771 = vsel %vm2755, %v2754, %v2529
      %vm2772 = vcmask 785408
      %v2773 = vsel %vm2772, %v2756, %v2547
      %v2774 = vsel %vm2772, %v2757, %v2549
      %v2775 = vsel %vm2772, %v2758, %v2551
      %v2776 = vsel %vm2772, %v2759, %v2553
      %v2777 = vsel %vm2772, %v2760, %v2555
      %v2778 = vsel %vm2772, %v2761, %v2557
      %v2779 = vsel %vm2772, %v2762, %v2559
      %v2780 = vsel %vm2772, %v2763, %v2561
      %v2781 = vsel %vm2772, %v2764, %v2563
      %v2782 = vsel %vm2772, %v2765, %v2565
      %v2783 = vsel %vm2772, %v2766, %v2567
      %v2784 = vsel %vm2772, %v2767, %v2569
      %v2785 = vsel %vm2772, %v2768, %v2571
      %v2786 = vsel %vm2772, %v2769, %v2573
      %v2787 = vsel %vm2772, %v2770, %v2575
      %v2788 = vsel %vm2772, %v2771, %v2577
      %v2789 = vsel %vm2738, %v2311, %v2595
      %v2790 = vsel %vm2738, %v2314, %v2597
      %v2791 = vsel %vm2738, %v2317, %v2599
      %v2792 = vsel %vm2738, %v2320, %v2601
      %v2793 = vsel %vm2738, %v2323, %v2603
      %v2794 = vsel %vm2738, %v2326, %v2605
      %v2795 = vsel %vm2738, %v2329, %v2607
      %v2796 = vsel %vm2738, %v2408, %v2609
      %v2797 = vsel %vm2738, %v2335, %v2611
      %v2798 = vsel %vm2738, %v2338, %v2613
      %v2799 = vsel %vm2738, %v2341, %v2615
      %v2800 = vsel %vm2738, %v2344, %v2617
      %v2801 = vsel %vm2738, %v2347, %v2619
      %v2802 = vsel %vm2738, %v2350, %v2621
      %v2803 = vsel %vm2738, %v2353, %v2623
      %v2804 = vsel %vm2738, %v2411, %v2625
      %v2805 = vsel %vm2755, %v2789, %v2643
      %v2806 = vsel %vm2755, %v2790, %v2645
      %v2807 = vsel %vm2755, %v2791, %v2647
      %v2808 = vsel %vm2755, %v2792, %v2649
      %v2809 = vsel %vm2755, %v2793, %v2651
      %v2810 = vsel %vm2755, %v2794, %v2653
      %v2811 = vsel %vm2755, %v2795, %v2655
      %v2812 = vsel %vm2755, %v2796, %v2657
      %v2813 = vsel %vm2755, %v2797, %v2659
      %v2814 = vsel %vm2755, %v2798, %v2661
      %v2815 = vsel %vm2755, %v2799, %v2663
      %v2816 = vsel %vm2755, %v2800, %v2665
      %v2817 = vsel %vm2755, %v2801, %v2667
      %v2818 = vsel %vm2755, %v2802, %v2669
      %v2819 = vsel %vm2755, %v2803, %v2671
      %v2820 = vsel %vm2755, %v2804, %v2673
      %v2821 = vsel %vm2772, %v2805, %v2691
      %v2822 = vsel %vm2772, %v2806, %v2693
      %v2823 = vsel %vm2772, %v2807, %v2695
      %v2824 = vsel %vm2772, %v2808, %v2697
      %v2825 = vsel %vm2772, %v2809, %v2699
      %v2826 = vsel %vm2772, %v2810, %v2701
      %v2827 = vsel %vm2772, %v2811, %v2703
      %v2828 = vsel %vm2772, %v2812, %v2705
      %v2829 = vsel %vm2772, %v2813, %v2707
      %v2830 = vsel %vm2772, %v2814, %v2709
      %v2831 = vsel %vm2772, %v2815, %v2711
      %v2832 = vsel %vm2772, %v2816, %v2713
      %v2833 = vsel %vm2772, %v2817, %v2715
      %v2834 = vsel %vm2772, %v2818, %v2717
      %v2835 = vsel %vm2772, %v2819, %v2719
      %v2836 = vsel %vm2772, %v2820, %v2721
      %v2837 = vld [vmem:[%s325] sm:$0xff]
      %v2838 = vld [vmem:[%s325 + $0x8] sm:$0xff]
      %v2839 = vld [vmem:[%s325 + $0x10] sm:$0xff]
      %v2840 = vld [vmem:[%s325 + $0x18] sm:$0xff]
      %v2841 = vld [vmem:[%s325 + $0x20] sm:$0xff]
      %v2842 = vld [vmem:[%s325 + $0x28] sm:$0xff]
      %v2843 = vld [vmem:[%s325 + $0x30] sm:$0xff]
      %v2844 = vld [vmem:[%s325 + $0x38] sm:$0xff]
      %v2845 = vld [vmem:[%s325 + $0x40] sm:$0xff]
      %v2846 = vld [vmem:[%s325 + $0x48] sm:$0xff]
      %v2847 = vld [vmem:[%s325 + $0x50] sm:$0xff]
      %v2848 = vld [vmem:[%s325 + $0x58] sm:$0xff]
      %v2849 = vld [vmem:[%s325 + $0x60] sm:$0xff]
      %v2850 = vld [vmem:[%s325 + $0x68] sm:$0xff]
      %v2851 = vld [vmem:[%s325 + $0x70] sm:$0xff]
      %v2852 = vld [vmem:[%s325 + $0x78] sm:$0xff]
      %v2853 = vld [vmem:[%s325 + $0x80] sm:$0xff]
      %v2854 = vld [vmem:[%s325 + $0x88] sm:$0xff]
      %v2855 = vld [vmem:[%s325 + $0x90] sm:$0xff]
      %v2856 = vld [vmem:[%s325 + $0x98] sm:$0xff]
      %v2857 = vld [vmem:[%s325 + $0xa0] sm:$0xff]
      %v2858 = vld [vmem:[%s325 + $0xa8] sm:$0xff]
      %v2859 = vld [vmem:[%s325 + $0xb0] sm:$0xff]
      %v2860 = vld [vmem:[%s325 + $0xb8] sm:$0xff]
      %v2861 = vld [vmem:[%s325 + $0xc0] sm:$0xff]
      %v2862 = vld [vmem:[%s325 + $0xc8] sm:$0xff]
      %v2863 = vld [vmem:[%s325 + $0xd0] sm:$0xff]
      %v2864 = vld [vmem:[%s325 + $0xd8] sm:$0xff]
      %v2865 = vld [vmem:[%s325 + $0xe0] sm:$0xff]
      %v2866 = vld [vmem:[%s325 + $0xe8] sm:$0xff]
      %v2867 = vld [vmem:[%s325 + $0xf0] sm:$0xff]
      %v2868 = vld [vmem:[%s325 + $0xf8] sm:$0xff]
      %v2869 = vld [vmem:[%s325 + $0x100] sm:$0xff]
      %v2870 = vld [vmem:[%s325 + $0x108] sm:$0xff]
      %v2871 = vld [vmem:[%s325 + $0x110] sm:$0xff]
      %v2872 = vld [vmem:[%s325 + $0x118] sm:$0xff]
      %v2873 = vld [vmem:[%s328] sm:$0x1]
      %v2875 = vlaneseq
      %v2876 = vshrl.u32 %v2875, 7
      %v2877 = vsub.s32 0, %v2876
      %v2878 = vrot.slane %v2873, %v2877
      %v2880 = vsel %vm2738, %v2362, 0
      %v2882 = vsel %vm2738, %v2365, 0
      %v2884 = vsel %vm2738, %v2368, 0
      %v2886 = vsel %vm2738, %v2371, 0
      %v2888 = vsel %vm2738, %v2374, 0
      %v2890 = vsel %vm2738, %v2377, 0
      %v2892 = vsel %vm2738, %v2430, 0
      %v2894 = vsel %vm2738, %v2446, 0
      %v2896 = vsel %vm2738, %v2386, 0
      %v2898 = vsel %vm2738, %v2389, 0
      %v2900 = vsel %vm2738, %v2392, 0
      %v2902 = vsel %vm2738, %v2395, 0
      %v2904 = vsel %vm2738, %v2398, 0
      %v2906 = vsel %vm2738, %v2401, 0
      %v2908 = vsel %vm2738, %v2433, 0
      %v2910 = vsel %vm2738, %v2449, 0
      %2912 = vmatprep.subr.mxu0 0.0
      %2913 = vmatpush1.msra.mxu0 %v2852
      %2914 = vmatprep.subr.mxu0 0.0
      %2915 = vmatpush1.msra.mxu0 %v2851
      %2916 = vmatprep.subr.mxu0 0.0
      %2917 = vmatpush1.msra.mxu0 %v2850
      %2918 = vmatprep.subr.mxu0 0.0
      %2919 = vmatpush1.msra.mxu0 %v2849
      %2920 = vmatprep.subr.mxu0 0.0
      %2921 = vmatpush1.msra.mxu0 %v2848
      %2922 = vmatprep.subr.mxu0 0.0
      %2923 = vmatpush1.msra.mxu0 %v2847
      %2924 = vmatprep.subr.mxu0 0.0
      %2925 = vmatpush1.msra.mxu0 %v2846
      %2926 = vmatprep.subr.mxu0 0.0
      %2927 = vmatpush1.msra.mxu0 %v2845
      %2928 = vmatprep.subr.mxu0 0.0
      %2929 = vmatpush1.msra.mxu0 %v2844
      %2930 = vmatprep.subr.mxu0 0.0
      %2931 = vmatpush1.msra.mxu0 %v2843
      %2932 = vmatprep.subr.mxu0 0.0
      %2933 = vmatpush1.msra.mxu0 %v2842
      %2934 = vmatprep.subr.mxu0 0.0
      %2935 = vmatpush1.msra.mxu0 %v2841
      %2936 = vmatprep.subr.mxu0 0.0
      %2937 = vmatpush1.msra.mxu0 %v2840
      %2938 = vmatprep.subr.mxu0 0.0
      %2939 = vmatpush1.msra.mxu0 %v2839
      %2940 = vmatprep.subr.mxu0 0.0
      %2941 = vmatpush1.msra.mxu0 %v2838
      %2942 = vmatprep.subr.mxu0 0.0
      %2943 = vmatpush1.msra.mxu0 %v2837
      %2944 = vmatprep.subr.mxu0 0.0
      %2945 = vmatpush2.msra.mxu0 %v2868
      %2946 = vmatprep.subr.mxu0 0.0
      %2947 = vmatpush2.msra.mxu0 %v2867
      %2948 = vmatprep.subr.mxu0 0.0
      %2949 = vmatpush2.msra.mxu0 %v2866
      %2950 = vmatprep.subr.mxu0 0.0
      %2951 = vmatpush2.msra.mxu0 %v2865
      %2952 = vmatprep.subr.mxu0 0.0
      %2953 = vmatpush2.msra.mxu0 %v2864
      %2954 = vmatprep.subr.mxu0 0.0
      %2955 = vmatpush2.msra.mxu0 %v2863
      %2956 = vmatprep.subr.mxu0 0.0
      %2957 = vmatpush2.msra.mxu0 %v2862
      %2958 = vmatprep.subr.mxu0 0.0
      %2959 = vmatpush2.msra.mxu0 %v2861
      %2960 = vmatprep.subr.mxu0 0.0
      %2961 = vmatpush2.msra.mxu0 %v2860
      %2962 = vmatprep.subr.mxu0 0.0
      %2963 = vmatpush2.msra.mxu0 %v2859
      %2964 = vmatprep.subr.mxu0 0.0
      %2965 = vmatpush2.msra.mxu0 %v2858
      %2966 = vmatprep.subr.mxu0 0.0
      %2967 = vmatpush2.msra.mxu0 %v2857
      %2968 = vmatprep.subr.mxu0 0.0
      %2969 = vmatpush2.msra.mxu0 %v2856
      %2970 = vmatprep.subr.mxu0 0.0
      %2971 = vmatpush2.msra.mxu0 %v2855
      %2972 = vmatprep.subr.mxu0 0.0
      %2973 = vmatpush2.msra.mxu0 %v2854
      %2974 = vmatprep.subr.mxu0 0.0
      %2975 = vmatpush2.msra.mxu0 %v2853
      %2976 = vmatprep.mubr.f32.mxu0 %v2821
      %2977 = vmatmul.mubr.f32.gmra.mxu0 %v2773
      %v2978 = vpop.f32.mrf.mxu0
      %v2979 = vadd.f32 %v2878, %v2978
      %v2980 = vpop.f32.mrf.mxu0
      %2981 = vmatprep.mubr.f32.mxu0 %v2822
      %2982 = vmatmul.mubr.f32.gmra.mxu0 %v2774
      %v2983 = vpop.f32.mrf.mxu0
      %v2984 = vadd.f32 %v2878, %v2983
      %v2985 = vpop.f32.mrf.mxu0
      %2986 = vmatprep.mubr.f32.mxu0 %v2823
      %2987 = vmatmul.mubr.f32.gmra.mxu0 %v2775
      %v2988 = vpop.f32.mrf.mxu0
      %v2989 = vadd.f32 %v2878, %v2988
      %v2990 = vpop.f32.mrf.mxu0
      %2991 = vmatprep.mubr.f32.mxu0 %v2824
      %2992 = vmatmul.mubr.f32.gmra.mxu0 %v2776
      %v2993 = vpop.f32.mrf.mxu0
      %v2994 = vadd.f32 %v2878, %v2993
      %v2995 = vpop.f32.mrf.mxu0
      %2996 = vmatprep.mubr.f32.mxu0 %v2825
      %2997 = vmatmul.mubr.f32.gmra.mxu0 %v2777
      %v2998 = vpop.f32.mrf.mxu0
      %v2999 = vadd.f32 %v2878, %v2998
      %v3000 = vpop.f32.mrf.mxu0
      %3001 = vmatprep.mubr.f32.mxu0 %v2826
      %3002 = vmatmul.mubr.f32.gmra.mxu0 %v2778
      %v3003 = vpop.f32.mrf.mxu0
      %v3004 = vadd.f32 %v2878, %v3003
      %v3005 = vpop.f32.mrf.mxu0
      %3006 = vmatprep.mubr.f32.mxu0 %v2827
      %3007 = vmatmul.mubr.f32.gmra.mxu0 %v2779
      %v3008 = vpop.f32.mrf.mxu0
      %v3009 = vadd.f32 %v2878, %v3008
      %v3010 = vpop.f32.mrf.mxu0
      %3011 = vmatprep.mubr.f32.mxu0 %v2828
      %3012 = vmatmul.mubr.f32.gmra.mxu0 %v2780
      %v3013 = vpop.f32.mrf.mxu0
      %v3014 = vadd.f32 %v2878, %v3013
      %v3015 = vpop.f32.mrf.mxu0
      %3016 = vmatprep.mubr.f32.mxu0 %v2829
      %3017 = vmatmul.mubr.f32.gmra.mxu0 %v2781
      %v3018 = vpop.f32.mrf.mxu0
      %v3019 = vadd.f32 %v2878, %v3018
      %v3020 = vpop.f32.mrf.mxu0
      %3021 = vmatprep.mubr.f32.mxu0 %v2830
      %3022 = vmatmul.mubr.f32.gmra.mxu0 %v2782
      %v3023 = vpop.f32.mrf.mxu0
      %v3024 = vadd.f32 %v2878, %v3023
      %v3025 = vpop.f32.mrf.mxu0
      %3026 = vmatprep.mubr.f32.mxu0 %v2831
      %3027 = vmatmul.mubr.f32.gmra.mxu0 %v2783
      %v3028 = vpop.f32.mrf.mxu0
      %v3029 = vadd.f32 %v2878, %v3028
      %v3030 = vpop.f32.mrf.mxu0
      %3031 = vmatprep.mubr.f32.mxu0 %v2832
      %3032 = vmatmul.mubr.f32.gmra.mxu0 %v2784
      %v3033 = vpop.f32.mrf.mxu0
      %v3034 = vadd.f32 %v2878, %v3033
      %v3035 = vpop.f32.mrf.mxu0
      %3036 = vmatprep.mubr.f32.mxu0 %v2833
      %3037 = vmatmul.mubr.f32.gmra.mxu0 %v2785
      %v3038 = vpop.f32.mrf.mxu0
      %v3039 = vadd.f32 %v2878, %v3038
      %v3040 = vpop.f32.mrf.mxu0
      %3041 = vmatprep.mubr.f32.mxu0 %v2834
      %3042 = vmatmul.mubr.f32.gmra.mxu0 %v2786
      %v3043 = vpop.f32.mrf.mxu0
      %v3044 = vadd.f32 %v2878, %v3043
      %v3045 = vpop.f32.mrf.mxu0
      %3046 = vmatprep.mubr.f32.mxu0 %v2835
      %3047 = vmatmul.mubr.f32.gmra.mxu0 %v2787
      %v3048 = vpop.f32.mrf.mxu0
      %v3049 = vadd.f32 %v2878, %v3048
      %v3050 = vpop.f32.mrf.mxu0
      %3051 = vmatprep.mubr.f32.mxu0 %v2836
      %3052 = vmatmul.mubr.f32.gmra.mxu0 %v2788
      %v3053 = vpop.f32.mrf.mxu0
      %v3054 = vadd.f32 %v2878, %v3053
      %v3055 = vpop.f32.mrf.mxu0
      %3056 = vdwg.mxu0
      %3057 = vmatprep.subr.mxu0 0.0
      %3058 = vmatpush1.msra.mxu0 0.0
      %3059 = vmatprep.subr.mxu0 0.0
      %3060 = vmatpush1.msra.mxu0 0.0
      %3061 = vmatprep.subr.mxu0 0.0
      %3062 = vmatpush1.msra.mxu0 0.0
      %3063 = vmatprep.subr.mxu0 0.0
      %3064 = vmatpush1.msra.mxu0 0.0
      %3065 = vmatprep.subr.mxu0 0.0
      %3066 = vmatpush1.msra.mxu0 0.0
      %3067 = vmatprep.subr.mxu0 0.0
      %3068 = vmatpush1.msra.mxu0 0.0
      %3069 = vmatprep.subr.mxu0 0.0
      %3070 = vmatpush1.msra.mxu0 0.0
      %3071 = vmatprep.subr.mxu0 0.0
      %3072 = vmatpush1.msra.mxu0 0.0
      %3073 = vmatprep.subr.mxu0 0.0
      %3074 = vmatpush1.msra.mxu0 0.0
      %3075 = vmatprep.subr.mxu0 0.0
      %3076 = vmatpush1.msra.mxu0 0.0
      %3077 = vmatprep.subr.mxu0 0.0
      %3078 = vmatpush1.msra.mxu0 0.0
      %3079 = vmatprep.subr.mxu0 0.0
      %3080 = vmatpush1.msra.mxu0 0.0
      %3081 = vmatprep.subr.mxu0 0.0
      %3082 = vmatpush1.msra.mxu0 %v2872
      %3083 = vmatprep.subr.mxu0 0.0
      %3084 = vmatpush1.msra.mxu0 %v2871
      %3085 = vmatprep.subr.mxu0 0.0
      %3086 = vmatpush1.msra.mxu0 %v2870
      %3087 = vmatprep.subr.mxu0 0.0
      %3088 = vmatpush1.msra.mxu0 %v2869
      %3089 = vmatprep.subr.mxu0 0.0
      %3090 = vmatpush2.msra.mxu0 0.0
      %3091 = vmatprep.subr.mxu0 0.0
      %3092 = vmatpush2.msra.mxu0 0.0
      %3093 = vmatprep.subr.mxu0 0.0
      %3094 = vmatpush2.msra.mxu0 0.0
      %3095 = vmatprep.subr.mxu0 0.0
      %3096 = vmatpush2.msra.mxu0 0.0
      %3097 = vmatprep.subr.mxu0 0.0
      %3098 = vmatpush2.msra.mxu0 0.0
      %3099 = vmatprep.subr.mxu0 0.0
      %3100 = vmatpush2.msra.mxu0 0.0
      %3101 = vmatprep.subr.mxu0 0.0
      %3102 = vmatpush2.msra.mxu0 0.0
      %3103 = vmatprep.subr.mxu0 0.0
      %3104 = vmatpush2.msra.mxu0 0.0
      %3105 = vmatprep.subr.mxu0 0.0
      %3106 = vmatpush2.msra.mxu0 0.0
      %3107 = vmatprep.subr.mxu0 0.0
      %3108 = vmatpush2.msra.mxu0 0.0
      %3109 = vmatprep.subr.mxu0 0.0
      %3110 = vmatpush2.msra.mxu0 0.0
      %3111 = vmatprep.subr.mxu0 0.0
      %3112 = vmatpush2.msra.mxu0 0.0
      %3113 = vmatprep.subr.mxu0 0.0
      %3114 = vmatpush2.msra.mxu0 0.0
      %3115 = vmatprep.subr.mxu0 0.0
      %3116 = vmatpush2.msra.mxu0 0.0
      %3117 = vmatprep.subr.mxu0 0.0
      %3118 = vmatpush2.msra.mxu0 0.0
      %3119 = vmatprep.subr.mxu0 0.0
      %3120 = vmatpush2.msra.mxu0 0.0
      %3121 = vmatprep.mubr.f32.mxu0 0.0
      %3122 = vmatmul.mubr.f32.gmra.mxu0 %v2880
      %v3123 = vpop.f32.mrf.mxu0
      %v3124 = vadd.f32 %v2979, %v3123
      %v3125 = vpop.f32.mrf.mxu0
      %3126 = vmatprep.mubr.f32.mxu0 0.0
      %3127 = vmatmul.mubr.f32.gmra.mxu0 %v2882
      %v3128 = vpop.f32.mrf.mxu0
      %v3129 = vadd.f32 %v2984, %v3128
      %v3130 = vpop.f32.mrf.mxu0
      %3131 = vmatprep.mubr.f32.mxu0 0.0
      %3132 = vmatmul.mubr.f32.gmra.mxu0 %v2884
      %v3133 = vpop.f32.mrf.mxu0
      %v3134 = vadd.f32 %v2989, %v3133
      %v3135 = vpop.f32.mrf.mxu0
      %3136 = vmatprep.mubr.f32.mxu0 0.0
      %3137 = vmatmul.mubr.f32.gmra.mxu0 %v2886
      %v3138 = vpop.f32.mrf.mxu0
      %v3139 = vadd.f32 %v2994, %v3138
      %v3140 = vpop.f32.mrf.mxu0
      %3141 = vmatprep.mubr.f32.mxu0 0.0
      %3142 = vmatmul.mubr.f32.gmra.mxu0 %v2888
      %v3143 = vpop.f32.mrf.mxu0
      %v3144 = vadd.f32 %v2999, %v3143
      %v3145 = vpop.f32.mrf.mxu0
      %3146 = vmatprep.mubr.f32.mxu0 0.0
      %3147 = vmatmul.mubr.f32.gmra.mxu0 %v2890
      %v3148 = vpop.f32.mrf.mxu0
      %v3149 = vadd.f32 %v3004, %v3148
      %v3150 = vpop.f32.mrf.mxu0
      %3151 = vmatprep.mubr.f32.mxu0 0.0
      %3152 = vmatmul.mubr.f32.gmra.mxu0 %v2892
      %v3153 = vpop.f32.mrf.mxu0
      %v3154 = vadd.f32 %v3009, %v3153
      %v3155 = vpop.f32.mrf.mxu0
      %3156 = vmatprep.mubr.f32.mxu0 0.0
      %3157 = vmatmul.mubr.f32.gmra.mxu0 %v2894
      %v3158 = vpop.f32.mrf.mxu0
      %v3159 = vadd.f32 %v3014, %v3158
      %v3160 = vpop.f32.mrf.mxu0
      %3161 = vmatprep.mubr.f32.mxu0 0.0
      %3162 = vmatmul.mubr.f32.gmra.mxu0 %v2896
      %v3163 = vpop.f32.mrf.mxu0
      %v3164 = vadd.f32 %v3019, %v3163
      %v3165 = vpop.f32.mrf.mxu0
      %3166 = vmatprep.mubr.f32.mxu0 0.0
      %3167 = vmatmul.mubr.f32.gmra.mxu0 %v2898
      %v3168 = vpop.f32.mrf.mxu0
      %v3169 = vadd.f32 %v3024, %v3168
      %v3170 = vpop.f32.mrf.mxu0
      %3171 = vmatprep.mubr.f32.mxu0 0.0
      %3172 = vmatmul.mubr.f32.gmra.mxu0 %v2900
      %v3173 = vpop.f32.mrf.mxu0
      %v3174 = vadd.f32 %v3029, %v3173
      %v3175 = vpop.f32.mrf.mxu0
      %3176 = vmatprep.mubr.f32.mxu0 0.0
      %3177 = vmatmul.mubr.f32.gmra.mxu0 %v2902
      %v3178 = vpop.f32.mrf.mxu0
      %v3179 = vadd.f32 %v3034, %v3178
      %v3180 = vpop.f32.mrf.mxu0
      %3181 = vmatprep.mubr.f32.mxu0 0.0
      %3182 = vmatmul.mubr.f32.gmra.mxu0 %v2904
      %v3183 = vpop.f32.mrf.mxu0
      %v3184 = vadd.f32 %v3039, %v3183
      %v3185 = vpop.f32.mrf.mxu0
      %3186 = vmatprep.mubr.f32.mxu0 0.0
      %3187 = vmatmul.mubr.f32.gmra.mxu0 %v2906
      %v3188 = vpop.f32.mrf.mxu0
      %v3189 = vadd.f32 %v3044, %v3188
      %v3190 = vpop.f32.mrf.mxu0
      %3191 = vmatprep.mubr.f32.mxu0 0.0
      %3192 = vmatmul.mubr.f32.gmra.mxu0 %v2908
      %v3193 = vpop.f32.mrf.mxu0
      %v3194 = vadd.f32 %v3049, %v3193
      %v3195 = vpop.f32.mrf.mxu0
      %3196 = vmatprep.mubr.f32.mxu0 0.0
      %3197 = vmatmul.mubr.f32.gmra.mxu0 %v2910
      %v3198 = vpop.f32.mrf.mxu0
      %v3199 = vadd.f32 %v3054, %v3198
      %v3200 = vpop.f32.mrf.mxu0
      %3201 = vdwg.mxu0
      %v3202 = vmax.f32 %v3124, 0.0
      %v3203 = vmax.f32 %v3129, 0.0
      %v3204 = vmax.f32 %v3134, 0.0
      %v3205 = vmax.f32 %v3139, 0.0
      %v3206 = vmax.f32 %v3144, 0.0
      %v3207 = vmax.f32 %v3149, 0.0
      %v3208 = vmax.f32 %v3154, 0.0
      %v3209 = vmax.f32 %v3159, 0.0
      %v3210 = vmax.f32 %v3164, 0.0
      %v3211 = vmax.f32 %v3169, 0.0
      %v3212 = vmax.f32 %v3174, 0.0
      %v3213 = vmax.f32 %v3179, 0.0
      %v3214 = vmax.f32 %v3184, 0.0
      %v3215 = vmax.f32 %v3189, 0.0
      %v3216 = vmax.f32 %v3194, 0.0
      %v3217 = vmax.f32 %v3199, 0.0
      %v3218 = vmax.f32 %v3202, %v3203
      %v3219 = vmax.f32 %v3210, %v3211
      %v3222 = vrot.slane %v3218, 1
      %v3223 = vrot.slane %v3219, 1
      %v3226 = vmax.f32 %v3218, %v3222
      %v3227 = vmax.f32 %v3219, %v3223
      %v3230 = vrot.slane %v3227, 7
      %vm3231 = vcmask 1041409
      %v3232 = vsel %vm3231, %v3230, %v3226
      %v3234 = vrot.slane %v3226, 2
      %v3235 = vrot.slane %v3227, 1
      %v3236 = vsel %vm3231, %v3235, %v3234
      %3237 = vrot.lane.b32.xlu0 %v3236, 64
      %v3238 = vpop.permute.xlu0 %3237
      %v3240 = vsel %vm2755, %v3232, %v3238
      %vm3241 = vcmask 1045509
      %v3242 = vsel %vm3241, %v3230, %v3226
      %v3244 = vsel %vm3241, %v3235, %v3234
      %3245 = vrot.lane.b32.xlu0 %v3244, 64
      %v3246 = vpop.permute.xlu0 %3245
      %v3248 = vsel %vm2755, %v3242, %v3246
      %v3249 = vmax.f32 %v3204, %v3205
      %v3250 = vmax.f32 %v3212, %v3213
      %v3253 = vrot.slane %v3249, 1
      %v3254 = vrot.slane %v3250, 1
      %v3257 = vmax.f32 %v3249, %v3253
      %v3258 = vmax.f32 %v3250, %v3254
      %v3261 = vrot.slane %v3258, 7
      %v3262 = vsel %vm3231, %v3261, %v3257
      %v3264 = vrot.slane %v3257, 2
      %v3265 = vrot.slane %v3258, 1
      %v3266 = vsel %vm3231, %v3265, %v3264
      %3267 = vrot.lane.b32.xlu0 %v3266, 64
      %v3268 = vpop.permute.xlu0 %3267
      %v3270 = vsel %vm2755, %v3262, %v3268
      %v3271 = vsel %vm3241, %v3261, %v3257
      %v3273 = vsel %vm3241, %v3265, %v3264
      %3274 = vrot.lane.b32.xlu0 %v3273, 64
      %v3275 = vpop.permute.xlu0 %3274
      %v3277 = vsel %vm2755, %v3271, %v3275
      %v3278 = vmax.f32 %v3206, %v3207
      %v3279 = vmax.f32 %v3214, %v3215
      %v3282 = vrot.slane %v3278, 1
      %v3283 = vrot.slane %v3279, 1
      %v3286 = vmax.f32 %v3278, %v3282
      %v3287 = vmax.f32 %v3279, %v3283
      %v3290 = vrot.slane %v3287, 7
      %v3291 = vsel %vm3231, %v3290, %v3286
      %v3293 = vrot.slane %v3286, 2
      %v3294 = vrot.slane %v3287, 1
      %v3295 = vsel %vm3231, %v3294, %v3293
      %3296 = vrot.lane.b32.xlu0 %v3295, 64
      %v3297 = vpop.permute.xlu0 %3296
      %v3299 = vsel %vm2755, %v3291, %v3297
      %v3300 = vsel %vm3241, %v3290, %v3286
      %v3302 = vsel %vm3241, %v3294, %v3293
      %3303 = vrot.lane.b32.xlu0 %v3302, 64
      %v3304 = vpop.permute.xlu0 %3303
      %v3306 = vsel %vm2755, %v3300, %v3304
      %v3307 = vmax.f32 %v3208, %v3209
      %v3308 = vmax.f32 %v3216, %v3217
      %v3311 = vrot.slane %v3307, 1
      %v3312 = vrot.slane %v3308, 1
      %v3315 = vmax.f32 %v3307, %v3311
      %v3316 = vmax.f32 %v3308, %v3312
      %v3319 = vrot.slane %v3316, 7
      %v3320 = vsel %vm3231, %v3319, %v3315
      %v3322 = vrot.slane %v3315, 2
      %v3323 = vrot.slane %v3316, 1
      %v3324 = vsel %vm3231, %v3323, %v3322
      %3325 = vrot.lane.b32.xlu0 %v3324, 64
      %v3326 = vpop.permute.xlu0 %3325
      %v3328 = vsel %vm2755, %v3320, %v3326
      %v3329 = vsel %vm3241, %v3319, %v3315
      %v3331 = vsel %vm3241, %v3323, %v3322
      %3332 = vrot.lane.b32.xlu0 %v3331, 64
      %v3333 = vpop.permute.xlu0 %3332
      %v3335 = vsel %vm2755, %v3329, %v3333
      %v3337 = vrot.slane %v3248, 4
      %v3340 = vrot.slane %v3277, 4
      %v3343 = vrot.slane %v3306, 4
      %v3346 = vrot.slane %v3335, 4
      %v3348 = vpack.c.bf16 %v3240, %v3240
      %v3349 = vpack.c.bf16 %v3337, %v3337
      %v3350 = vpack.c.bf16 %v3270, %v3270
      %v3351 = vpack.c.bf16 %v3340, %v3340
      %v3352 = vpack.c.bf16 %v3299, %v3299
      %v3353 = vpack.c.bf16 %v3343, %v3343
      %v3354 = vpack.c.bf16 %v3328, %v3328
      %v3355 = vpack.c.bf16 %v3346, %v3346
      %v3356 = vld [vmem:[%s333] sm:$0xf]
      %v3357 = vld [vmem:[%s333 + $0x4] sm:$0xf]
      %v3358 = vld [vmem:[%s333 + $0x8] sm:$0xf]
      %v3359 = vld [vmem:[%s333 + $0xc] sm:$0xf]
      %v3360 = vld [vmem:[%s333 + $0x10] sm:$0xf]
      %v3361 = vld [vmem:[%s333 + $0x14] sm:$0xf]
      %v3362 = vld [vmem:[%s333 + $0x18] sm:$0xf]
      %v3363 = vld [vmem:[%s333 + $0x1c] sm:$0xf]
      %v3364 = vld [vmem:[%s333 + $0x20] sm:$0xf]
      %v3365 = vld [vmem:[%s333 + $0x24] sm:$0xf]
      %v3366 = vld [vmem:[%s333 + $0x28] sm:$0xf]
      %v3367 = vld [vmem:[%s333 + $0x2c] sm:$0xf]
      %v3368 = vld [vmem:[%s333 + $0x30] sm:$0xf]
      %v3369 = vld [vmem:[%s333 + $0x34] sm:$0xf]
      %v3370 = vld [vmem:[%s333 + $0x38] sm:$0xf]
      %v3371 = vld [vmem:[%s333 + $0x3c] sm:$0xf]
      %v3372 = vld [vmem:[%s333 + $0x40] sm:$0xf]
      %v3373 = vld [vmem:[%s333 + $0x44] sm:$0xf]
      %v3374 = vld [vmem:[%s333 + $0x48] sm:$0xf]
      %v3375 = vld [vmem:[%s333 + $0x4c] sm:$0xf]
      %v3376 = vld [vmem:[%s333 + $0x50] sm:$0xf]
      %v3377 = vld [vmem:[%s333 + $0x54] sm:$0xf]
      %v3378 = vld [vmem:[%s333 + $0x58] sm:$0xf]
      %v3379 = vld [vmem:[%s333 + $0x5c] sm:$0xf]
      %v3380 = vld [vmem:[%s333 + $0x60] sm:$0xf]
      %v3381 = vld [vmem:[%s333 + $0x64] sm:$0xf]
      %v3382 = vld [vmem:[%s333 + $0x68] sm:$0xf]
      %v3383 = vld [vmem:[%s333 + $0x6c] sm:$0xf]
      %v3384 = vld [vmem:[%s333 + $0x70] sm:$0xf]
      %v3385 = vld [vmem:[%s333 + $0x74] sm:$0xf]
      %v3386 = vld [vmem:[%s333 + $0x78] sm:$0xf]
      %v3387 = vld [vmem:[%s333 + $0x7c] sm:$0xf]
      %v3388 = vld [vmem:[%s333 + $0x80] sm:$0xf]
      %v3389 = vld [vmem:[%s333 + $0x84] sm:$0xf]
      %v3390 = vld [vmem:[%s333 + $0x88] sm:$0xf]
      %v3391 = vld [vmem:[%s333 + $0x8c] sm:$0xf]
      %v3392 = vld [vmem:[%s333 + $0x90] sm:$0xf]
      %v3393 = vld [vmem:[%s333 + $0x94] sm:$0xf]
      %v3394 = vld [vmem:[%s333 + $0x98] sm:$0xf]
      %v3395 = vld [vmem:[%s333 + $0x9c] sm:$0xf]
      %v3396 = vld [vmem:[%s333 + $0xa0] sm:$0xf]
      %v3397 = vld [vmem:[%s333 + $0xa4] sm:$0xf]
      %v3398 = vld [vmem:[%s333 + $0xa8] sm:$0xf]
      %v3399 = vld [vmem:[%s333 + $0xac] sm:$0xf]
      %v3400 = vld [vmem:[%s333 + $0xb0] sm:$0xf]
      %v3401 = vld [vmem:[%s333 + $0xb4] sm:$0xf]
      %v3402 = vld [vmem:[%s333 + $0xb8] sm:$0xf]
      %v3403 = vld [vmem:[%s333 + $0xbc] sm:$0xf]
      %v3404 = vld [vmem:[%s333 + $0xc0] sm:$0xf]
      %v3405 = vld [vmem:[%s333 + $0xc4] sm:$0xf]
      %v3406 = vld [vmem:[%s333 + $0xc8] sm:$0xf]
      %v3407 = vld [vmem:[%s333 + $0xcc] sm:$0xf]
      %v3408 = vld [vmem:[%s333 + $0xd0] sm:$0xf]
      %v3409 = vld [vmem:[%s333 + $0xd4] sm:$0xf]
      %v3410 = vld [vmem:[%s333 + $0xd8] sm:$0xf]
      %v3411 = vld [vmem:[%s333 + $0xdc] sm:$0xf]
      %v3412 = vld [vmem:[%s333 + $0xe0] sm:$0xf]
      %v3413 = vld [vmem:[%s333 + $0xe4] sm:$0xf]
      %v3414 = vld [vmem:[%s333 + $0xe8] sm:$0xf]
      %v3415 = vld [vmem:[%s333 + $0xec] sm:$0xf]
      %v3416 = vld [vmem:[%s333 + $0xf0] sm:$0xf]
      %v3417 = vld [vmem:[%s333 + $0xf4] sm:$0xf]
      %v3418 = vld [vmem:[%s333 + $0xf8] sm:$0xf]
      %v3419 = vld [vmem:[%s333 + $0xfc] sm:$0xf]
      %v3420 = vld [vmem:[%s333 + $0x100] sm:$0xf]
      %v3421 = vld [vmem:[%s333 + $0x104] sm:$0xf]
      %v3422 = vld [vmem:[%s333 + $0x108] sm:$0xf]
      %v3423 = vld [vmem:[%s333 + $0x10c] sm:$0xf]
      %v3424 = vld [vmem:[%s333 + $0x110] sm:$0xf]
      %v3425 = vld [vmem:[%s333 + $0x114] sm:$0xf]
      %v3426 = vld [vmem:[%s333 + $0x118] sm:$0xf]
      %v3427 = vld [vmem:[%s333 + $0x11c] sm:$0xf]
      %v3428 = vld [vmem:[%s333 + $0x120] sm:$0xf]
      %v3429 = vld [vmem:[%s333 + $0x124] sm:$0xf]
      %v3430 = vld [vmem:[%s333 + $0x128] sm:$0xf]
      %v3431 = vld [vmem:[%s333 + $0x12c] sm:$0xf]
      %v3432 = vld [vmem:[%s333 + $0x130] sm:$0xf]
      %v3433 = vld [vmem:[%s333 + $0x134] sm:$0xf]
      %v3434 = vld [vmem:[%s333 + $0x138] sm:$0xf]
      %v3435 = vld [vmem:[%s333 + $0x13c] sm:$0xf]
      %v3436 = vld [vmem:[%s333 + $0x140] sm:$0xf]
      %v3437 = vld [vmem:[%s333 + $0x144] sm:$0xf]
      %v3438 = vld [vmem:[%s333 + $0x148] sm:$0xf]
      %v3439 = vld [vmem:[%s333 + $0x14c] sm:$0xf]
      %v3440 = vld [vmem:[%s333 + $0x150] sm:$0xf]
      %v3441 = vld [vmem:[%s333 + $0x154] sm:$0xf]
      %v3442 = vld [vmem:[%s333 + $0x158] sm:$0xf]
      %v3443 = vld [vmem:[%s333 + $0x15c] sm:$0xf]
      %v3444 = vld [vmem:[%s333 + $0x160] sm:$0xf]
      %v3445 = vld [vmem:[%s333 + $0x164] sm:$0xf]
      %v3446 = vld [vmem:[%s333 + $0x168] sm:$0xf]
      %v3447 = vld [vmem:[%s333 + $0x16c] sm:$0xf]
      %v3448 = vld [vmem:[%s333 + $0x170] sm:$0xf]
      %v3449 = vld [vmem:[%s333 + $0x174] sm:$0xf]
      %v3450 = vld [vmem:[%s333 + $0x178] sm:$0xf]
      %v3451 = vld [vmem:[%s333 + $0x17c] sm:$0xf]
      %v3452 = vld [vmem:[%s333 + $0x180] sm:$0xf]
      %v3453 = vld [vmem:[%s333 + $0x184] sm:$0xf]
      %v3454 = vld [vmem:[%s333 + $0x188] sm:$0xf]
      %v3455 = vld [vmem:[%s333 + $0x18c] sm:$0xf]
      %v3456 = vld [vmem:[%s333 + $0x190] sm:$0xf]
      %v3457 = vld [vmem:[%s333 + $0x194] sm:$0xf]
      %v3458 = vld [vmem:[%s333 + $0x198] sm:$0xf]
      %v3459 = vld [vmem:[%s333 + $0x19c] sm:$0xf]
      %v3460 = vld [vmem:[%s333 + $0x1a0] sm:$0xf]
      %v3461 = vld [vmem:[%s333 + $0x1a4] sm:$0xf]
      %v3462 = vld [vmem:[%s333 + $0x1a8] sm:$0xf]
      %v3463 = vld [vmem:[%s333 + $0x1ac] sm:$0xf]
      %v3464 = vld [vmem:[%s333 + $0x1b0] sm:$0xf]
      %v3465 = vld [vmem:[%s333 + $0x1b4] sm:$0xf]
      %v3466 = vld [vmem:[%s333 + $0x1b8] sm:$0xf]
      %v3467 = vld [vmem:[%s333 + $0x1bc] sm:$0xf]
      %v3468 = vld [vmem:[%s333 + $0x1c0] sm:$0xf]
      %v3469 = vld [vmem:[%s333 + $0x1c4] sm:$0xf]
      %v3470 = vld [vmem:[%s333 + $0x1c8] sm:$0xf]
      %v3471 = vld [vmem:[%s333 + $0x1cc] sm:$0xf]
      %v3472 = vld [vmem:[%s333 + $0x1d0] sm:$0xf]
      %v3473 = vld [vmem:[%s333 + $0x1d4] sm:$0xf]
      %v3474 = vld [vmem:[%s333 + $0x1d8] sm:$0xf]
      %v3475 = vld [vmem:[%s333 + $0x1dc] sm:$0xf]
      %v3476 = vld [vmem:[%s333 + $0x1e0] sm:$0xf]
      %v3477 = vld [vmem:[%s333 + $0x1e4] sm:$0xf]
      %v3478 = vld [vmem:[%s333 + $0x1e8] sm:$0xf]
      %v3479 = vld [vmem:[%s333 + $0x1ec] sm:$0xf]
      %v3480 = vld [vmem:[%s333 + $0x1f0] sm:$0xf]
      %v3481 = vld [vmem:[%s333 + $0x1f4] sm:$0xf]
      %v3482 = vld [vmem:[%s333 + $0x1f8] sm:$0xf]
      %v3483 = vld [vmem:[%s333 + $0x1fc] sm:$0xf]
      %v3612 = vunpack.c.l.b16 %v3356
      %v3613 = vunpack.c.l.b16 %v3357
      %v3614 = vunpack.c.l.b16 %v3358
      %v3615 = vunpack.c.l.b16 %v3359
      %v3616 = vunpack.c.l.b16 %v3360
      %v3617 = vunpack.c.l.b16 %v3361
      %v3618 = vunpack.c.l.b16 %v3362
      %v3619 = vunpack.c.l.b16 %v3363
      %v3620 = vunpack.c.l.b16 %v3364
      %v3621 = vunpack.c.l.b16 %v3365
      %v3622 = vunpack.c.l.b16 %v3366
      %v3623 = vunpack.c.l.b16 %v3367
      %v3624 = vunpack.c.l.b16 %v3368
      %v3625 = vunpack.c.l.b16 %v3369
      %v3626 = vunpack.c.l.b16 %v3370
      %v3627 = vunpack.c.l.b16 %v3371
      %v3628 = vunpack.c.l.b16 %v3372
      %v3629 = vunpack.c.l.b16 %v3373
      %v3630 = vunpack.c.l.b16 %v3374
      %v3631 = vunpack.c.l.b16 %v3375
      %v3632 = vunpack.c.l.b16 %v3376
      %v3633 = vunpack.c.l.b16 %v3377
      %v3634 = vunpack.c.l.b16 %v3378
      %v3635 = vunpack.c.l.b16 %v3379
      %v3636 = vunpack.c.l.b16 %v3380
      %v3637 = vunpack.c.l.b16 %v3381
      %v3638 = vunpack.c.l.b16 %v3382
      %v3639 = vunpack.c.l.b16 %v3383
      %v3640 = vunpack.c.l.b16 %v3384
      %v3641 = vunpack.c.l.b16 %v3385
      %v3642 = vunpack.c.l.b16 %v3386
      %v3643 = vunpack.c.l.b16 %v3387
      %v3644 = vunpack.c.l.b16 %v3388
      %v3645 = vunpack.c.l.b16 %v3389
      %v3646 = vunpack.c.l.b16 %v3390
      %v3647 = vunpack.c.l.b16 %v3391
      %v3648 = vunpack.c.l.b16 %v3392
      %v3649 = vunpack.c.l.b16 %v3393
      %v3650 = vunpack.c.l.b16 %v3394
      %v3651 = vunpack.c.l.b16 %v3395
      %v3652 = vunpack.c.l.b16 %v3396
      %v3653 = vunpack.c.l.b16 %v3397
      %v3654 = vunpack.c.l.b16 %v3398
      %v3655 = vunpack.c.l.b16 %v3399
      %v3656 = vunpack.c.l.b16 %v3400
      %v3657 = vunpack.c.l.b16 %v3401
      %v3658 = vunpack.c.l.b16 %v3402
      %v3659 = vunpack.c.l.b16 %v3403
      %v3660 = vunpack.c.l.b16 %v3404
      %v3661 = vunpack.c.l.b16 %v3405
      %v3662 = vunpack.c.l.b16 %v3406
      %v3663 = vunpack.c.l.b16 %v3407
      %v3664 = vunpack.c.l.b16 %v3408
      %v3665 = vunpack.c.l.b16 %v3409
      %v3666 = vunpack.c.l.b16 %v3410
      %v3667 = vunpack.c.l.b16 %v3411
      %v3668 = vunpack.c.l.b16 %v3412
      %v3669 = vunpack.c.l.b16 %v3413
      %v3670 = vunpack.c.l.b16 %v3414
      %v3671 = vunpack.c.l.b16 %v3415
      %v3672 = vunpack.c.l.b16 %v3416
      %v3673 = vunpack.c.l.b16 %v3417
      %v3674 = vunpack.c.l.b16 %v3418
      %v3675 = vunpack.c.l.b16 %v3419
      %v3676 = vunpack.c.l.b16 %v3420
      %v3677 = vunpack.c.l.b16 %v3421
      %v3678 = vunpack.c.l.b16 %v3422
      %v3679 = vunpack.c.l.b16 %v3423
      %v3680 = vunpack.c.l.b16 %v3424
      %v3681 = vunpack.c.l.b16 %v3425
      %v3682 = vunpack.c.l.b16 %v3426
      %v3683 = vunpack.c.l.b16 %v3427
      %v3684 = vunpack.c.l.b16 %v3428
      %v3685 = vunpack.c.l.b16 %v3429
      %v3686 = vunpack.c.l.b16 %v3430
      %v3687 = vunpack.c.l.b16 %v3431
      %v3688 = vunpack.c.l.b16 %v3432
      %v3689 = vunpack.c.l.b16 %v3433
      %v3690 = vunpack.c.l.b16 %v3434
      %v3691 = vunpack.c.l.b16 %v3435
      %v3692 = vunpack.c.l.b16 %v3436
      %v3693 = vunpack.c.l.b16 %v3437
      %v3694 = vunpack.c.l.b16 %v3438
      %v3695 = vunpack.c.l.b16 %v3439
      %v3696 = vunpack.c.l.b16 %v3440
      %v3697 = vunpack.c.l.b16 %v3441
      %v3698 = vunpack.c.l.b16 %v3442
      %v3699 = vunpack.c.l.b16 %v3443
      %v3700 = vunpack.c.l.b16 %v3444
      %v3701 = vunpack.c.l.b16 %v3445
      %v3702 = vunpack.c.l.b16 %v3446
      %v3703 = vunpack.c.l.b16 %v3447
      %v3704 = vunpack.c.l.b16 %v3448
      %v3705 = vunpack.c.l.b16 %v3449
      %v3706 = vunpack.c.l.b16 %v3450
      %v3707 = vunpack.c.l.b16 %v3451
      %v3708 = vunpack.c.l.b16 %v3452
      %v3709 = vunpack.c.l.b16 %v3453
      %v3710 = vunpack.c.l.b16 %v3454
      %v3711 = vunpack.c.l.b16 %v3455
      %v3712 = vunpack.c.l.b16 %v3456
      %v3713 = vunpack.c.l.b16 %v3457
      %v3714 = vunpack.c.l.b16 %v3458
      %v3715 = vunpack.c.l.b16 %v3459
      %v3716 = vunpack.c.l.b16 %v3460
      %v3717 = vunpack.c.l.b16 %v3461
      %v3718 = vunpack.c.l.b16 %v3462
      %v3719 = vunpack.c.l.b16 %v3463
      %v3720 = vunpack.c.l.b16 %v3464
      %v3721 = vunpack.c.l.b16 %v3465
      %v3722 = vunpack.c.l.b16 %v3466
      %v3723 = vunpack.c.l.b16 %v3467
      %v3724 = vunpack.c.l.b16 %v3468
      %v3725 = vunpack.c.l.b16 %v3469
      %v3726 = vunpack.c.l.b16 %v3470
      %v3727 = vunpack.c.l.b16 %v3471
      %v3728 = vunpack.c.l.b16 %v3472
      %v3729 = vunpack.c.l.b16 %v3473
      %v3730 = vunpack.c.l.b16 %v3474
      %v3731 = vunpack.c.l.b16 %v3475
      %v3732 = vunpack.c.l.b16 %v3476
      %v3733 = vunpack.c.l.b16 %v3477
      %v3734 = vunpack.c.l.b16 %v3478
      %v3735 = vunpack.c.l.b16 %v3479
      %v3736 = vunpack.c.l.b16 %v3480
      %v3737 = vunpack.c.l.b16 %v3481
      %v3738 = vunpack.c.l.b16 %v3482
      %v3739 = vunpack.c.l.b16 %v3483
      %v3740 = vpack.c.b16 %v3613, %v3612
      %v3741 = vpack.c.b16 %v3615, %v3614
      %v3742 = vpack.c.b16 %v3617, %v3616
      %v3743 = vpack.c.b16 %v3619, %v3618
      %v3744 = vpack.c.b16 %v3621, %v3620
      %v3745 = vpack.c.b16 %v3623, %v3622
      %v3746 = vpack.c.b16 %v3625, %v3624
      %v3747 = vpack.c.b16 %v3627, %v3626
      %v3748 = vpack.c.b16 %v3629, %v3628
      %v3749 = vpack.c.b16 %v3631, %v3630
      %v3750 = vpack.c.b16 %v3633, %v3632
      %v3751 = vpack.c.b16 %v3635, %v3634
      %v3752 = vpack.c.b16 %v3637, %v3636
      %v3753 = vpack.c.b16 %v3639, %v3638
      %v3754 = vpack.c.b16 %v3641, %v3640
      %v3755 = vpack.c.b16 %v3643, %v3642
      %v3756 = vpack.c.b16 %v3645, %v3644
      %v3757 = vpack.c.b16 %v3647, %v3646
      %v3758 = vpack.c.b16 %v3649, %v3648
      %v3759 = vpack.c.b16 %v3651, %v3650
      %v3760 = vpack.c.b16 %v3653, %v3652
      %v3761 = vpack.c.b16 %v3655, %v3654
      %v3762 = vpack.c.b16 %v3657, %v3656
      %v3763 = vpack.c.b16 %v3659, %v3658
      %v3764 = vpack.c.b16 %v3661, %v3660
      %v3765 = vpack.c.b16 %v3663, %v3662
      %v3766 = vpack.c.b16 %v3665, %v3664
      %v3767 = vpack.c.b16 %v3667, %v3666
      %v3768 = vpack.c.b16 %v3669, %v3668
      %v3769 = vpack.c.b16 %v3671, %v3670
      %v3770 = vpack.c.b16 %v3673, %v3672
      %v3771 = vpack.c.b16 %v3675, %v3674
      %v3772 = vpack.c.b16 %v3677, %v3676
      %v3773 = vpack.c.b16 %v3679, %v3678
      %v3774 = vpack.c.b16 %v3681, %v3680
      %v3775 = vpack.c.b16 %v3683, %v3682
      %v3776 = vpack.c.b16 %v3685, %v3684
      %v3777 = vpack.c.b16 %v3687, %v3686
      %v3778 = vpack.c.b16 %v3689, %v3688
      %v3779 = vpack.c.b16 %v3691, %v3690
      %v3780 = vpack.c.b16 %v3693, %v3692
      %v3781 = vpack.c.b16 %v3695, %v3694
      %v3782 = vpack.c.b16 %v3697, %v3696
      %v3783 = vpack.c.b16 %v3699, %v3698
      %v3784 = vpack.c.b16 %v3701, %v3700
      %v3785 = vpack.c.b16 %v3703, %v3702
      %v3786 = vpack.c.b16 %v3705, %v3704
      %v3787 = vpack.c.b16 %v3707, %v3706
      %v3788 = vpack.c.b16 %v3709, %v3708
      %v3789 = vpack.c.b16 %v3711, %v3710
      %v3790 = vpack.c.b16 %v3713, %v3712
      %v3791 = vpack.c.b16 %v3715, %v3714
      %v3792 = vpack.c.b16 %v3717, %v3716
      %v3793 = vpack.c.b16 %v3719, %v3718
      %v3794 = vpack.c.b16 %v3721, %v3720
      %v3795 = vpack.c.b16 %v3723, %v3722
      %v3796 = vpack.c.b16 %v3725, %v3724
      %v3797 = vpack.c.b16 %v3727, %v3726
      %v3798 = vpack.c.b16 %v3729, %v3728
      %v3799 = vpack.c.b16 %v3731, %v3730
      %v3800 = vpack.c.b16 %v3733, %v3732
      %v3801 = vpack.c.b16 %v3735, %v3734
      %v3802 = vpack.c.b16 %v3737, %v3736
      %v3803 = vpack.c.b16 %v3739, %v3738
      %3868 = vmatprep.subr.bf16.mxu0 0
      %3869 = vmatpush1.bf16.msra.mxu0 %v3747
      %3870 = vmatprep.subr.bf16.mxu0 0
      %3871 = vmatpush1.bf16.msra.mxu0 %v3746
      %3872 = vmatprep.subr.bf16.mxu0 0
      %3873 = vmatpush1.bf16.msra.mxu0 %v3745
      %3874 = vmatprep.subr.bf16.mxu0 0
      %3875 = vmatpush1.bf16.msra.mxu0 %v3744
      %3876 = vmatprep.subr.bf16.mxu0 0
      %3877 = vmatpush1.bf16.msra.mxu0 %v3743
      %3878 = vmatprep.subr.bf16.mxu0 0
      %3879 = vmatpush1.bf16.msra.mxu0 %v3742
      %3880 = vmatprep.subr.bf16.mxu0 0
      %3881 = vmatpush1.bf16.msra.mxu0 %v3741
      %3882 = vmatprep.subr.bf16.mxu0 0
      %3883 = vmatpush1.bf16.msra.mxu0 %v3740
      %3884 = vmatprep.subr.bf16.mxu0 0
      %3885 = vmatpush2.bf16.msra.mxu0 %v3755
      %3886 = vmatprep.subr.bf16.mxu0 0
      %3887 = vmatpush2.bf16.msra.mxu0 %v3754
      %3888 = vmatprep.subr.bf16.mxu0 0
      %3889 = vmatpush2.bf16.msra.mxu0 %v3753
      %3890 = vmatprep.subr.bf16.mxu0 0
      %3891 = vmatpush2.bf16.msra.mxu0 %v3752
      %3892 = vmatprep.subr.bf16.mxu0 0
      %3893 = vmatpush2.bf16.msra.mxu0 %v3751
      %3894 = vmatprep.subr.bf16.mxu0 0
      %3895 = vmatpush2.bf16.msra.mxu0 %v3750
      %3896 = vmatprep.subr.bf16.mxu0 0
      %3897 = vmatpush2.bf16.msra.mxu0 %v3749
      %3898 = vmatprep.subr.bf16.mxu0 0
      %3899 = vmatpush2.bf16.msra.mxu0 %v3748
      %3900 = vmatprep.mubr.bf16.mxu0 %v3349
      %3901 = vmatmul.mubr.bf16.gmra.mxu0 %v3348
      %v3902 = vpop.f32.mrf.mxu0
      %v3903 = vadd.f32 0.0, %v3902
      %v3904 = vpop.f32.mrf.mxu0
      %v3905 = vpop.f32.mrf.mxu0
      %v3906 = vpop.f32.mrf.mxu0
      %3907 = vdwg.mxu0
      %3908 = vmatprep.subr.bf16.mxu0 0
      %3909 = vmatpush1.bf16.msra.mxu0 %v3763
      %3910 = vmatprep.subr.bf16.mxu0 0
      %3911 = vmatpush1.bf16.msra.mxu0 %v3762
      %3912 = vmatprep.subr.bf16.mxu0 0
      %3913 = vmatpush1.bf16.msra.mxu0 %v3761
      %3914 = vmatprep.subr.bf16.mxu0 0
      %3915 = vmatpush1.bf16.msra.mxu0 %v3760
      %3916 = vmatprep.subr.bf16.mxu0 0
      %3917 = vmatpush1.bf16.msra.mxu0 %v3759
      %3918 = vmatprep.subr.bf16.mxu0 0
      %3919 = vmatpush1.bf16.msra.mxu0 %v3758
      %3920 = vmatprep.subr.bf16.mxu0 0
      %3921 = vmatpush1.bf16.msra.mxu0 %v3757
      %3922 = vmatprep.subr.bf16.mxu0 0
      %3923 = vmatpush1.bf16.msra.mxu0 %v3756
      %3924 = vmatprep.subr.bf16.mxu0 0
      %3925 = vmatpush2.bf16.msra.mxu0 %v3771
      %3926 = vmatprep.subr.bf16.mxu0 0
      %3927 = vmatpush2.bf16.msra.mxu0 %v3770
      %3928 = vmatprep.subr.bf16.mxu0 0
      %3929 = vmatpush2.bf16.msra.mxu0 %v3769
      %3930 = vmatprep.subr.bf16.mxu0 0
      %3931 = vmatpush2.bf16.msra.mxu0 %v3768
      %3932 = vmatprep.subr.bf16.mxu0 0
      %3933 = vmatpush2.bf16.msra.mxu0 %v3767
      %3934 = vmatprep.subr.bf16.mxu0 0
      %3935 = vmatpush2.bf16.msra.mxu0 %v3766
      %3936 = vmatprep.subr.bf16.mxu0 0
      %3937 = vmatpush2.bf16.msra.mxu0 %v3765
      %3938 = vmatprep.subr.bf16.mxu0 0
      %3939 = vmatpush2.bf16.msra.mxu0 %v3764
      %3940 = vmatprep.mubr.bf16.mxu0 %v3351
      %3941 = vmatmul.mubr.bf16.gmra.mxu0 %v3350
      %v3942 = vpop.f32.mrf.mxu0
      %v3943 = vadd.f32 %v3903, %v3942
      %v3944 = vpop.f32.mrf.mxu0
      %v3945 = vpop.f32.mrf.mxu0
      %v3946 = vpop.f32.mrf.mxu0
      %3947 = vdwg.mxu0
      %3948 = vmatprep.subr.bf16.mxu0 0
      %3949 = vmatpush1.bf16.msra.mxu0 %v3779
      %3950 = vmatprep.subr.bf16.mxu0 0
      %3951 = vmatpush1.bf16.msra.mxu0 %v3778
      %3952 = vmatprep.subr.bf16.mxu0 0
      %3953 = vmatpush1.bf16.msra.mxu0 %v3777
      %3954 = vmatprep.subr.bf16.mxu0 0
      %3955 = vmatpush1.bf16.msra.mxu0 %v3776
      %3956 = vmatprep.subr.bf16.mxu0 0
      %3957 = vmatpush1.bf16.msra.mxu0 %v3775
      %3958 = vmatprep.subr.bf16.mxu0 0
      %3959 = vmatpush1.bf16.msra.mxu0 %v3774
      %3960 = vmatprep.subr.bf16.mxu0 0
      %3961 = vmatpush1.bf16.msra.mxu0 %v3773
      %3962 = vmatprep.subr.bf16.mxu0 0
      %3963 = vmatpush1.bf16.msra.mxu0 %v3772
      %3964 = vmatprep.subr.bf16.mxu0 0
      %3965 = vmatpush2.bf16.msra.mxu0 %v3787
      %3966 = vmatprep.subr.bf16.mxu0 0
      %3967 = vmatpush2.bf16.msra.mxu0 %v3786
      %3968 = vmatprep.subr.bf16.mxu0 0
      %3969 = vmatpush2.bf16.msra.mxu0 %v3785
      %3970 = vmatprep.subr.bf16.mxu0 0
      %3971 = vmatpush2.bf16.msra.mxu0 %v3784
      %3972 = vmatprep.subr.bf16.mxu0 0
      %3973 = vmatpush2.bf16.msra.mxu0 %v3783
      %3974 = vmatprep.subr.bf16.mxu0 0
      %3975 = vmatpush2.bf16.msra.mxu0 %v3782
      %3976 = vmatprep.subr.bf16.mxu0 0
      %3977 = vmatpush2.bf16.msra.mxu0 %v3781
      %3978 = vmatprep.subr.bf16.mxu0 0
      %3979 = vmatpush2.bf16.msra.mxu0 %v3780
      %3980 = vmatprep.mubr.bf16.mxu0 %v3353
      %3981 = vmatmul.mubr.bf16.gmra.mxu0 %v3352
      %v3982 = vpop.f32.mrf.mxu0
      %v3983 = vadd.f32 %v3943, %v3982
      %v3984 = vpop.f32.mrf.mxu0
      %v3985 = vpop.f32.mrf.mxu0
      %v3986 = vpop.f32.mrf.mxu0
      %3987 = vdwg.mxu0
      %3988 = vmatprep.subr.bf16.mxu0 0
      %3989 = vmatpush1.bf16.msra.mxu0 %v3795
      %3990 = vmatprep.subr.bf16.mxu0 0
      %3991 = vmatpush1.bf16.msra.mxu0 %v3794
      %3992 = vmatprep.subr.bf16.mxu0 0
      %3993 = vmatpush1.bf16.msra.mxu0 %v3793
      %3994 = vmatprep.subr.bf16.mxu0 0
      %3995 = vmatpush1.bf16.msra.mxu0 %v3792
      %3996 = vmatprep.subr.bf16.mxu0 0
      %3997 = vmatpush1.bf16.msra.mxu0 %v3791
      %3998 = vmatprep.subr.bf16.mxu0 0
      %3999 = vmatpush1.bf16.msra.mxu0 %v3790
      %4000 = vmatprep.subr.bf16.mxu0 0
      %4001 = vmatpush1.bf16.msra.mxu0 %v3789
      %4002 = vmatprep.subr.bf16.mxu0 0
      %4003 = vmatpush1.bf16.msra.mxu0 %v3788
      %4004 = vmatprep.subr.bf16.mxu0 0
      %4005 = vmatpush2.bf16.msra.mxu0 %v3803
      %4006 = vmatprep.subr.bf16.mxu0 0
      %4007 = vmatpush2.bf16.msra.mxu0 %v3802
      %4008 = vmatprep.subr.bf16.mxu0 0
      %4009 = vmatpush2.bf16.msra.mxu0 %v3801
      %4010 = vmatprep.subr.bf16.mxu0 0
      %4011 = vmatpush2.bf16.msra.mxu0 %v3800
      %4012 = vmatprep.subr.bf16.mxu0 0
      %4013 = vmatpush2.bf16.msra.mxu0 %v3799
      %4014 = vmatprep.subr.bf16.mxu0 0
      %4015 = vmatpush2.bf16.msra.mxu0 %v3798
      %4016 = vmatprep.subr.bf16.mxu0 0
      %4017 = vmatpush2.bf16.msra.mxu0 %v3797
      %4018 = vmatprep.subr.bf16.mxu0 0
      %4019 = vmatpush2.bf16.msra.mxu0 %v3796
      %4020 = vmatprep.mubr.bf16.mxu0 %v3355
      %4021 = vmatmul.mubr.bf16.gmra.mxu0 %v3354
      %v4022 = vpop.f32.mrf.mxu0
      %v4023 = vadd.f32 %v3983, %v4022
      %v4024 = vpop.f32.mrf.mxu0
      %v4025 = vpop.f32.mrf.mxu0
      %v4026 = vpop.f32.mrf.mxu0
      %4027 = vdwg.mxu0
      %4028 = vst [vmem:[%s337] sm:$0x3] %v4023
      %p4029 = scmp.lt.s32.totalorder %s17, 1
      %s4030 = scalar_select %p4029, %s17, 1
      %s4031 = smul.addr %s4030, 2
      %s4032 = scalar_lea.vmem %s6, %s4031
      // Predicated region
      $region45: #{small_net_forward.1} parent=43 // pred_check
        %p4033 = pneg %p191
      $region46: #{small_net_forward.1} parent=43 // pred_check_branch
        %4035 = sbr.rel (%p4033) target = $region48
      $region47: #{small_net_forward.1} parent=43 // pred_region
        _
      $region48: #{small_net_forward.1} parent=43 // pred_fallthru
        _
    $region44: #{small_net_forward.1} parent=5 // pred_fallthru
      _
    %p4036 = scmp.le.s32.totalorder 2, %s12
    // Predicated region
    $region49: #{small_net_forward.1} parent=5 // pred_check
      %p4037 = pneg %p4036
    $region50: #{small_net_forward.1} parent=5 // pred_check_branch
      %4039 = sbr.rel (%p4037) target = $region52
    $region51: #{small_net_forward.1} parent=5 // pred_region
      %s4040 = ssub.s32 %s12, 2
      // Predicated region
      $region53: #{small_net_forward.1} parent=51 // pred_check
        %p4041 = pneg %p197
      $region54: #{small_net_forward.1} parent=51 // pred_check_branch
        %4043 = sbr.rel (%p4041) target = $region56
      $region55: #{small_net_forward.1} parent=51 // pred_region
        %p4044 = scmp.lt.s32.totalorder %s18, 1
        %s4045 = scalar_select %p4044, %s18, 1
        %s4046 = smul.addr %s4045, 2
        %s4047 = scalar_lea.vmem %s6, %s4046
      $region56: #{small_net_forward.1} parent=51 // pred_fallthru
        _
    $region52: #{small_net_forward.1} parent=5 // pred_fallthru
      _
  $region6: #{small_net_forward.1} parent=0 // loop_footer
    %s16 = sadd.s32 1, %s12
  $region7: #{small_net_forward.1} parent=0 // loop_footer_branch
    %11 = sbr.rel target = $region3
  $region8: #{small_net_forward.1} parent=0 // loop_exit
    _

</llo_original>
